<compile_context>
chip_gen: v5e
topology: v5e:2x2
jax: 0.10.0
libtpu: 0.0.40
codegen_flags: <defaults>
</compile_context>

<pallas_src>
import jax
import jax.numpy as jnp
from jax import lax
from jax.experimental import pallas as pl
from jax.experimental.pallas import tpu as pltpu

HIDDEN_DIM = 128
INPUT_DIM = 3
NUM_LAYERS = 2   # hard-coded 2-layer structure below


def _pick_chunk(T, target=16):
    """Largest divisor of T that is <= target (keeps the unrolled loop short)."""
    best = 1
    for d in range(1, min(T, target) + 1):
        if T % d == 0:
            best = d
    return best


def _lstm_kernel(pre0_ref,   # (T_CHUNK, Bp, 4H) f32 : precomputed x @ W_ih0 + b0
                 whh0_ref,   # (H, 4H)  bf16 : layer-0 recurrent weights
                 w1_ref,     # (2H, 4H) bf16 : fused [W_ih_l1; W_hh_l1]
                 b1_ref,     # (1, 4H)  f32
                 h_out_ref,  # (Bp, H)  f32 : last-step layer-1 hidden state
                 h0_ref, c0_ref, h1_ref, c1_ref):  # (Bp, H) f32 state scratch
    tc = pl.program_id(0)
    Bp, H = h_out_ref.shape
    t_chunk = pre0_ref.shape[0]

    @pl.when(tc == 0)
    def _():
        z = jnp.zeros((Bp, H), jnp.float32)
        h0_ref[...] = z
        c0_ref[...] = z
        h1_ref[...] = z
        c1_ref[...] = z

    # Hoist loop-invariant weight loads / bias broadcast out of the recurrence
    # (JAX does not CSE broadcast_in_dim across loop iterations).
    whh0 = whh0_ref[...]                                   # bf16 (H, 4H)
    w1 = w1_ref[...]                                       # bf16 (2H, 4H)
    b1 = jnp.broadcast_to(b1_ref[...], (Bp, 4 * H))        # f32  (Bp, 4H)

    def step(t, carry):
        h0, c0, h1, c1 = carry
        pre = pre0_ref[t]                                  # (Bp, 4H) f32

        # ---- layer 0: only the recurrent matmul per step (bf16 ops, f32 acc) ----
        g0 = pre + jnp.dot(h0.astype(jnp.bfloat16), whh0,
                           preferred_element_type=jnp.float32)
        i0 = jax.nn.sigmoid(g0[:, 0 * H:1 * H])
        f0 = jax.nn.sigmoid(g0[:, 1 * H:2 * H])
        gg0 = jnp.tanh(g0[:, 2 * H:3 * H])
        o0 = jax.nn.sigmoid(g0[:, 3 * H:4 * H])
        c0 = f0 * c0 + i0 * gg0
        h0 = o0 * jnp.tanh(c0)

        # ---- layer 1: fused [h0, h1_prev] @ [W_ih; W_hh]  (K = 2H = 256) ----
        hx = jnp.concatenate([h0, h1], axis=-1).astype(jnp.bfloat16)
        g1 = jnp.dot(hx, w1, preferred_element_type=jnp.float32) + b1
        i1 = jax.nn.sigmoid(g1[:, 0 * H:1 * H])
        f1 = jax.nn.sigmoid(g1[:, 1 * H:2 * H])
        gg1 = jnp.tanh(g1[:, 2 * H:3 * H])
        o1 = jax.nn.sigmoid(g1[:, 3 * H:4 * H])
        c1 = f1 * c1 + i1 * gg1
        h1 = o1 * jnp.tanh(c1)

        return (h0, c0, h1, c1)

    carry0 = (h0_ref[...], c0_ref[...], h1_ref[...], c1_ref[...])
    # Unrolled so bundles interleave across time steps (layer-1 matmul at t is
    # independent of layer-0 matmul at t+1).
    h0, c0, h1, c1 = lax.fori_loop(0, t_chunk, step, carry0, unroll=True)

    h0_ref[...] = h0
    c0_ref[...] = c0
    h1_ref[...] = h1
    c1_ref[...] = c1
    h_out_ref[...] = h1            # resident output block; final chunk's value wins


def lstm_classifier_forward(x, params):
    """x: (B, T, INPUT_DIM) batch_first, any float dtype.  Returns logits (B, 1)."""
    x = x.astype(jnp.float32)
    B, T, Din = x.shape
    H = HIDDEN_DIM
    Bp = ((B + 7) // 8) * 8                       # pad batch to full sublanes

    (wih0, whh0, b0, wih1, whh1, b1, wfc, bfc) = params
    # Fused layer-1 weights + bf16 operand casts done once in the wrapper.
    w1_b = jnp.concatenate([wih1, whh1], axis=0).astype(jnp.bfloat16)   # (2H, 4H)
    whh0_b = whh0.astype(jnp.bfloat16)                                   # (H, 4H)

    x_tm = jnp.transpose(x, (1, 0, 2))            # (T, B, Din) time-major
    if Bp != B:
        x_tm = jnp.pad(x_tm, ((0, 0), (0, Bp - B), (0, 0)))
    # Hoisted layer-0 input projection (K=3 matmul): plain XLA in the wrapper,
    # removing the 3->128 lane-padded x block from the kernel's VMEM budget.
    pre0 = jnp.einsum('tbd,dh->tbh', x_tm, wih0) + b0      # (T, Bp, 4H) f32

    t_chunk = _pick_chunk(T, 16)
    n_chunks = T // t_chunk

    grid_spec = pltpu.PrefetchScalarGridSpec(
        num_scalar_prefetch=0,
        grid=(n_chunks,),
        in_specs=[
            pl.BlockSpec((t_chunk, Bp, 4 * H), lambda t: (t, 0, 0)),  # streamed pre-gates
            pl.BlockSpec((H, 4 * H), lambda t: (0, 0)),               # W_hh l0 (bf16)
            pl.BlockSpec((2 * H, 4 * H), lambda t: (0, 0)),           # fused [W_ih;W_hh] l1
            pl.BlockSpec((1, 4 * H), lambda t: (0, 0)),               # b l1
        ],
        out_specs=pl.BlockSpec((Bp, H), lambda t: (0, 0)),
        scratch_shapes=[pltpu.VMEM((Bp, H), jnp.float32)] * 4,        # h0, c0, h1, c1
    )

    h_last = pl.pallas_call(
        _lstm_kernel,
        out_shape=jax.ShapeDtypeStruct((Bp, H), jnp.float32),
        grid_spec=grid_spec,
        compiler_params=pltpu.CompilerParams(
            dimension_semantics=("arbitrary",),           # sequential time-chunk axis
            vmem_limit_bytes=32 * 1024 * 1024),           # within v7x's 64 MiB physical
    )(pre0, whh0_b, w1_b, b1)

    # Final Linear(H, 1) is a trivial GEMV: keep it in plain JAX (lane-dense output).
    return h_last[:B] @ wfc + bfc


def init_params(key):
    """Deterministic init matching PyTorch LSTM/Linear parameter shapes.
    Stored pre-transposed for `x @ W` use, biases pre-summed (b_ih + b_hh)."""
    H = HIDDEN_DIM
    Din = INPUT_DIM
    bound = 1.0 / jnp.sqrt(jnp.float32(H))
    ks = jax.random.split(key, 12)

    def u(k, shape):
        return jax.random.uniform(k, shape, jnp.float32, -bound, bound)

    # layer 0: weight_ih_l0 (4H, Din), weight_hh_l0 (4H, H), biases (4H,)
    wih0 = u(ks[0], (4 * H, Din)).T            # (Din, 4H)
    whh0 = u(ks[1], (4 * H, H)).T              # (H, 4H)
    b0 = (u(ks[2], (4 * H,)) + u(ks[3], (4 * H,))).reshape(1, 4 * H)
    # layer 1: weight_ih_l1 (4H, H), weight_hh_l1 (4H, H)
    wih1 = u(ks[4], (4 * H, H)).T              # (H, 4H)
    whh1 = u(ks[5], (4 * H, H)).T              # (H, 4H)
    b1 = (u(ks[6], (4 * H,)) + u(ks[7], (4 * H,))).reshape(1, 4 * H)
    # fc: Linear(H, 1)
    fc_bound = 1.0 / jnp.sqrt(jnp.float32(H))
    wfc = jax.random.uniform(ks[8], (1, H), jnp.float32, -fc_bound, fc_bound).T  # (H, 1)
    bfc = jax.random.uniform(ks[9], (1, 1), jnp.float32, -fc_bound, fc_bound)
    return (wih0, whh0, b0, wih1, whh1, b1, wfc, bfc)


def reference_forward(x, params):
    """Pure-JAX f32 reference (PyTorch eval-mode LSTM math) for correctness check."""
    x = x.astype(jnp.float32)
    (wih0, whh0, b0, wih1, whh1, b1, wfc, bfc) = params
    B = x.shape[0]
    H = HIDDEN_DIM

    def cell(x_t, h, c, wih, whh, b):
        g = x_t @ wih + h @ whh + b
        i = jax.nn.sigmoid(g[:, 0 * H:1 * H])
        f = jax.nn.sigmoid(g[:, 1 * H:2 * H])
        gg = jnp.tanh(g[:, 2 * H:3 * H])
        o = jax.nn.sigmoid(g[:, 3 * H:4 * H])
        c = f * c + i * gg
        h = o * jnp.tanh(c)
        return h, c

    def step(carry, x_t):
        h0, c0, h1, c1 = carry
        h0, c0 = cell(x_t, h0, c0, wih0, whh0, b0)
        h1, c1 = cell(h0, h1, c1, wih1, whh1, b1)
        return (h0, c0, h1, c1), None

    init = tuple(jnp.zeros((B, H), jnp.float32) for _ in range(4))
    (h0, c0, h1, c1), _ = jax.lax.scan(step, init, jnp.transpose(x, (1, 0, 2)))
    return h1 @ wfc + bfc


if __name__ == "__main__":
    key = jax.random.PRNGKey(0)
    pkey, xkey = jax.random.split(key)
    params = init_params(pkey)

    B, T = 4, 8
    x = jax.random.normal(xkey, (B, T, INPUT_DIM), jnp.float32)

    logits = lstm_classifier_forward(x, params)
    logits = jax.block_until_ready(logits)

    ref = jax.block_until_ready(reference_forward(x, params))
    assert logits.shape == (B, 1)
    # Kernel uses bf16 matmul operands (f32 accumulation) -> loose tolerance vs f32 ref.
    assert jnp.allclose(logits, ref, rtol=5e-2, atol=5e-2), (logits, ref)

    print("KERNEL_OK")
</pallas_src>

<mosaic_0001>
module attributes {stable_mosaic.version = 11 : i64} {
  func.func @_lstm_kernel(%arg0: i32, %arg1: memref<8x8x512xf32, #tpu.memory_space<vmem>>, %arg2: memref<128x512xbf16, #tpu.memory_space<vmem>>, %arg3: memref<256x512xbf16, #tpu.memory_space<vmem>>, %arg4: memref<1x512xf32, #tpu.memory_space<vmem>>, %arg5: memref<8x128xf32, #tpu.memory_space<vmem>>, %arg6: memref<8x128xf32, #tpu.memory_space<vmem>>, %arg7: memref<8x128xf32, #tpu.memory_space<vmem>>, %arg8: memref<8x128xf32, #tpu.memory_space<vmem>>, %arg9: memref<8x128xf32, #tpu.memory_space<vmem>>) attributes {dimension_semantics = [#tpu.dimension_semantics<arbitrary>], iteration_bounds = array<i64: 1>, scalar_prefetch = 0 : i64, scratch_operands = 4 : i64, tpu.core_type = #tpu.core_type<tc>, window_params = [{transform_indices = @transform_0, window_bounds = array<i64: 8, 8, 512>}, {pipeline_mode = #tpu.pipeline_mode<synchronous>, transform_indices = @transform_1, window_bounds = array<i64: 128, 512>}, {pipeline_mode = #tpu.pipeline_mode<synchronous>, transform_indices = @transform_2, window_bounds = array<i64: 256, 512>}, {pipeline_mode = #tpu.pipeline_mode<synchronous>, transform_indices = @transform_3, window_bounds = array<i64: 1, 512>}, {pipeline_mode = #tpu.pipeline_mode<synchronous>, transform_indices = @transform_4, window_bounds = array<i64: 8, 128>}]} {
    %c0_i32 = arith.constant 0 : i32
    %0 = arith.cmpi eq, %arg0, %c0_i32 : i32
    %1 = arith.extui %0 : i1 to i32
    %c0_i32_0 = arith.constant 0 : i32
    %2 = arith.cmpi ne, %1, %c0_i32_0 : i32
    scf.if %2 {
      %cst_104 = arith.constant 0.000000e+00 : f32
      %497 = vector.broadcast %cst_104 : f32 to vector<8x128xf32>
      %c0_105 = arith.constant 0 : index
      %c0_106 = arith.constant 0 : index
      %498 = vector.load %arg6[%c0_105, %c0_106] : memref<8x128xf32, #tpu.memory_space<vmem>>, vector<8x128xf32>
      tpu.vector_store %arg6[%c0_105, %c0_106], %497 {strides = array<i32>} : memref<8x128xf32, #tpu.memory_space<vmem>>, vector<8x128xf32>,
      %c0_107 = arith.constant 0 : index
      %c0_108 = arith.constant 0 : index
      %499 = vector.load %arg7[%c0_107, %c0_108] : memref<8x128xf32, #tpu.memory_space<vmem>>, vector<8x128xf32>
      tpu.vector_store %arg7[%c0_107, %c0_108], %497 {strides = array<i32>} : memref<8x128xf32, #tpu.memory_space<vmem>>, vector<8x128xf32>,
      %c0_109 = arith.constant 0 : index
      %c0_110 = arith.constant 0 : index
      %500 = vector.load %arg8[%c0_109, %c0_110] : memref<8x128xf32, #tpu.memory_space<vmem>>, vector<8x128xf32>
      tpu.vector_store %arg8[%c0_109, %c0_110], %497 {strides = array<i32>} : memref<8x128xf32, #tpu.memory_space<vmem>>, vector<8x128xf32>,
      %c0_111 = arith.constant 0 : index
      %c0_112 = arith.constant 0 : index
      %501 = vector.load %arg9[%c0_111, %c0_112] : memref<8x128xf32, #tpu.memory_space<vmem>>, vector<8x128xf32>
      tpu.vector_store %arg9[%c0_111, %c0_112], %497 {strides = array<i32>} : memref<8x128xf32, #tpu.memory_space<vmem>>, vector<8x128xf32>,
    } else {
    }
    %c0 = arith.constant 0 : index
    %c0_1 = arith.constant 0 : index
    %3 = vector.load %arg2[%c0, %c0_1] : memref<128x512xbf16, #tpu.memory_space<vmem>>, vector<128x512xbf16>
    %c0_2 = arith.constant 0 : index
    %c0_3 = arith.constant 0 : index
    %4 = vector.load %arg3[%c0_2, %c0_3] : memref<256x512xbf16, #tpu.memory_space<vmem>>, vector<256x512xbf16>
    %c0_4 = arith.constant 0 : index
    %c0_5 = arith.constant 0 : index
    %5 = vector.load %arg4[%c0_4, %c0_5] : memref<1x512xf32, #tpu.memory_space<vmem>>, vector<1x512xf32>
    %6 = vector.shape_cast %5 : vector<1x512xf32> to vector<1x512xf32>
    %7 = vector.broadcast %6 : vector<1x512xf32> to vector<8x512xf32>
    %c0_6 = arith.constant 0 : index
    %c0_7 = arith.constant 0 : index
    %8 = vector.load %arg6[%c0_6, %c0_7] : memref<8x128xf32, #tpu.memory_space<vmem>>, vector<8x128xf32>
    %c0_8 = arith.constant 0 : index
    %c0_9 = arith.constant 0 : index
    %9 = vector.load %arg7[%c0_8, %c0_9] : memref<8x128xf32, #tpu.memory_space<vmem>>, vector<8x128xf32>
    %c0_10 = arith.constant 0 : index
    %c0_11 = arith.constant 0 : index
    %10 = vector.load %arg8[%c0_10, %c0_11] : memref<8x128xf32, #tpu.memory_space<vmem>>, vector<8x128xf32>
    %c0_12 = arith.constant 0 : index
    %c0_13 = arith.constant 0 : index
    %11 = vector.load %arg9[%c0_12, %c0_13] : memref<8x128xf32, #tpu.memory_space<vmem>>, vector<8x128xf32>
    %c0_i32_14 = arith.constant 0 : i32
    %12 = arith.index_cast %c0_i32_14 : i32 to index
    %c0_15 = arith.constant 0 : index
    %c0_16 = arith.constant 0 : index
    %13 = vector.load %arg1[%12, %c0_15, %c0_16] : memref<8x8x512xf32, #tpu.memory_space<vmem>>, vector<1x8x512xf32>
    %14 = vector.shape_cast %13 : vector<1x8x512xf32> to vector<8x512xf32>
    %15 = arith.truncf %8 : vector<8x128xf32> to vector<8x128xbf16>
    %cst = arith.constant dense<0.000000e+00> : vector<8x512xf32>
    %16 = tpu.matmul %15, %3, %cst {dimension_numbers = #tpu.dot_dimension_numbers<[1], [0], [0], [1], [0, 0, 1, 1], [], []>} : vector<8x128xbf16>, vector<128x512xbf16>, vector<8x512xf32> -> vector<8x512xf32>
    %17 = arith.addf %14, %16 : vector<8x512xf32>
    %18 = vector.extract_strided_slice %17 {offsets = [0, 0], sizes = [8, 128], strides = [1, 1]} : vector<8x512xf32> to vector<8x128xf32>
    %19 = arith.negf %18 : vector<8x128xf32>
    %20 = math.exp %19 : vector<8x128xf32>
    %cst_17 = arith.constant 1.000000e+00 : f32
    %21 = vector.broadcast %cst_17 : f32 to vector<8x128xf32>
    %22 = arith.addf %21, %20 : vector<8x128xf32>
    %23 = arith.divf %21, %22 : vector<8x128xf32>
    %24 = vector.extract_strided_slice %17 {offsets = [0, 128], sizes = [8, 128], strides = [1, 1]} : vector<8x512xf32> to vector<8x128xf32>
    %25 = arith.negf %24 : vector<8x128xf32>
    %26 = math.exp %25 : vector<8x128xf32>
    %cst_18 = arith.constant 1.000000e+00 : f32
    %27 = vector.broadcast %cst_18 : f32 to vector<8x128xf32>
    %28 = arith.addf %27, %26 : vector<8x128xf32>
    %29 = arith.divf %27, %28 : vector<8x128xf32>
    %30 = vector.extract_strided_slice %17 {offsets = [0, 256], sizes = [8, 128], strides = [1, 1]} : vector<8x512xf32> to vector<8x128xf32>
    %31 = math.tanh %30 : vector<8x128xf32>
    %32 = vector.extract_strided_slice %17 {offsets = [0, 384], sizes = [8, 128], strides = [1, 1]} : vector<8x512xf32> to vector<8x128xf32>
    %33 = arith.negf %32 : vector<8x128xf32>
    %34 = math.exp %33 : vector<8x128xf32>
    %cst_19 = arith.constant 1.000000e+00 : f32
    %35 = vector.broadcast %cst_19 : f32 to vector<8x128xf32>
    %36 = arith.addf %35, %34 : vector<8x128xf32>
    %37 = arith.divf %35, %36 : vector<8x128xf32>
    %38 = arith.mulf %29, %9 : vector<8x128xf32>
    %39 = arith.mulf %23, %31 : vector<8x128xf32>
    %40 = arith.addf %38, %39 : vector<8x128xf32>
    %41 = math.tanh %40 : vector<8x128xf32>
    %42 = arith.mulf %37, %41 : vector<8x128xf32>
    %43 = tpu.concatenate %42, %10 in 1 : vector<8x128xf32>, vector<8x128xf32> -> vector<8x256xf32>
    %44 = arith.truncf %43 : vector<8x256xf32> to vector<8x256xbf16>
    %cst_20 = arith.constant dense<0.000000e+00> : vector<8x512xf32>
    %45 = tpu.matmul %44, %4, %cst_20 {dimension_numbers = #tpu.dot_dimension_numbers<[1], [0], [0], [1], [0, 0, 1, 1], [], []>} : vector<8x256xbf16>, vector<256x512xbf16>, vector<8x512xf32> -> vector<8x512xf32>
    %46 = arith.addf %45, %7 : vector<8x512xf32>
    %47 = vector.extract_strided_slice %46 {offsets = [0, 0], sizes = [8, 128], strides = [1, 1]} : vector<8x512xf32> to vector<8x128xf32>
    %48 = arith.negf %47 : vector<8x128xf32>
    %49 = math.exp %48 : vector<8x128xf32>
    %cst_21 = arith.constant 1.000000e+00 : f32
    %50 = vector.broadcast %cst_21 : f32 to vector<8x128xf32>
    %51 = arith.addf %50, %49 : vector<8x128xf32>
    %52 = arith.divf %50, %51 : vector<8x128xf32>
    %53 = vector.extract_strided_slice %46 {offsets = [0, 128], sizes = [8, 128], strides = [1, 1]} : vector<8x512xf32> to vector<8x128xf32>
    %54 = arith.negf %53 : vector<8x128xf32>
    %55 = math.exp %54 : vector<8x128xf32>
    %cst_22 = arith.constant 1.000000e+00 : f32
    %56 = vector.broadcast %cst_22 : f32 to vector<8x128xf32>
    %57 = arith.addf %56, %55 : vector<8x128xf32>
    %58 = arith.divf %56, %57 : vector<8x128xf32>
    %59 = vector.extract_strided_slice %46 {offsets = [0, 256], sizes = [8, 128], strides = [1, 1]} : vector<8x512xf32> to vector<8x128xf32>
    %60 = math.tanh %59 : vector<8x128xf32>
    %61 = vector.extract_strided_slice %46 {offsets = [0, 384], sizes = [8, 128], strides = [1, 1]} : vector<8x512xf32> to vector<8x128xf32>
    %62 = arith.negf %61 : vector<8x128xf32>
    %63 = math.exp %62 : vector<8x128xf32>
    %cst_23 = arith.constant 1.000000e+00 : f32
    %64 = vector.broadcast %cst_23 : f32 to vector<8x128xf32>
    %65 = arith.addf %64, %63 : vector<8x128xf32>
    %66 = arith.divf %64, %65 : vector<8x128xf32>
    %67 = arith.mulf %58, %11 : vector<8x128xf32>
    %68 = arith.mulf %52, %60 : vector<8x128xf32>
    %69 = arith.addf %67, %68 : vector<8x128xf32>
    %70 = math.tanh %69 : vector<8x128xf32>
    %71 = arith.mulf %66, %70 : vector<8x128xf32>
    %c1_i32 = arith.constant 1 : i32
    %72 = arith.index_cast %c1_i32 : i32 to index
    %c0_24 = arith.constant 0 : index
    %c0_25 = arith.constant 0 : index
    %73 = vector.load %arg1[%72, %c0_24, %c0_25] : memref<8x8x512xf32, #tpu.memory_space<vmem>>, vector<1x8x512xf32>
    %74 = vector.shape_cast %73 : vector<1x8x512xf32> to vector<8x512xf32>
    %75 = arith.truncf %42 : vector<8x128xf32> to vector<8x128xbf16>
    %cst_26 = arith.constant dense<0.000000e+00> : vector<8x512xf32>
    %76 = tpu.matmul %75, %3, %cst_26 {dimension_numbers = #tpu.dot_dimension_numbers<[1], [0], [0], [1], [0, 0, 1, 1], [], []>} : vector<8x128xbf16>, vector<128x512xbf16>, vector<8x512xf32> -> vector<8x512xf32>
    %77 = arith.addf %74, %76 : vector<8x512xf32>
    %78 = vector.extract_strided_slice %77 {offsets = [0, 0], sizes = [8, 128], strides = [1, 1]} : vector<8x512xf32> to vector<8x128xf32>
    %79 = arith.negf %78 : vector<8x128xf32>
    %80 = math.exp %79 : vector<8x128xf32>
    %cst_27 = arith.constant 1.000000e+00 : f32
    %81 = vector.broadcast %cst_27 : f32 to vector<8x128xf32>
    %82 = arith.addf %81, %80 : vector<8x128xf32>
    %83 = arith.divf %81, %82 : vector<8x128xf32>
    %84 = vector.extract_strided_slice %77 {offsets = [0, 128], sizes = [8, 128], strides = [1, 1]} : vector<8x512xf32> to vector<8x128xf32>
    %85 = arith.negf %84 : vector<8x128xf32>
    %86 = math.exp %85 : vector<8x128xf32>
    %cst_28 = arith.constant 1.000000e+00 : f32
    %87 = vector.broadcast %cst_28 : f32 to vector<8x128xf32>
    %88 = arith.addf %87, %86 : vector<8x128xf32>
    %89 = arith.divf %87, %88 : vector<8x128xf32>
    %90 = vector.extract_strided_slice %77 {offsets = [0, 256], sizes = [8, 128], strides = [1, 1]} : vector<8x512xf32> to vector<8x128xf32>
    %91 = math.tanh %90 : vector<8x128xf32>
    %92 = vector.extract_strided_slice %77 {offsets = [0, 384], sizes = [8, 128], strides = [1, 1]} : vector<8x512xf32> to vector<8x128xf32>
    %93 = arith.negf %92 : vector<8x128xf32>
    %94 = math.exp %93 : vector<8x128xf32>
    %cst_29 = arith.constant 1.000000e+00 : f32
    %95 = vector.broadcast %cst_29 : f32 to vector<8x128xf32>
    %96 = arith.addf %95, %94 : vector<8x128xf32>
    %97 = arith.divf %95, %96 : vector<8x128xf32>
    %98 = arith.mulf %89, %40 : vector<8x128xf32>
    %99 = arith.mulf %83, %91 : vector<8x128xf32>
    %100 = arith.addf %98, %99 : vector<8x128xf32>
    %101 = math.tanh %100 : vector<8x128xf32>
    %102 = arith.mulf %97, %101 : vector<8x128xf32>
    %103 = tpu.concatenate %102, %71 in 1 : vector<8x128xf32>, vector<8x128xf32> -> vector<8x256xf32>
    %104 = arith.truncf %103 : vector<8x256xf32> to vector<8x256xbf16>
    %cst_30 = arith.constant dense<0.000000e+00> : vector<8x512xf32>
    %105 = tpu.matmul %104, %4, %cst_30 {dimension_numbers = #tpu.dot_dimension_numbers<[1], [0], [0], [1], [0, 0, 1, 1], [], []>} : vector<8x256xbf16>, vector<256x512xbf16>, vector<8x512xf32> -> vector<8x512xf32>
    %106 = arith.addf %105, %7 : vector<8x512xf32>
    %107 = vector.extract_strided_slice %106 {offsets = [0, 0], sizes = [8, 128], strides = [1, 1]} : vector<8x512xf32> to vector<8x128xf32>
    %108 = arith.negf %107 : vector<8x128xf32>
    %109 = math.exp %108 : vector<8x128xf32>
    %cst_31 = arith.constant 1.000000e+00 : f32
    %110 = vector.broadcast %cst_31 : f32 to vector<8x128xf32>
    %111 = arith.addf %110, %109 : vector<8x128xf32>
    %112 = arith.divf %110, %111 : vector<8x128xf32>
    %113 = vector.extract_strided_slice %106 {offsets = [0, 128], sizes = [8, 128], strides = [1, 1]} : vector<8x512xf32> to vector<8x128xf32>
    %114 = arith.negf %113 : vector<8x128xf32>
    %115 = math.exp %114 : vector<8x128xf32>
    %cst_32 = arith.constant 1.000000e+00 : f32
    %116 = vector.broadcast %cst_32 : f32 to vector<8x128xf32>
    %117 = arith.addf %116, %115 : vector<8x128xf32>
    %118 = arith.divf %116, %117 : vector<8x128xf32>
    %119 = vector.extract_strided_slice %106 {offsets = [0, 256], sizes = [8, 128], strides = [1, 1]} : vector<8x512xf32> to vector<8x128xf32>
    %120 = math.tanh %119 : vector<8x128xf32>
    %121 = vector.extract_strided_slice %106 {offsets = [0, 384], sizes = [8, 128], strides = [1, 1]} : vector<8x512xf32> to vector<8x128xf32>
    %122 = arith.negf %121 : vector<8x128xf32>
    %123 = math.exp %122 : vector<8x128xf32>
    %cst_33 = arith.constant 1.000000e+00 : f32
    %124 = vector.broadcast %cst_33 : f32 to vector<8x128xf32>
    %125 = arith.addf %124, %123 : vector<8x128xf32>
    %126 = arith.divf %124, %125 : vector<8x128xf32>
    %127 = arith.mulf %118, %69 : vector<8x128xf32>
    %128 = arith.mulf %112, %120 : vector<8x128xf32>
    %129 = arith.addf %127, %128 : vector<8x128xf32>
    %130 = math.tanh %129 : vector<8x128xf32>
    %131 = arith.mulf %126, %130 : vector<8x128xf32>
    %c2_i32 = arith.constant 2 : i32
    %132 = arith.index_cast %c2_i32 : i32 to index
    %c0_34 = arith.constant 0 : index
    %c0_35 = arith.constant 0 : index
    %133 = vector.load %arg1[%132, %c0_34, %c0_35] : memref<8x8x512xf32, #tpu.memory_space<vmem>>, vector<1x8x512xf32>
    %134 = vector.shape_cast %133 : vector<1x8x512xf32> to vector<8x512xf32>
    %135 = arith.truncf %102 : vector<8x128xf32> to vector<8x128xbf16>
    %cst_36 = arith.constant dense<0.000000e+00> : vector<8x512xf32>
    %136 = tpu.matmul %135, %3, %cst_36 {dimension_numbers = #tpu.dot_dimension_numbers<[1], [0], [0], [1], [0, 0, 1, 1], [], []>} : vector<8x128xbf16>, vector<128x512xbf16>, vector<8x512xf32> -> vector<8x512xf32>
    %137 = arith.addf %134, %136 : vector<8x512xf32>
    %138 = vector.extract_strided_slice %137 {offsets = [0, 0], sizes = [8, 128], strides = [1, 1]} : vector<8x512xf32> to vector<8x128xf32>
    %139 = arith.negf %138 : vector<8x128xf32>
    %140 = math.exp %139 : vector<8x128xf32>
    %cst_37 = arith.constant 1.000000e+00 : f32
    %141 = vector.broadcast %cst_37 : f32 to vector<8x128xf32>
    %142 = arith.addf %141, %140 : vector<8x128xf32>
    %143 = arith.divf %141, %142 : vector<8x128xf32>
    %144 = vector.extract_strided_slice %137 {offsets = [0, 128], sizes = [8, 128], strides = [1, 1]} : vector<8x512xf32> to vector<8x128xf32>
    %145 = arith.negf %144 : vector<8x128xf32>
    %146 = math.exp %145 : vector<8x128xf32>
    %cst_38 = arith.constant 1.000000e+00 : f32
    %147 = vector.broadcast %cst_38 : f32 to vector<8x128xf32>
    %148 = arith.addf %147, %146 : vector<8x128xf32>
    %149 = arith.divf %147, %148 : vector<8x128xf32>
    %150 = vector.extract_strided_slice %137 {offsets = [0, 256], sizes = [8, 128], strides = [1, 1]} : vector<8x512xf32> to vector<8x128xf32>
    %151 = math.tanh %150 : vector<8x128xf32>
    %152 = vector.extract_strided_slice %137 {offsets = [0, 384], sizes = [8, 128], strides = [1, 1]} : vector<8x512xf32> to vector<8x128xf32>
    %153 = arith.negf %152 : vector<8x128xf32>
    %154 = math.exp %153 : vector<8x128xf32>
    %cst_39 = arith.constant 1.000000e+00 : f32
    %155 = vector.broadcast %cst_39 : f32 to vector<8x128xf32>
    %156 = arith.addf %155, %154 : vector<8x128xf32>
    %157 = arith.divf %155, %156 : vector<8x128xf32>
    %158 = arith.mulf %149, %100 : vector<8x128xf32>
    %159 = arith.mulf %143, %151 : vector<8x128xf32>
    %160 = arith.addf %158, %159 : vector<8x128xf32>
    %161 = math.tanh %160 : vector<8x128xf32>
    %162 = arith.mulf %157, %161 : vector<8x128xf32>
    %163 = tpu.concatenate %162, %131 in 1 : vector<8x128xf32>, vector<8x128xf32> -> vector<8x256xf32>
    %164 = arith.truncf %163 : vector<8x256xf32> to vector<8x256xbf16>
    %cst_40 = arith.constant dense<0.000000e+00> : vector<8x512xf32>
    %165 = tpu.matmul %164, %4, %cst_40 {dimension_numbers = #tpu.dot_dimension_numbers<[1], [0], [0], [1], [0, 0, 1, 1], [], []>} : vector<8x256xbf16>, vector<256x512xbf16>, vector<8x512xf32> -> vector<8x512xf32>
    %166 = arith.addf %165, %7 : vector<8x512xf32>
    %167 = vector.extract_strided_slice %166 {offsets = [0, 0], sizes = [8, 128], strides = [1, 1]} : vector<8x512xf32> to vector<8x128xf32>
    %168 = arith.negf %167 : vector<8x128xf32>
    %169 = math.exp %168 : vector<8x128xf32>
    %cst_41 = arith.constant 1.000000e+00 : f32
    %170 = vector.broadcast %cst_41 : f32 to vector<8x128xf32>
    %171 = arith.addf %170, %169 : vector<8x128xf32>
    %172 = arith.divf %170, %171 : vector<8x128xf32>
    %173 = vector.extract_strided_slice %166 {offsets = [0, 128], sizes = [8, 128], strides = [1, 1]} : vector<8x512xf32> to vector<8x128xf32>
    %174 = arith.negf %173 : vector<8x128xf32>
    %175 = math.exp %174 : vector<8x128xf32>
    %cst_42 = arith.constant 1.000000e+00 : f32
    %176 = vector.broadcast %cst_42 : f32 to vector<8x128xf32>
    %177 = arith.addf %176, %175 : vector<8x128xf32>
    %178 = arith.divf %176, %177 : vector<8x128xf32>
    %179 = vector.extract_strided_slice %166 {offsets = [0, 256], sizes = [8, 128], strides = [1, 1]} : vector<8x512xf32> to vector<8x128xf32>
    %180 = math.tanh %179 : vector<8x128xf32>
    %181 = vector.extract_strided_slice %166 {offsets = [0, 384], sizes = [8, 128], strides = [1, 1]} : vector<8x512xf32> to vector<8x128xf32>
    %182 = arith.negf %181 : vector<8x128xf32>
    %183 = math.exp %182 : vector<8x128xf32>
    %cst_43 = arith.constant 1.000000e+00 : f32
    %184 = vector.broadcast %cst_43 : f32 to vector<8x128xf32>
    %185 = arith.addf %184, %183 : vector<8x128xf32>
    %186 = arith.divf %184, %185 : vector<8x128xf32>
    %187 = arith.mulf %178, %129 : vector<8x128xf32>
    %188 = arith.mulf %172, %180 : vector<8x128xf32>
    %189 = arith.addf %187, %188 : vector<8x128xf32>
    %190 = math.tanh %189 : vector<8x128xf32>
    %191 = arith.mulf %186, %190 : vector<8x128xf32>
    %c3_i32 = arith.constant 3 : i32
    %192 = arith.index_cast %c3_i32 : i32 to index
    %c0_44 = arith.constant 0 : index
    %c0_45 = arith.constant 0 : index
    %193 = vector.load %arg1[%192, %c0_44, %c0_45] : memref<8x8x512xf32, #tpu.memory_space<vmem>>, vector<1x8x512xf32>
    %194 = vector.shape_cast %193 : vector<1x8x512xf32> to vector<8x512xf32>
    %195 = arith.truncf %162 : vector<8x128xf32> to vector<8x128xbf16>
    %cst_46 = arith.constant dense<0.000000e+00> : vector<8x512xf32>
    %196 = tpu.matmul %195, %3, %cst_46 {dimension_numbers = #tpu.dot_dimension_numbers<[1], [0], [0], [1], [0, 0, 1, 1], [], []>} : vector<8x128xbf16>, vector<128x512xbf16>, vector<8x512xf32> -> vector<8x512xf32>
    %197 = arith.addf %194, %196 : vector<8x512xf32>
    %198 = vector.extract_strided_slice %197 {offsets = [0, 0], sizes = [8, 128], strides = [1, 1]} : vector<8x512xf32> to vector<8x128xf32>
    %199 = arith.negf %198 : vector<8x128xf32>
    %200 = math.exp %199 : vector<8x128xf32>
    %cst_47 = arith.constant 1.000000e+00 : f32
    %201 = vector.broadcast %cst_47 : f32 to vector<8x128xf32>
    %202 = arith.addf %201, %200 : vector<8x128xf32>
    %203 = arith.divf %201, %202 : vector<8x128xf32>
    %204 = vector.extract_strided_slice %197 {offsets = [0, 128], sizes = [8, 128], strides = [1, 1]} : vector<8x512xf32> to vector<8x128xf32>
    %205 = arith.negf %204 : vector<8x128xf32>
    %206 = math.exp %205 : vector<8x128xf32>
    %cst_48 = arith.constant 1.000000e+00 : f32
    %207 = vector.broadcast %cst_48 : f32 to vector<8x128xf32>
    %208 = arith.addf %207, %206 : vector<8x128xf32>
    %209 = arith.divf %207, %208 : vector<8x128xf32>
    %210 = vector.extract_strided_slice %197 {offsets = [0, 256], sizes = [8, 128], strides = [1, 1]} : vector<8x512xf32> to vector<8x128xf32>
    %211 = math.tanh %210 : vector<8x128xf32>
    %212 = vector.extract_strided_slice %197 {offsets = [0, 384], sizes = [8, 128], strides = [1, 1]} : vector<8x512xf32> to vector<8x128xf32>
    %213 = arith.negf %212 : vector<8x128xf32>
    %214 = math.exp %213 : vector<8x128xf32>
    %cst_49 = arith.constant 1.000000e+00 : f32
    %215 = vector.broadcast %cst_49 : f32 to vector<8x128xf32>
    %216 = arith.addf %215, %214 : vector<8x128xf32>
    %217 = arith.divf %215, %216 : vector<8x128xf32>
    %218 = arith.mulf %209, %160 : vector<8x128xf32>
    %219 = arith.mulf %203, %211 : vector<8x128xf32>
    %220 = arith.addf %218, %219 : vector<8x128xf32>
    %221 = math.tanh %220 : vector<8x128xf32>
    %222 = arith.mulf %217, %221 : vector<8x128xf32>
    %223 = tpu.concatenate %222, %191 in 1 : vector<8x128xf32>, vector<8x128xf32> -> vector<8x256xf32>
    %224 = arith.truncf %223 : vector<8x256xf32> to vector<8x256xbf16>
    %cst_50 = arith.constant dense<0.000000e+00> : vector<8x512xf32>
    %225 = tpu.matmul %224, %4, %cst_50 {dimension_numbers = #tpu.dot_dimension_numbers<[1], [0], [0], [1], [0, 0, 1, 1], [], []>} : vector<8x256xbf16>, vector<256x512xbf16>, vector<8x512xf32> -> vector<8x512xf32>
    %226 = arith.addf %225, %7 : vector<8x512xf32>
    %227 = vector.extract_strided_slice %226 {offsets = [0, 0], sizes = [8, 128], strides = [1, 1]} : vector<8x512xf32> to vector<8x128xf32>
    %228 = arith.negf %227 : vector<8x128xf32>
    %229 = math.exp %228 : vector<8x128xf32>
    %cst_51 = arith.constant 1.000000e+00 : f32
    %230 = vector.broadcast %cst_51 : f32 to vector<8x128xf32>
    %231 = arith.addf %230, %229 : vector<8x128xf32>
    %232 = arith.divf %230, %231 : vector<8x128xf32>
    %233 = vector.extract_strided_slice %226 {offsets = [0, 128], sizes = [8, 128], strides = [1, 1]} : vector<8x512xf32> to vector<8x128xf32>
    %234 = arith.negf %233 : vector<8x128xf32>
    %235 = math.exp %234 : vector<8x128xf32>
    %cst_52 = arith.constant 1.000000e+00 : f32
    %236 = vector.broadcast %cst_52 : f32 to vector<8x128xf32>
    %237 = arith.addf %236, %235 : vector<8x128xf32>
    %238 = arith.divf %236, %237 : vector<8x128xf32>
    %239 = vector.extract_strided_slice %226 {offsets = [0, 256], sizes = [8, 128], strides = [1, 1]} : vector<8x512xf32> to vector<8x128xf32>
    %240 = math.tanh %239 : vector<8x128xf32>
    %241 = vector.extract_strided_slice %226 {offsets = [0, 384], sizes = [8, 128], strides = [1, 1]} : vector<8x512xf32> to vector<8x128xf32>
    %242 = arith.negf %241 : vector<8x128xf32>
    %243 = math.exp %242 : vector<8x128xf32>
    %cst_53 = arith.constant 1.000000e+00 : f32
    %244 = vector.broadcast %cst_53 : f32 to vector<8x128xf32>
    %245 = arith.addf %244, %243 : vector<8x128xf32>
    %246 = arith.divf %244, %245 : vector<8x128xf32>
    %247 = arith.mulf %238, %189 : vector<8x128xf32>
    %248 = arith.mulf %232, %240 : vector<8x128xf32>
    %249 = arith.addf %247, %248 : vector<8x128xf32>
    %250 = math.tanh %249 : vector<8x128xf32>
    %251 = arith.mulf %246, %250 : vector<8x128xf32>
    %c4_i32 = arith.constant 4 : i32
    %252 = arith.index_cast %c4_i32 : i32 to index
    %c0_54 = arith.constant 0 : index
    %c0_55 = arith.constant 0 : index
    %253 = vector.load %arg1[%252, %c0_54, %c0_55] : memref<8x8x512xf32, #tpu.memory_space<vmem>>, vector<1x8x512xf32>
    %254 = vector.shape_cast %253 : vector<1x8x512xf32> to vector<8x512xf32>
    %255 = arith.truncf %222 : vector<8x128xf32> to vector<8x128xbf16>
    %cst_56 = arith.constant dense<0.000000e+00> : vector<8x512xf32>
    %256 = tpu.matmul %255, %3, %cst_56 {dimension_numbers = #tpu.dot_dimension_numbers<[1], [0], [0], [1], [0, 0, 1, 1], [], []>} : vector<8x128xbf16>, vector<128x512xbf16>, vector<8x512xf32> -> vector<8x512xf32>
    %257 = arith.addf %254, %256 : vector<8x512xf32>
    %258 = vector.extract_strided_slice %257 {offsets = [0, 0], sizes = [8, 128], strides = [1, 1]} : vector<8x512xf32> to vector<8x128xf32>
    %259 = arith.negf %258 : vector<8x128xf32>
    %260 = math.exp %259 : vector<8x128xf32>
    %cst_57 = arith.constant 1.000000e+00 : f32
    %261 = vector.broadcast %cst_57 : f32 to vector<8x128xf32>
    %262 = arith.addf %261, %260 : vector<8x128xf32>
    %263 = arith.divf %261, %262 : vector<8x128xf32>
    %264 = vector.extract_strided_slice %257 {offsets = [0, 128], sizes = [8, 128], strides = [1, 1]} : vector<8x512xf32> to vector<8x128xf32>
    %265 = arith.negf %264 : vector<8x128xf32>
    %266 = math.exp %265 : vector<8x128xf32>
    %cst_58 = arith.constant 1.000000e+00 : f32
    %267 = vector.broadcast %cst_58 : f32 to vector<8x128xf32>
    %268 = arith.addf %267, %266 : vector<8x128xf32>
    %269 = arith.divf %267, %268 : vector<8x128xf32>
    %270 = vector.extract_strided_slice %257 {offsets = [0, 256], sizes = [8, 128], strides = [1, 1]} : vector<8x512xf32> to vector<8x128xf32>
    %271 = math.tanh %270 : vector<8x128xf32>
    %272 = vector.extract_strided_slice %257 {offsets = [0, 384], sizes = [8, 128], strides = [1, 1]} : vector<8x512xf32> to vector<8x128xf32>
    %273 = arith.negf %272 : vector<8x128xf32>
    %274 = math.exp %273 : vector<8x128xf32>
    %cst_59 = arith.constant 1.000000e+00 : f32
    %275 = vector.broadcast %cst_59 : f32 to vector<8x128xf32>
    %276 = arith.addf %275, %274 : vector<8x128xf32>
    %277 = arith.divf %275, %276 : vector<8x128xf32>
    %278 = arith.mulf %269, %220 : vector<8x128xf32>
    %279 = arith.mulf %263, %271 : vector<8x128xf32>
    %280 = arith.addf %278, %279 : vector<8x128xf32>
    %281 = math.tanh %280 : vector<8x128xf32>
    %282 = arith.mulf %277, %281 : vector<8x128xf32>
    %283 = tpu.concatenate %282, %251 in 1 : vector<8x128xf32>, vector<8x128xf32> -> vector<8x256xf32>
    %284 = arith.truncf %283 : vector<8x256xf32> to vector<8x256xbf16>
    %cst_60 = arith.constant dense<0.000000e+00> : vector<8x512xf32>
    %285 = tpu.matmul %284, %4, %cst_60 {dimension_numbers = #tpu.dot_dimension_numbers<[1], [0], [0], [1], [0, 0, 1, 1], [], []>} : vector<8x256xbf16>, vector<256x512xbf16>, vector<8x512xf32> -> vector<8x512xf32>
    %286 = arith.addf %285, %7 : vector<8x512xf32>
    %287 = vector.extract_strided_slice %286 {offsets = [0, 0], sizes = [8, 128], strides = [1, 1]} : vector<8x512xf32> to vector<8x128xf32>
    %288 = arith.negf %287 : vector<8x128xf32>
    %289 = math.exp %288 : vector<8x128xf32>
    %cst_61 = arith.constant 1.000000e+00 : f32
    %290 = vector.broadcast %cst_61 : f32 to vector<8x128xf32>
    %291 = arith.addf %290, %289 : vector<8x128xf32>
    %292 = arith.divf %290, %291 : vector<8x128xf32>
    %293 = vector.extract_strided_slice %286 {offsets = [0, 128], sizes = [8, 128], strides = [1, 1]} : vector<8x512xf32> to vector<8x128xf32>
    %294 = arith.negf %293 : vector<8x128xf32>
    %295 = math.exp %294 : vector<8x128xf32>
    %cst_62 = arith.constant 1.000000e+00 : f32
    %296 = vector.broadcast %cst_62 : f32 to vector<8x128xf32>
    %297 = arith.addf %296, %295 : vector<8x128xf32>
    %298 = arith.divf %296, %297 : vector<8x128xf32>
    %299 = vector.extract_strided_slice %286 {offsets = [0, 256], sizes = [8, 128], strides = [1, 1]} : vector<8x512xf32> to vector<8x128xf32>
    %300 = math.tanh %299 : vector<8x128xf32>
    %301 = vector.extract_strided_slice %286 {offsets = [0, 384], sizes = [8, 128], strides = [1, 1]} : vector<8x512xf32> to vector<8x128xf32>
    %302 = arith.negf %301 : vector<8x128xf32>
    %303 = math.exp %302 : vector<8x128xf32>
    %cst_63 = arith.constant 1.000000e+00 : f32
    %304 = vector.broadcast %cst_63 : f32 to vector<8x128xf32>
    %305 = arith.addf %304, %303 : vector<8x128xf32>
    %306 = arith.divf %304, %305 : vector<8x128xf32>
    %307 = arith.mulf %298, %249 : vector<8x128xf32>
    %308 = arith.mulf %292, %300 : vector<8x128xf32>
    %309 = arith.addf %307, %308 : vector<8x128xf32>
    %310 = math.tanh %309 : vector<8x128xf32>
    %311 = arith.mulf %306, %310 : vector<8x128xf32>
    %c5_i32 = arith.constant 5 : i32
    %312 = arith.index_cast %c5_i32 : i32 to index
    %c0_64 = arith.constant 0 : index
    %c0_65 = arith.constant 0 : index
    %313 = vector.load %arg1[%312, %c0_64, %c0_65] : memref<8x8x512xf32, #tpu.memory_space<vmem>>, vector<1x8x512xf32>
    %314 = vector.shape_cast %313 : vector<1x8x512xf32> to vector<8x512xf32>
    %315 = arith.truncf %282 : vector<8x128xf32> to vector<8x128xbf16>
    %cst_66 = arith.constant dense<0.000000e+00> : vector<8x512xf32>
    %316 = tpu.matmul %315, %3, %cst_66 {dimension_numbers = #tpu.dot_dimension_numbers<[1], [0], [0], [1], [0, 0, 1, 1], [], []>} : vector<8x128xbf16>, vector<128x512xbf16>, vector<8x512xf32> -> vector<8x512xf32>
    %317 = arith.addf %314, %316 : vector<8x512xf32>
    %318 = vector.extract_strided_slice %317 {offsets = [0, 0], sizes = [8, 128], strides = [1, 1]} : vector<8x512xf32> to vector<8x128xf32>
    %319 = arith.negf %318 : vector<8x128xf32>
    %320 = math.exp %319 : vector<8x128xf32>
    %cst_67 = arith.constant 1.000000e+00 : f32
    %321 = vector.broadcast %cst_67 : f32 to vector<8x128xf32>
    %322 = arith.addf %321, %320 : vector<8x128xf32>
    %323 = arith.divf %321, %322 : vector<8x128xf32>
    %324 = vector.extract_strided_slice %317 {offsets = [0, 128], sizes = [8, 128], strides = [1, 1]} : vector<8x512xf32> to vector<8x128xf32>
    %325 = arith.negf %324 : vector<8x128xf32>
    %326 = math.exp %325 : vector<8x128xf32>
    %cst_68 = arith.constant 1.000000e+00 : f32
    %327 = vector.broadcast %cst_68 : f32 to vector<8x128xf32>
    %328 = arith.addf %327, %326 : vector<8x128xf32>
    %329 = arith.divf %327, %328 : vector<8x128xf32>
    %330 = vector.extract_strided_slice %317 {offsets = [0, 256], sizes = [8, 128], strides = [1, 1]} : vector<8x512xf32> to vector<8x128xf32>
    %331 = math.tanh %330 : vector<8x128xf32>
    %332 = vector.extract_strided_slice %317 {offsets = [0, 384], sizes = [8, 128], strides = [1, 1]} : vector<8x512xf32> to vector<8x128xf32>
    %333 = arith.negf %332 : vector<8x128xf32>
    %334 = math.exp %333 : vector<8x128xf32>
    %cst_69 = arith.constant 1.000000e+00 : f32
    %335 = vector.broadcast %cst_69 : f32 to vector<8x128xf32>
    %336 = arith.addf %335, %334 : vector<8x128xf32>
    %337 = arith.divf %335, %336 : vector<8x128xf32>
    %338 = arith.mulf %329, %280 : vector<8x128xf32>
    %339 = arith.mulf %323, %331 : vector<8x128xf32>
    %340 = arith.addf %338, %339 : vector<8x128xf32>
    %341 = math.tanh %340 : vector<8x128xf32>
    %342 = arith.mulf %337, %341 : vector<8x128xf32>
    %343 = tpu.concatenate %342, %311 in 1 : vector<8x128xf32>, vector<8x128xf32> -> vector<8x256xf32>
    %344 = arith.truncf %343 : vector<8x256xf32> to vector<8x256xbf16>
    %cst_70 = arith.constant dense<0.000000e+00> : vector<8x512xf32>
    %345 = tpu.matmul %344, %4, %cst_70 {dimension_numbers = #tpu.dot_dimension_numbers<[1], [0], [0], [1], [0, 0, 1, 1], [], []>} : vector<8x256xbf16>, vector<256x512xbf16>, vector<8x512xf32> -> vector<8x512xf32>
    %346 = arith.addf %345, %7 : vector<8x512xf32>
    %347 = vector.extract_strided_slice %346 {offsets = [0, 0], sizes = [8, 128], strides = [1, 1]} : vector<8x512xf32> to vector<8x128xf32>
    %348 = arith.negf %347 : vector<8x128xf32>
    %349 = math.exp %348 : vector<8x128xf32>
    %cst_71 = arith.constant 1.000000e+00 : f32
    %350 = vector.broadcast %cst_71 : f32 to vector<8x128xf32>
    %351 = arith.addf %350, %349 : vector<8x128xf32>
    %352 = arith.divf %350, %351 : vector<8x128xf32>
    %353 = vector.extract_strided_slice %346 {offsets = [0, 128], sizes = [8, 128], strides = [1, 1]} : vector<8x512xf32> to vector<8x128xf32>
    %354 = arith.negf %353 : vector<8x128xf32>
    %355 = math.exp %354 : vector<8x128xf32>
    %cst_72 = arith.constant 1.000000e+00 : f32
    %356 = vector.broadcast %cst_72 : f32 to vector<8x128xf32>
    %357 = arith.addf %356, %355 : vector<8x128xf32>
    %358 = arith.divf %356, %357 : vector<8x128xf32>
    %359 = vector.extract_strided_slice %346 {offsets = [0, 256], sizes = [8, 128], strides = [1, 1]} : vector<8x512xf32> to vector<8x128xf32>
    %360 = math.tanh %359 : vector<8x128xf32>
    %361 = vector.extract_strided_slice %346 {offsets = [0, 384], sizes = [8, 128], strides = [1, 1]} : vector<8x512xf32> to vector<8x128xf32>
    %362 = arith.negf %361 : vector<8x128xf32>
    %363 = math.exp %362 : vector<8x128xf32>
    %cst_73 = arith.constant 1.000000e+00 : f32
    %364 = vector.broadcast %cst_73 : f32 to vector<8x128xf32>
    %365 = arith.addf %364, %363 : vector<8x128xf32>
    %366 = arith.divf %364, %365 : vector<8x128xf32>
    %367 = arith.mulf %358, %309 : vector<8x128xf32>
    %368 = arith.mulf %352, %360 : vector<8x128xf32>
    %369 = arith.addf %367, %368 : vector<8x128xf32>
    %370 = math.tanh %369 : vector<8x128xf32>
    %371 = arith.mulf %366, %370 : vector<8x128xf32>
    %c6_i32 = arith.constant 6 : i32
    %372 = arith.index_cast %c6_i32 : i32 to index
    %c0_74 = arith.constant 0 : index
    %c0_75 = arith.constant 0 : index
    %373 = vector.load %arg1[%372, %c0_74, %c0_75] : memref<8x8x512xf32, #tpu.memory_space<vmem>>, vector<1x8x512xf32>
    %374 = vector.shape_cast %373 : vector<1x8x512xf32> to vector<8x512xf32>
    %375 = arith.truncf %342 : vector<8x128xf32> to vector<8x128xbf16>
    %cst_76 = arith.constant dense<0.000000e+00> : vector<8x512xf32>
    %376 = tpu.matmul %375, %3, %cst_76 {dimension_numbers = #tpu.dot_dimension_numbers<[1], [0], [0], [1], [0, 0, 1, 1], [], []>} : vector<8x128xbf16>, vector<128x512xbf16>, vector<8x512xf32> -> vector<8x512xf32>
    %377 = arith.addf %374, %376 : vector<8x512xf32>
    %378 = vector.extract_strided_slice %377 {offsets = [0, 0], sizes = [8, 128], strides = [1, 1]} : vector<8x512xf32> to vector<8x128xf32>
    %379 = arith.negf %378 : vector<8x128xf32>
    %380 = math.exp %379 : vector<8x128xf32>
    %cst_77 = arith.constant 1.000000e+00 : f32
    %381 = vector.broadcast %cst_77 : f32 to vector<8x128xf32>
    %382 = arith.addf %381, %380 : vector<8x128xf32>
    %383 = arith.divf %381, %382 : vector<8x128xf32>
    %384 = vector.extract_strided_slice %377 {offsets = [0, 128], sizes = [8, 128], strides = [1, 1]} : vector<8x512xf32> to vector<8x128xf32>
    %385 = arith.negf %384 : vector<8x128xf32>
    %386 = math.exp %385 : vector<8x128xf32>
    %cst_78 = arith.constant 1.000000e+00 : f32
    %387 = vector.broadcast %cst_78 : f32 to vector<8x128xf32>
    %388 = arith.addf %387, %386 : vector<8x128xf32>
    %389 = arith.divf %387, %388 : vector<8x128xf32>
    %390 = vector.extract_strided_slice %377 {offsets = [0, 256], sizes = [8, 128], strides = [1, 1]} : vector<8x512xf32> to vector<8x128xf32>
    %391 = math.tanh %390 : vector<8x128xf32>
    %392 = vector.extract_strided_slice %377 {offsets = [0, 384], sizes = [8, 128], strides = [1, 1]} : vector<8x512xf32> to vector<8x128xf32>
    %393 = arith.negf %392 : vector<8x128xf32>
    %394 = math.exp %393 : vector<8x128xf32>
    %cst_79 = arith.constant 1.000000e+00 : f32
    %395 = vector.broadcast %cst_79 : f32 to vector<8x128xf32>
    %396 = arith.addf %395, %394 : vector<8x128xf32>
    %397 = arith.divf %395, %396 : vector<8x128xf32>
    %398 = arith.mulf %389, %340 : vector<8x128xf32>
    %399 = arith.mulf %383, %391 : vector<8x128xf32>
    %400 = arith.addf %398, %399 : vector<8x128xf32>
    %401 = math.tanh %400 : vector<8x128xf32>
    %402 = arith.mulf %397, %401 : vector<8x128xf32>
    %403 = tpu.concatenate %402, %371 in 1 : vector<8x128xf32>, vector<8x128xf32> -> vector<8x256xf32>
    %404 = arith.truncf %403 : vector<8x256xf32> to vector<8x256xbf16>
    %cst_80 = arith.constant dense<0.000000e+00> : vector<8x512xf32>
    %405 = tpu.matmul %404, %4, %cst_80 {dimension_numbers = #tpu.dot_dimension_numbers<[1], [0], [0], [1], [0, 0, 1, 1], [], []>} : vector<8x256xbf16>, vector<256x512xbf16>, vector<8x512xf32> -> vector<8x512xf32>
    %406 = arith.addf %405, %7 : vector<8x512xf32>
    %407 = vector.extract_strided_slice %406 {offsets = [0, 0], sizes = [8, 128], strides = [1, 1]} : vector<8x512xf32> to vector<8x128xf32>
    %408 = arith.negf %407 : vector<8x128xf32>
    %409 = math.exp %408 : vector<8x128xf32>
    %cst_81 = arith.constant 1.000000e+00 : f32
    %410 = vector.broadcast %cst_81 : f32 to vector<8x128xf32>
    %411 = arith.addf %410, %409 : vector<8x128xf32>
    %412 = arith.divf %410, %411 : vector<8x128xf32>
    %413 = vector.extract_strided_slice %406 {offsets = [0, 128], sizes = [8, 128], strides = [1, 1]} : vector<8x512xf32> to vector<8x128xf32>
    %414 = arith.negf %413 : vector<8x128xf32>
    %415 = math.exp %414 : vector<8x128xf32>
    %cst_82 = arith.constant 1.000000e+00 : f32
    %416 = vector.broadcast %cst_82 : f32 to vector<8x128xf32>
    %417 = arith.addf %416, %415 : vector<8x128xf32>
    %418 = arith.divf %416, %417 : vector<8x128xf32>
    %419 = vector.extract_strided_slice %406 {offsets = [0, 256], sizes = [8, 128], strides = [1, 1]} : vector<8x512xf32> to vector<8x128xf32>
    %420 = math.tanh %419 : vector<8x128xf32>
    %421 = vector.extract_strided_slice %406 {offsets = [0, 384], sizes = [8, 128], strides = [1, 1]} : vector<8x512xf32> to vector<8x128xf32>
    %422 = arith.negf %421 : vector<8x128xf32>
    %423 = math.exp %422 : vector<8x128xf32>
    %cst_83 = arith.constant 1.000000e+00 : f32
    %424 = vector.broadcast %cst_83 : f32 to vector<8x128xf32>
    %425 = arith.addf %424, %423 : vector<8x128xf32>
    %426 = arith.divf %424, %425 : vector<8x128xf32>
    %427 = arith.mulf %418, %369 : vector<8x128xf32>
    %428 = arith.mulf %412, %420 : vector<8x128xf32>
    %429 = arith.addf %427, %428 : vector<8x128xf32>
    %430 = math.tanh %429 : vector<8x128xf32>
    %431 = arith.mulf %426, %430 : vector<8x128xf32>
    %c7_i32 = arith.constant 7 : i32
    %432 = arith.index_cast %c7_i32 : i32 to index
    %c0_84 = arith.constant 0 : index
    %c0_85 = arith.constant 0 : index
    %433 = vector.load %arg1[%432, %c0_84, %c0_85] : memref<8x8x512xf32, #tpu.memory_space<vmem>>, vector<1x8x512xf32>
    %434 = vector.shape_cast %433 : vector<1x8x512xf32> to vector<8x512xf32>
    %435 = arith.truncf %402 : vector<8x128xf32> to vector<8x128xbf16>
    %cst_86 = arith.constant dense<0.000000e+00> : vector<8x512xf32>
    %436 = tpu.matmul %435, %3, %cst_86 {dimension_numbers = #tpu.dot_dimension_numbers<[1], [0], [0], [1], [0, 0, 1, 1], [], []>} : vector<8x128xbf16>, vector<128x512xbf16>, vector<8x512xf32> -> vector<8x512xf32>
    %437 = arith.addf %434, %436 : vector<8x512xf32>
    %438 = vector.extract_strided_slice %437 {offsets = [0, 0], sizes = [8, 128], strides = [1, 1]} : vector<8x512xf32> to vector<8x128xf32>
    %439 = arith.negf %438 : vector<8x128xf32>
    %440 = math.exp %439 : vector<8x128xf32>
    %cst_87 = arith.constant 1.000000e+00 : f32
    %441 = vector.broadcast %cst_87 : f32 to vector<8x128xf32>
    %442 = arith.addf %441, %440 : vector<8x128xf32>
    %443 = arith.divf %441, %442 : vector<8x128xf32>
    %444 = vector.extract_strided_slice %437 {offsets = [0, 128], sizes = [8, 128], strides = [1, 1]} : vector<8x512xf32> to vector<8x128xf32>
    %445 = arith.negf %444 : vector<8x128xf32>
    %446 = math.exp %445 : vector<8x128xf32>
    %cst_88 = arith.constant 1.000000e+00 : f32
    %447 = vector.broadcast %cst_88 : f32 to vector<8x128xf32>
    %448 = arith.addf %447, %446 : vector<8x128xf32>
    %449 = arith.divf %447, %448 : vector<8x128xf32>
    %450 = vector.extract_strided_slice %437 {offsets = [0, 256], sizes = [8, 128], strides = [1, 1]} : vector<8x512xf32> to vector<8x128xf32>
    %451 = math.tanh %450 : vector<8x128xf32>
    %452 = vector.extract_strided_slice %437 {offsets = [0, 384], sizes = [8, 128], strides = [1, 1]} : vector<8x512xf32> to vector<8x128xf32>
    %453 = arith.negf %452 : vector<8x128xf32>
    %454 = math.exp %453 : vector<8x128xf32>
    %cst_89 = arith.constant 1.000000e+00 : f32
    %455 = vector.broadcast %cst_89 : f32 to vector<8x128xf32>
    %456 = arith.addf %455, %454 : vector<8x128xf32>
    %457 = arith.divf %455, %456 : vector<8x128xf32>
    %458 = arith.mulf %449, %400 : vector<8x128xf32>
    %459 = arith.mulf %443, %451 : vector<8x128xf32>
    %460 = arith.addf %458, %459 : vector<8x128xf32>
    %461 = math.tanh %460 : vector<8x128xf32>
    %462 = arith.mulf %457, %461 : vector<8x128xf32>
    %463 = tpu.concatenate %462, %431 in 1 : vector<8x128xf32>, vector<8x128xf32> -> vector<8x256xf32>
    %464 = arith.truncf %463 : vector<8x256xf32> to vector<8x256xbf16>
    %cst_90 = arith.constant dense<0.000000e+00> : vector<8x512xf32>
    %465 = tpu.matmul %464, %4, %cst_90 {dimension_numbers = #tpu.dot_dimension_numbers<[1], [0], [0], [1], [0, 0, 1, 1], [], []>} : vector<8x256xbf16>, vector<256x512xbf16>, vector<8x512xf32> -> vector<8x512xf32>
    %466 = arith.addf %465, %7 : vector<8x512xf32>
    %467 = vector.extract_strided_slice %466 {offsets = [0, 0], sizes = [8, 128], strides = [1, 1]} : vector<8x512xf32> to vector<8x128xf32>
    %468 = arith.negf %467 : vector<8x128xf32>
    %469 = math.exp %468 : vector<8x128xf32>
    %cst_91 = arith.constant 1.000000e+00 : f32
    %470 = vector.broadcast %cst_91 : f32 to vector<8x128xf32>
    %471 = arith.addf %470, %469 : vector<8x128xf32>
    %472 = arith.divf %470, %471 : vector<8x128xf32>
    %473 = vector.extract_strided_slice %466 {offsets = [0, 128], sizes = [8, 128], strides = [1, 1]} : vector<8x512xf32> to vector<8x128xf32>
    %474 = arith.negf %473 : vector<8x128xf32>
    %475 = math.exp %474 : vector<8x128xf32>
    %cst_92 = arith.constant 1.000000e+00 : f32
    %476 = vector.broadcast %cst_92 : f32 to vector<8x128xf32>
    %477 = arith.addf %476, %475 : vector<8x128xf32>
    %478 = arith.divf %476, %477 : vector<8x128xf32>
    %479 = vector.extract_strided_slice %466 {offsets = [0, 256], sizes = [8, 128], strides = [1, 1]} : vector<8x512xf32> to vector<8x128xf32>
    %480 = math.tanh %479 : vector<8x128xf32>
    %481 = vector.extract_strided_slice %466 {offsets = [0, 384], sizes = [8, 128], strides = [1, 1]} : vector<8x512xf32> to vector<8x128xf32>
    %482 = arith.negf %481 : vector<8x128xf32>
    %483 = math.exp %482 : vector<8x128xf32>
    %cst_93 = arith.constant 1.000000e+00 : f32
    %484 = vector.broadcast %cst_93 : f32 to vector<8x128xf32>
    %485 = arith.addf %484, %483 : vector<8x128xf32>
    %486 = arith.divf %484, %485 : vector<8x128xf32>
    %487 = arith.mulf %478, %429 : vector<8x128xf32>
    %488 = arith.mulf %472, %480 : vector<8x128xf32>
    %489 = arith.addf %487, %488 : vector<8x128xf32>
    %490 = math.tanh %489 : vector<8x128xf32>
    %491 = arith.mulf %486, %490 : vector<8x128xf32>
    %c8_i32 = arith.constant 8 : i32
    %c0_94 = arith.constant 0 : index
    %c0_95 = arith.constant 0 : index
    %492 = vector.load %arg6[%c0_94, %c0_95] : memref<8x128xf32, #tpu.memory_space<vmem>>, vector<8x128xf32>
    tpu.vector_store %arg6[%c0_94, %c0_95], %462 {strides = array<i32>} : memref<8x128xf32, #tpu.memory_space<vmem>>, vector<8x128xf32>,
    %c0_96 = arith.constant 0 : index
    %c0_97 = arith.constant 0 : index
    %493 = vector.load %arg7[%c0_96, %c0_97] : memref<8x128xf32, #tpu.memory_space<vmem>>, vector<8x128xf32>
    tpu.vector_store %arg7[%c0_96, %c0_97], %460 {strides = array<i32>} : memref<8x128xf32, #tpu.memory_space<vmem>>, vector<8x128xf32>,
    %c0_98 = arith.constant 0 : index
    %c0_99 = arith.constant 0 : index
    %494 = vector.load %arg8[%c0_98, %c0_99] : memref<8x128xf32, #tpu.memory_space<vmem>>, vector<8x128xf32>
    tpu.vector_store %arg8[%c0_98, %c0_99], %491 {strides = array<i32>} : memref<8x128xf32, #tpu.memory_space<vmem>>, vector<8x128xf32>,
    %c0_100 = arith.constant 0 : index
    %c0_101 = arith.constant 0 : index
    %495 = vector.load %arg9[%c0_100, %c0_101] : memref<8x128xf32, #tpu.memory_space<vmem>>, vector<8x128xf32>
    tpu.vector_store %arg9[%c0_100, %c0_101], %489 {strides = array<i32>} : memref<8x128xf32, #tpu.memory_space<vmem>>, vector<8x128xf32>,
    %c0_102 = arith.constant 0 : index
    %c0_103 = arith.constant 0 : index
    %496 = vector.load %arg5[%c0_102, %c0_103] : memref<8x128xf32, #tpu.memory_space<vmem>>, vector<8x128xf32>
    tpu.vector_store %arg5[%c0_102, %c0_103], %491 {strides = array<i32>} : memref<8x128xf32, #tpu.memory_space<vmem>>, vector<8x128xf32>,
    return
  }
  func.func @transform_0(%arg0: i32) -> (i32, i32, i32) {
    %c0_i32 = arith.constant 0 : i32
    %c0_i32_0 = arith.constant 0 : i32
    %c0_i32_1 = arith.constant 0 : i32
    return %arg0, %c0_i32, %c0_i32_0 : i32, i32, i32
  }
  func.func @transform_1(%arg0: i32) -> (i32, i32) {
    %c0_i32 = arith.constant 0 : i32
    %c0_i32_0 = arith.constant 0 : i32
    %c0_i32_1 = arith.constant 0 : i32
    return %c0_i32, %c0_i32_0 : i32, i32
  }
  func.func @transform_2(%arg0: i32) -> (i32, i32) {
    %c0_i32 = arith.constant 0 : i32
    %c0_i32_0 = arith.constant 0 : i32
    %c0_i32_1 = arith.constant 0 : i32
    return %c0_i32, %c0_i32_0 : i32, i32
  }
  func.func @transform_3(%arg0: i32) -> (i32, i32) {
    %c0_i32 = arith.constant 0 : i32
    %c0_i32_0 = arith.constant 0 : i32
    %c0_i32_1 = arith.constant 0 : i32
    return %c0_i32, %c0_i32_0 : i32, i32
  }
  func.func @transform_4(%arg0: i32) -> (i32, i32) {
    %c0_i32 = arith.constant 0 : i32
    %c0_i32_0 = arith.constant 0 : i32
    %c0_i32_1 = arith.constant 0 : i32
    return %c0_i32, %c0_i32_0 : i32, i32
  }
}

</mosaic_0001>

<llo_original>
// kernel: tpu_custom_call.1
$region0: #{tpu_custom_call.1}
  #allocation0 [shape = 'u32[]', space=smem, size = 0x4, offset = 0x4, fixed_abs, tag = 'smem constant byte address 0x4 - core index']
  #allocation1 [shape = 'u32[72,128]{1,0:T(1,128)}', space=vmem, size = 0x9000, scoped, tag = 'internal scratch']
  #allocation2 [shape = 'f32[8,128]{1,0:T(8,128)}', space=vmem, size = 0x1000, scoped, tag = 'scratch operand']
  #allocation3 [shape = 'f32[8,128]{1,0:T(8,128)}', space=vmem, size = 0x1000, scoped, tag = 'scratch operand']
  #allocation4 [shape = 'f32[8,128]{1,0:T(8,128)}', space=vmem, size = 0x1000, scoped, tag = 'scratch operand']
  #allocation5 [shape = 'f32[8,128]{1,0:T(8,128)}', space=vmem, size = 0x1000, scoped, tag = 'scratch operand']
  %s0 = inlined_call_operand.hbm [shape: f32[8,8,512], index: 0, kind: input, shape index: {}]
  %s1 = inlined_call_operand.hbm [shape: bf16[128,512], index: 1, kind: input, shape index: {}]
  %s2 = inlined_call_operand.hbm [shape: bf16[256,512], index: 2, kind: input, shape index: {}]
  %s3 = inlined_call_operand.hbm [shape: f32[1,512], index: 3, kind: input, shape index: {}]
  %s4 = inlined_call_operand.hbm [shape: f32[8,128], index: 4, kind: output, shape index: {}]
  %s5 = sld [smem:[#allocation0]]
  $region46: #{tpu_custom_call.1} parent=0
    _
  %s7 = ssub.s32 1, %s5
  %s8 = scalar_select 0, %s7, %s5
  $region1: #{tpu_custom_call.1} parent=0
    #allocation6 [shape = 'u8[131072]{0}', space=vmem, size = 0x20000, scoped, tag = 'input window, operand 0, single buffered']
    #allocation7 [shape = 's32[1]{0}', space=sflag, size = 0x4, scoped, tag = 'scoped memory for tpu_custom_call.1']
    #allocation8 [shape = 's32[1]{0}', space=sflag, size = 0x4, scoped, tag = 'scoped memory for tpu_custom_call.1']
    #allocation9 [shape = 'u8[131072]{0}', space=vmem, size = 0x20000, scoped, tag = 'input window, operand 1, single buffered']
    #allocation10 [shape = 's32[1]{0}', space=sflag, size = 0x4, scoped, tag = 'scoped memory for tpu_custom_call.1']
    #allocation11 [shape = 'u8[262144]{0}', space=vmem, size = 0x40000, scoped, tag = 'input window, operand 2, single buffered']
    #allocation12 [shape = 'u8[2048]{0}', space=vmem, size = 0x800, scoped, tag = 'input window, operand 3, single buffered']
    #allocation13 [shape = 's32[1]{0}', space=sflag, size = 0x4, scoped, tag = 'scoped memory for tpu_custom_call.1']
    #allocation14 [shape = 'u8[4096]{0}', space=vmem, size = 0x1000, scoped, tag = 'output window, operand 0, single buffered']
    %9 = vsyncpa [#allocation7], 0
    %10 = vsyncpa [#allocation10], 0
    %11 = vsyncpa [#allocation13], 0
    %12 = vsyncpa [#allocation8], 0
    // Predicated region
    $region2: #{tpu_custom_call.1} parent=1 // pred_check
      _
    $region3: #{tpu_custom_call.1} parent=1 // pred_check_branch
      %14 = sbr.rel (0) target = $region5
    $region4: #{tpu_custom_call.1} parent=1 // pred_region
      %16 = vsyncadd [#allocation7], 0
      %s17 = sshll.u32 %s0, 4
      %s18 = int_to_ptr.hbm [resolvable:$true] %s17
      %s19 = sshll.u32 [#allocation6], 4
      %s20 = int_to_ptr.vmem [resolvable:$true] %s19
      %25 = dma.hbm_to_vmem [thread:$0]  %s18, 4096, %s20, [#allocation7], 512, 512, 32
    $region5: #{tpu_custom_call.1} parent=1 // pred_fallthru
      _
    // Predicated region
    $region6: #{tpu_custom_call.1} parent=1 // pred_check
      _
    $region7: #{tpu_custom_call.1} parent=1 // pred_check_branch
      %27 = sbr.rel (0) target = $region9
    $region8: #{tpu_custom_call.1} parent=1 // pred_region
      %29 = vsyncadd [#allocation10], 0
      %s30 = sshll.u32 %s1, 4
      %s31 = int_to_ptr.hbm [resolvable:$true] %s30
      %s32 = sshll.u32 [#allocation9], 4
      %s33 = int_to_ptr.vmem [resolvable:$true] %s32
      %38 = dma.hbm_to_vmem [thread:$0]  %s31, 4096, %s33, [#allocation10], 256, 256, 16
    $region9: #{tpu_custom_call.1} parent=1 // pred_fallthru
      _
    // Predicated region
    $region10: #{tpu_custom_call.1} parent=1 // pred_check
      _
    $region11: #{tpu_custom_call.1} parent=1 // pred_check_branch
      %40 = sbr.rel (0) target = $region13
    $region12: #{tpu_custom_call.1} parent=1 // pred_region
      %42 = vsyncadd [#allocation10], 0
      %s43 = sshll.u32 %s2, 4
      %s44 = int_to_ptr.hbm [resolvable:$true] %s43
      %s45 = sshll.u32 [#allocation11], 4
      %s46 = int_to_ptr.vmem [resolvable:$true] %s45
      %51 = dma.hbm_to_vmem [thread:$0]  %s44, 8192, %s46, [#allocation10], 256, 256, 16
    $region13: #{tpu_custom_call.1} parent=1 // pred_fallthru
      _
    // Predicated region
    $region14: #{tpu_custom_call.1} parent=1 // pred_check
      _
    $region15: #{tpu_custom_call.1} parent=1 // pred_check_branch
      %53 = sbr.rel (0) target = $region17
    $region16: #{tpu_custom_call.1} parent=1 // pred_region
      %55 = vsyncadd [#allocation13], 0
      %s57 = sshll.u32 %s3, 4
      %s58 = int_to_ptr.hbm [resolvable:$true] %s57
      %s59 = sshll.u32 [#allocation12], 4
      %s60 = int_to_ptr.vmem [resolvable:$true] %s59
      %62 = dma.hbm_to_vmem [thread:$0]  %s58, 64, %s60, [#allocation13]
    $region17: #{tpu_custom_call.1} parent=1 // pred_fallthru
      _
    // Predicated region
    $region18: #{tpu_custom_call.1} parent=1 // pred_check
      _
    $region19: #{tpu_custom_call.1} parent=1 // pred_check_branch
      %64 = sbr.rel (0) target = $region21
    $region20: #{tpu_custom_call.1} parent=1 // pred_region
      %66 = dma.done [#allocation7], 4096
    $region21: #{tpu_custom_call.1} parent=1 // pred_fallthru
      _
    // Predicated region
    $region22: #{tpu_custom_call.1} parent=1 // pred_check
      _
    $region23: #{tpu_custom_call.1} parent=1 // pred_check_branch
      %68 = sbr.rel (0) target = $region25
    $region24: #{tpu_custom_call.1} parent=1 // pred_region
      %70 = dma.done [#allocation10], 4096
    $region25: #{tpu_custom_call.1} parent=1 // pred_fallthru
      _
    // Predicated region
    $region26: #{tpu_custom_call.1} parent=1 // pred_check
      _
    $region27: #{tpu_custom_call.1} parent=1 // pred_check_branch
      %72 = sbr.rel (0) target = $region29
    $region28: #{tpu_custom_call.1} parent=1 // pred_region
      %74 = dma.done [#allocation10], 8192
    $region29: #{tpu_custom_call.1} parent=1 // pred_fallthru
      _
    // Predicated region
    $region30: #{tpu_custom_call.1} parent=1 // pred_check
      _
    $region31: #{tpu_custom_call.1} parent=1 // pred_check_branch
      %76 = sbr.rel (0) target = $region33
    $region32: #{tpu_custom_call.1} parent=1 // pred_region
      %78 = dma.done [#allocation13], 64
    $region33: #{tpu_custom_call.1} parent=1 // pred_fallthru
      _
    %p79 = scmp.eq.s32.totalorder 0, 0
    // Predicated region
    $region34: #{tpu_custom_call.1} parent=1 // pred_check
      %p80 = pneg %p79
    $region35: #{tpu_custom_call.1} parent=1 // pred_check_branch
      %82 = sbr.rel (%p80) target = $region37
    $region36: #{tpu_custom_call.1} parent=1 // pred_region
      %83 = vst [vmem:[#allocation2] sm:$0xff] 0.0
      %84 = vst [vmem:[#allocation3] sm:$0xff] 0.0
      %85 = vst [vmem:[#allocation4] sm:$0xff] 0.0
      %86 = vst [vmem:[#allocation5] sm:$0xff] 0.0
    $region37: #{tpu_custom_call.1} parent=1 // pred_fallthru
      _
    %v87 = vld [vmem:[#allocation9] sm:$0xff]
    %v88 = vld [vmem:[#allocation9 + $0x8] sm:$0xff]
    %v89 = vld [vmem:[#allocation9 + $0x10] sm:$0xff]
    %v90 = vld [vmem:[#allocation9 + $0x18] sm:$0xff]
    %v91 = vld [vmem:[#allocation9 + $0x20] sm:$0xff]
    %v92 = vld [vmem:[#allocation9 + $0x28] sm:$0xff]
    %v93 = vld [vmem:[#allocation9 + $0x30] sm:$0xff]
    %v94 = vld [vmem:[#allocation9 + $0x38] sm:$0xff]
    %v95 = vld [vmem:[#allocation9 + $0x40] sm:$0xff]
    %v96 = vld [vmem:[#allocation9 + $0x48] sm:$0xff]
    %v97 = vld [vmem:[#allocation9 + $0x50] sm:$0xff]
    %v98 = vld [vmem:[#allocation9 + $0x58] sm:$0xff]
    %v99 = vld [vmem:[#allocation9 + $0x60] sm:$0xff]
    %v100 = vld [vmem:[#allocation9 + $0x68] sm:$0xff]
    %v101 = vld [vmem:[#allocation9 + $0x70] sm:$0xff]
    %v102 = vld [vmem:[#allocation9 + $0x78] sm:$0xff]
    %v103 = vld [vmem:[#allocation9 + $0x80] sm:$0xff]
    %v104 = vld [vmem:[#allocation9 + $0x88] sm:$0xff]
    %v105 = vld [vmem:[#allocation9 + $0x90] sm:$0xff]
    %v106 = vld [vmem:[#allocation9 + $0x98] sm:$0xff]
    %v107 = vld [vmem:[#allocation9 + $0xa0] sm:$0xff]
    %v108 = vld [vmem:[#allocation9 + $0xa8] sm:$0xff]
    %v109 = vld [vmem:[#allocation9 + $0xb0] sm:$0xff]
    %v110 = vld [vmem:[#allocation9 + $0xb8] sm:$0xff]
    %v111 = vld [vmem:[#allocation9 + $0xc0] sm:$0xff]
    %v112 = vld [vmem:[#allocation9 + $0xc8] sm:$0xff]
    %v113 = vld [vmem:[#allocation9 + $0xd0] sm:$0xff]
    %v114 = vld [vmem:[#allocation9 + $0xd8] sm:$0xff]
    %v115 = vld [vmem:[#allocation9 + $0xe0] sm:$0xff]
    %v116 = vld [vmem:[#allocation9 + $0xe8] sm:$0xff]
    %v117 = vld [vmem:[#allocation9 + $0xf0] sm:$0xff]
    %v118 = vld [vmem:[#allocation9 + $0xf8] sm:$0xff]
    %v119 = vld [vmem:[#allocation11] sm:$0xff]
    %v120 = vld [vmem:[#allocation11 + $0x8] sm:$0xff]
    %v121 = vld [vmem:[#allocation11 + $0x10] sm:$0xff]
    %v122 = vld [vmem:[#allocation11 + $0x18] sm:$0xff]
    %v123 = vld [vmem:[#allocation11 + $0x20] sm:$0xff]
    %v124 = vld [vmem:[#allocation11 + $0x28] sm:$0xff]
    %v125 = vld [vmem:[#allocation11 + $0x30] sm:$0xff]
    %v126 = vld [vmem:[#allocation11 + $0x38] sm:$0xff]
    %v127 = vld [vmem:[#allocation11 + $0x40] sm:$0xff]
    %v128 = vld [vmem:[#allocation11 + $0x48] sm:$0xff]
    %v129 = vld [vmem:[#allocation11 + $0x50] sm:$0xff]
    %v130 = vld [vmem:[#allocation11 + $0x58] sm:$0xff]
    %v131 = vld [vmem:[#allocation11 + $0x60] sm:$0xff]
    %v132 = vld [vmem:[#allocation11 + $0x68] sm:$0xff]
    %v133 = vld [vmem:[#allocation11 + $0x70] sm:$0xff]
    %v134 = vld [vmem:[#allocation11 + $0x78] sm:$0xff]
    %v135 = vld [vmem:[#allocation11 + $0x80] sm:$0xff]
    %v136 = vld [vmem:[#allocation11 + $0x88] sm:$0xff]
    %v137 = vld [vmem:[#allocation11 + $0x90] sm:$0xff]
    %v138 = vld [vmem:[#allocation11 + $0x98] sm:$0xff]
    %v139 = vld [vmem:[#allocation11 + $0xa0] sm:$0xff]
    %v140 = vld [vmem:[#allocation11 + $0xa8] sm:$0xff]
    %v141 = vld [vmem:[#allocation11 + $0xb0] sm:$0xff]
    %v142 = vld [vmem:[#allocation11 + $0xb8] sm:$0xff]
    %v143 = vld [vmem:[#allocation11 + $0xc0] sm:$0xff]
    %v144 = vld [vmem:[#allocation11 + $0xc8] sm:$0xff]
    %v145 = vld [vmem:[#allocation11 + $0xd0] sm:$0xff]
    %v146 = vld [vmem:[#allocation11 + $0xd8] sm:$0xff]
    %v147 = vld [vmem:[#allocation11 + $0xe0] sm:$0xff]
    %v148 = vld [vmem:[#allocation11 + $0xe8] sm:$0xff]
    %v149 = vld [vmem:[#allocation11 + $0xf0] sm:$0xff]
    %v150 = vld [vmem:[#allocation11 + $0xf8] sm:$0xff]
    %v151 = vld [vmem:[#allocation11 + $0x100] sm:$0xff]
    %v152 = vld [vmem:[#allocation11 + $0x108] sm:$0xff]
    %v153 = vld [vmem:[#allocation11 + $0x110] sm:$0xff]
    %v154 = vld [vmem:[#allocation11 + $0x118] sm:$0xff]
    %v155 = vld [vmem:[#allocation11 + $0x120] sm:$0xff]
    %v156 = vld [vmem:[#allocation11 + $0x128] sm:$0xff]
    %v157 = vld [vmem:[#allocation11 + $0x130] sm:$0xff]
    %v158 = vld [vmem:[#allocation11 + $0x138] sm:$0xff]
    %v159 = vld [vmem:[#allocation11 + $0x140] sm:$0xff]
    %v160 = vld [vmem:[#allocation11 + $0x148] sm:$0xff]
    %v161 = vld [vmem:[#allocation11 + $0x150] sm:$0xff]
    %v162 = vld [vmem:[#allocation11 + $0x158] sm:$0xff]
    %v163 = vld [vmem:[#allocation11 + $0x160] sm:$0xff]
    %v164 = vld [vmem:[#allocation11 + $0x168] sm:$0xff]
    %v165 = vld [vmem:[#allocation11 + $0x170] sm:$0xff]
    %v166 = vld [vmem:[#allocation11 + $0x178] sm:$0xff]
    %v167 = vld [vmem:[#allocation11 + $0x180] sm:$0xff]
    %v168 = vld [vmem:[#allocation11 + $0x188] sm:$0xff]
    %v169 = vld [vmem:[#allocation11 + $0x190] sm:$0xff]
    %v170 = vld [vmem:[#allocation11 + $0x198] sm:$0xff]
    %v171 = vld [vmem:[#allocation11 + $0x1a0] sm:$0xff]
    %v172 = vld [vmem:[#allocation11 + $0x1a8] sm:$0xff]
    %v173 = vld [vmem:[#allocation11 + $0x1b0] sm:$0xff]
    %v174 = vld [vmem:[#allocation11 + $0x1b8] sm:$0xff]
    %v175 = vld [vmem:[#allocation11 + $0x1c0] sm:$0xff]
    %v176 = vld [vmem:[#allocation11 + $0x1c8] sm:$0xff]
    %v177 = vld [vmem:[#allocation11 + $0x1d0] sm:$0xff]
    %v178 = vld [vmem:[#allocation11 + $0x1d8] sm:$0xff]
    %v179 = vld [vmem:[#allocation11 + $0x1e0] sm:$0xff]
    %v180 = vld [vmem:[#allocation11 + $0x1e8] sm:$0xff]
    %v181 = vld [vmem:[#allocation11 + $0x1f0] sm:$0xff]
    %v182 = vld [vmem:[#allocation11 + $0x1f8] sm:$0xff]
    %v183 = vld [vmem:[#allocation12] sm:$0xf]
    %v185 = vperm.slane %v183, 0
    %v186 = vperm.slane %v183, 1
    %v187 = vperm.slane %v183, 2
    %v188 = vperm.slane %v183, 3
    %v193 = vld [vmem:[#allocation2] sm:$0xff]
    %v194 = vld [vmem:[#allocation3] sm:$0xff]
    %v195 = vld [vmem:[#allocation4] sm:$0xff]
    %v196 = vld [vmem:[#allocation5] sm:$0xff]
    %v197 = vld [vmem:[#allocation6] sm:$0xff]
    %v198 = vld [vmem:[#allocation6 + $0x8] sm:$0xff]
    %v199 = vld [vmem:[#allocation6 + $0x10] sm:$0xff]
    %v200 = vld [vmem:[#allocation6 + $0x18] sm:$0xff]
    %v201 = vpack.c.bf16 %v193, %v193
    %v234 = vunpack.c.l.b16 %v87
    %v235 = vunpack.c.h.b16 %v87
    %v236 = vunpack.c.l.b16 %v88
    %v237 = vunpack.c.h.b16 %v88
    %v238 = vunpack.c.l.b16 %v89
    %v239 = vunpack.c.h.b16 %v89
    %v240 = vunpack.c.l.b16 %v90
    %v241 = vunpack.c.h.b16 %v90
    %v242 = vunpack.c.l.b16 %v91
    %v243 = vunpack.c.h.b16 %v91
    %v244 = vunpack.c.l.b16 %v92
    %v245 = vunpack.c.h.b16 %v92
    %v246 = vunpack.c.l.b16 %v93
    %v247 = vunpack.c.h.b16 %v93
    %v248 = vunpack.c.l.b16 %v94
    %v249 = vunpack.c.h.b16 %v94
    %v250 = vunpack.c.l.b16 %v95
    %v251 = vunpack.c.h.b16 %v95
    %v252 = vunpack.c.l.b16 %v96
    %v253 = vunpack.c.h.b16 %v96
    %v254 = vunpack.c.l.b16 %v97
    %v255 = vunpack.c.h.b16 %v97
    %v256 = vunpack.c.l.b16 %v98
    %v257 = vunpack.c.h.b16 %v98
    %v258 = vunpack.c.l.b16 %v99
    %v259 = vunpack.c.h.b16 %v99
    %v260 = vunpack.c.l.b16 %v100
    %v261 = vunpack.c.h.b16 %v100
    %v262 = vunpack.c.l.b16 %v101
    %v263 = vunpack.c.h.b16 %v101
    %v264 = vunpack.c.l.b16 %v102
    %v265 = vunpack.c.h.b16 %v102
    %v266 = vunpack.c.l.b16 %v103
    %v267 = vunpack.c.h.b16 %v103
    %v268 = vunpack.c.l.b16 %v104
    %v269 = vunpack.c.h.b16 %v104
    %v270 = vunpack.c.l.b16 %v105
    %v271 = vunpack.c.h.b16 %v105
    %v272 = vunpack.c.l.b16 %v106
    %v273 = vunpack.c.h.b16 %v106
    %v274 = vunpack.c.l.b16 %v107
    %v275 = vunpack.c.h.b16 %v107
    %v276 = vunpack.c.l.b16 %v108
    %v277 = vunpack.c.h.b16 %v108
    %v278 = vunpack.c.l.b16 %v109
    %v279 = vunpack.c.h.b16 %v109
    %v280 = vunpack.c.l.b16 %v110
    %v281 = vunpack.c.h.b16 %v110
    %v282 = vunpack.c.l.b16 %v111
    %v283 = vunpack.c.h.b16 %v111
    %v284 = vunpack.c.l.b16 %v112
    %v285 = vunpack.c.h.b16 %v112
    %v286 = vunpack.c.l.b16 %v113
    %v287 = vunpack.c.h.b16 %v113
    %v288 = vunpack.c.l.b16 %v114
    %v289 = vunpack.c.h.b16 %v114
    %v290 = vunpack.c.l.b16 %v115
    %v291 = vunpack.c.h.b16 %v115
    %v292 = vunpack.c.l.b16 %v116
    %v293 = vunpack.c.h.b16 %v116
    %v294 = vunpack.c.l.b16 %v117
    %v295 = vunpack.c.h.b16 %v117
    %v296 = vunpack.c.l.b16 %v118
    %v297 = vunpack.c.h.b16 %v118
    %v298 = vpack.c.b16 %v238, %v234
    %v299 = vpack.c.b16 %v239, %v235
    %v300 = vpack.c.b16 %v240, %v236
    %v301 = vpack.c.b16 %v241, %v237
    %v302 = vpack.c.b16 %v246, %v242
    %v303 = vpack.c.b16 %v247, %v243
    %v304 = vpack.c.b16 %v248, %v244
    %v305 = vpack.c.b16 %v249, %v245
    %v306 = vpack.c.b16 %v254, %v250
    %v307 = vpack.c.b16 %v255, %v251
    %v308 = vpack.c.b16 %v256, %v252
    %v309 = vpack.c.b16 %v257, %v253
    %v310 = vpack.c.b16 %v262, %v258
    %v311 = vpack.c.b16 %v263, %v259
    %v312 = vpack.c.b16 %v264, %v260
    %v313 = vpack.c.b16 %v265, %v261
    %v314 = vpack.c.b16 %v270, %v266
    %v315 = vpack.c.b16 %v271, %v267
    %v316 = vpack.c.b16 %v272, %v268
    %v317 = vpack.c.b16 %v273, %v269
    %v318 = vpack.c.b16 %v278, %v274
    %v319 = vpack.c.b16 %v279, %v275
    %v320 = vpack.c.b16 %v280, %v276
    %v321 = vpack.c.b16 %v281, %v277
    %v322 = vpack.c.b16 %v286, %v282
    %v323 = vpack.c.b16 %v287, %v283
    %v324 = vpack.c.b16 %v288, %v284
    %v325 = vpack.c.b16 %v289, %v285
    %v326 = vpack.c.b16 %v294, %v290
    %v327 = vpack.c.b16 %v295, %v291
    %v328 = vpack.c.b16 %v296, %v292
    %v329 = vpack.c.b16 %v297, %v293
    %362 = vmatpush.bf16.msra.mxu0 %v326
    %363 = vmatpush.bf16.msra.mxu0 %v322
    %364 = vmatpush.bf16.msra.mxu0 %v318
    %365 = vmatpush.bf16.msra.mxu0 %v314
    %366 = vmatpush.bf16.msra.mxu0 %v310
    %367 = vmatpush.bf16.msra.mxu0 %v306
    %368 = vmatpush.bf16.msra.mxu0 %v302
    %369 = vmatpush.bf16.msra.mxu0 %v298
    %370 = vmatmul.bf16.gmra.mxu0 %v201
    %v371 = vpop.f32.mrf.mxu0
    %v372 = vadd.f32 0.0, %v371
    %v373 = vpop.f32.mrf.mxu0
    %374 = vdwg.mxu0
    %375 = vmatpush.bf16.msra.mxu0 %v327
    %376 = vmatpush.bf16.msra.mxu0 %v323
    %377 = vmatpush.bf16.msra.mxu0 %v319
    %378 = vmatpush.bf16.msra.mxu0 %v315
    %379 = vmatpush.bf16.msra.mxu0 %v311
    %380 = vmatpush.bf16.msra.mxu0 %v307
    %381 = vmatpush.bf16.msra.mxu0 %v303
    %382 = vmatpush.bf16.msra.mxu0 %v299
    %383 = vmatmul.bf16.gmra.mxu0 %v201
    %v384 = vpop.f32.mrf.mxu0
    %v385 = vadd.f32 0.0, %v384
    %v386 = vpop.f32.mrf.mxu0
    %387 = vdwg.mxu0
    %388 = vmatpush.bf16.msra.mxu0 %v328
    %389 = vmatpush.bf16.msra.mxu0 %v324
    %390 = vmatpush.bf16.msra.mxu0 %v320
    %391 = vmatpush.bf16.msra.mxu0 %v316
    %392 = vmatpush.bf16.msra.mxu0 %v312
    %393 = vmatpush.bf16.msra.mxu0 %v308
    %394 = vmatpush.bf16.msra.mxu0 %v304
    %395 = vmatpush.bf16.msra.mxu0 %v300
    %396 = vmatmul.bf16.gmra.mxu0 %v201
    %v397 = vpop.f32.mrf.mxu0
    %v398 = vadd.f32 0.0, %v397
    %v399 = vpop.f32.mrf.mxu0
    %400 = vdwg.mxu0
    %401 = vmatpush.bf16.msra.mxu0 %v329
    %402 = vmatpush.bf16.msra.mxu0 %v325
    %403 = vmatpush.bf16.msra.mxu0 %v321
    %404 = vmatpush.bf16.msra.mxu0 %v317
    %405 = vmatpush.bf16.msra.mxu0 %v313
    %406 = vmatpush.bf16.msra.mxu0 %v309
    %407 = vmatpush.bf16.msra.mxu0 %v305
    %408 = vmatpush.bf16.msra.mxu0 %v301
    %409 = vmatmul.bf16.gmra.mxu0 %v201
    %v410 = vpop.f32.mrf.mxu0
    %v411 = vadd.f32 0.0, %v410
    %v412 = vpop.f32.mrf.mxu0
    %413 = vdwg.mxu0
    %v414 = vadd.f32 %v197, %v372
    %v415 = vadd.f32 %v198, %v385
    %v416 = vadd.f32 %v199, %v398
    %v417 = vadd.f32 %v200, %v411
    %v418 = vxor.u32 %v414, 2147483648
    %v419 = vmul.f32 %v418, 1.442695
    %v420 = vpow.pop %v419
    %v421 = vadd.f32 %v420, 1.0
    %v422 = vrcp.pop %v421
    %v423 = vmul.f32 %v421, %v422
    %v424 = vsub.f32 1.0, %v423
    %v425 = vmul.f32 %v422, %v424
    %v426 = vadd.f32 %v422, %v425
    %vm427 = vweird.f32 %v421
    %vm428 = vweird.f32 %v422
    %vm429 = vmor %vm427, %vm428
    %v430 = vsel %vm429, %v422, %v426
    %v431 = vand.u32 2147483647, %v421
    %vm432 = vcmp.eq.f32.partialorder %v431, 8.507059e+37
    %v433 = vand.u32 %v421, 2147483648
    %v434 = vor.u32 1.1754944e-38, %v433
    %v435 = vsel %vm432, %v434, %v430
    %v436 = vmul.f32 1.0, %v435
    %v437 = vxor.u32 %v415, 2147483648
    %v438 = vmul.f32 %v437, 1.442695
    %v439 = vpow.pop %v438
    %v440 = vadd.f32 %v439, 1.0
    %v441 = vrcp.pop %v440
    %v442 = vmul.f32 %v440, %v441
    %v443 = vsub.f32 1.0, %v442
    %v444 = vmul.f32 %v441, %v443
    %v445 = vadd.f32 %v441, %v444
    %vm446 = vweird.f32 %v440
    %vm447 = vweird.f32 %v441
    %vm448 = vmor %vm446, %vm447
    %v449 = vsel %vm448, %v441, %v445
    %v450 = vand.u32 2147483647, %v440
    %vm451 = vcmp.eq.f32.partialorder %v450, 8.507059e+37
    %v452 = vand.u32 %v440, 2147483648
    %v453 = vor.u32 1.1754944e-38, %v452
    %v454 = vsel %vm451, %v453, %v449
    %v455 = vmul.f32 1.0, %v454
    %v456 = vtanh.pop %v416
    %v457 = vxor.u32 %v417, 2147483648
    %v458 = vmul.f32 %v457, 1.442695
    %v459 = vpow.pop %v458
    %v460 = vadd.f32 %v459, 1.0
    %v461 = vrcp.pop %v460
    %v462 = vmul.f32 %v460, %v461
    %v463 = vsub.f32 1.0, %v462
    %v464 = vmul.f32 %v461, %v463
    %v465 = vadd.f32 %v461, %v464
    %vm466 = vweird.f32 %v460
    %vm467 = vweird.f32 %v461
    %vm468 = vmor %vm466, %vm467
    %v469 = vsel %vm468, %v461, %v465
    %v470 = vand.u32 2147483647, %v460
    %vm471 = vcmp.eq.f32.partialorder %v470, 8.507059e+37
    %v472 = vand.u32 %v460, 2147483648
    %v473 = vor.u32 1.1754944e-38, %v472
    %v474 = vsel %vm471, %v473, %v469
    %v475 = vmul.f32 1.0, %v474
    %v476 = vmul.f32 %v455, %v194
    %v477 = vmul.f32 %v436, %v456
    %v478 = vadd.f32 %v476, %v477
    %v479 = vtanh.pop %v478
    %v480 = vmul.f32 %v475, %v479
    %v481 = vpack.c.bf16 %v480, %v480
    %v482 = vpack.c.bf16 %v195, %v195
    %v547 = vunpack.c.l.b16 %v119
    %v548 = vunpack.c.h.b16 %v119
    %v549 = vunpack.c.l.b16 %v120
    %v550 = vunpack.c.h.b16 %v120
    %v551 = vunpack.c.l.b16 %v121
    %v552 = vunpack.c.h.b16 %v121
    %v553 = vunpack.c.l.b16 %v122
    %v554 = vunpack.c.h.b16 %v122
    %v555 = vunpack.c.l.b16 %v123
    %v556 = vunpack.c.h.b16 %v123
    %v557 = vunpack.c.l.b16 %v124
    %v558 = vunpack.c.h.b16 %v124
    %v559 = vunpack.c.l.b16 %v125
    %v560 = vunpack.c.h.b16 %v125
    %v561 = vunpack.c.l.b16 %v126
    %v562 = vunpack.c.h.b16 %v126
    %v563 = vunpack.c.l.b16 %v127
    %v564 = vunpack.c.h.b16 %v127
    %v565 = vunpack.c.l.b16 %v128
    %v566 = vunpack.c.h.b16 %v128
    %v567 = vunpack.c.l.b16 %v129
    %v568 = vunpack.c.h.b16 %v129
    %v569 = vunpack.c.l.b16 %v130
    %v570 = vunpack.c.h.b16 %v130
    %v571 = vunpack.c.l.b16 %v131
    %v572 = vunpack.c.h.b16 %v131
    %v573 = vunpack.c.l.b16 %v132
    %v574 = vunpack.c.h.b16 %v132
    %v575 = vunpack.c.l.b16 %v133
    %v576 = vunpack.c.h.b16 %v133
    %v577 = vunpack.c.l.b16 %v134
    %v578 = vunpack.c.h.b16 %v134
    %v579 = vunpack.c.l.b16 %v135
    %v580 = vunpack.c.h.b16 %v135
    %v581 = vunpack.c.l.b16 %v136
    %v582 = vunpack.c.h.b16 %v136
    %v583 = vunpack.c.l.b16 %v137
    %v584 = vunpack.c.h.b16 %v137
    %v585 = vunpack.c.l.b16 %v138
    %v586 = vunpack.c.h.b16 %v138
    %v587 = vunpack.c.l.b16 %v139
    %v588 = vunpack.c.h.b16 %v139
    %v589 = vunpack.c.l.b16 %v140
    %v590 = vunpack.c.h.b16 %v140
    %v591 = vunpack.c.l.b16 %v141
    %v592 = vunpack.c.h.b16 %v141
    %v593 = vunpack.c.l.b16 %v142
    %v594 = vunpack.c.h.b16 %v142
    %v595 = vunpack.c.l.b16 %v143
    %v596 = vunpack.c.h.b16 %v143
    %v597 = vunpack.c.l.b16 %v144
    %v598 = vunpack.c.h.b16 %v144
    %v599 = vunpack.c.l.b16 %v145
    %v600 = vunpack.c.h.b16 %v145
    %v601 = vunpack.c.l.b16 %v146
    %v602 = vunpack.c.h.b16 %v146
    %v603 = vunpack.c.l.b16 %v147
    %v604 = vunpack.c.h.b16 %v147
    %v605 = vunpack.c.l.b16 %v148
    %v606 = vunpack.c.h.b16 %v148
    %v607 = vunpack.c.l.b16 %v149
    %v608 = vunpack.c.h.b16 %v149
    %v609 = vunpack.c.l.b16 %v150
    %v610 = vunpack.c.h.b16 %v150
    %v611 = vunpack.c.l.b16 %v151
    %v612 = vunpack.c.h.b16 %v151
    %v613 = vunpack.c.l.b16 %v152
    %v614 = vunpack.c.h.b16 %v152
    %v615 = vunpack.c.l.b16 %v153
    %v616 = vunpack.c.h.b16 %v153
    %v617 = vunpack.c.l.b16 %v154
    %v618 = vunpack.c.h.b16 %v154
    %v619 = vunpack.c.l.b16 %v155
    %v620 = vunpack.c.h.b16 %v155
    %v621 = vunpack.c.l.b16 %v156
    %v622 = vunpack.c.h.b16 %v156
    %v623 = vunpack.c.l.b16 %v157
    %v624 = vunpack.c.h.b16 %v157
    %v625 = vunpack.c.l.b16 %v158
    %v626 = vunpack.c.h.b16 %v158
    %v627 = vunpack.c.l.b16 %v159
    %v628 = vunpack.c.h.b16 %v159
    %v629 = vunpack.c.l.b16 %v160
    %v630 = vunpack.c.h.b16 %v160
    %v631 = vunpack.c.l.b16 %v161
    %v632 = vunpack.c.h.b16 %v161
    %v633 = vunpack.c.l.b16 %v162
    %v634 = vunpack.c.h.b16 %v162
    %v635 = vunpack.c.l.b16 %v163
    %v636 = vunpack.c.h.b16 %v163
    %v637 = vunpack.c.l.b16 %v164
    %v638 = vunpack.c.h.b16 %v164
    %v639 = vunpack.c.l.b16 %v165
    %v640 = vunpack.c.h.b16 %v165
    %v641 = vunpack.c.l.b16 %v166
    %v642 = vunpack.c.h.b16 %v166
    %v643 = vunpack.c.l.b16 %v167
    %v644 = vunpack.c.h.b16 %v167
    %v645 = vunpack.c.l.b16 %v168
    %v646 = vunpack.c.h.b16 %v168
    %v647 = vunpack.c.l.b16 %v169
    %v648 = vunpack.c.h.b16 %v169
    %v649 = vunpack.c.l.b16 %v170
    %v650 = vunpack.c.h.b16 %v170
    %v651 = vunpack.c.l.b16 %v171
    %v652 = vunpack.c.h.b16 %v171
    %v653 = vunpack.c.l.b16 %v172
    %v654 = vunpack.c.h.b16 %v172
    %v655 = vunpack.c.l.b16 %v173
    %v656 = vunpack.c.h.b16 %v173
    %v657 = vunpack.c.l.b16 %v174
    %v658 = vunpack.c.h.b16 %v174
    %v659 = vunpack.c.l.b16 %v175
    %v660 = vunpack.c.h.b16 %v175
    %v661 = vunpack.c.l.b16 %v176
    %v662 = vunpack.c.h.b16 %v176
    %v663 = vunpack.c.l.b16 %v177
    %v664 = vunpack.c.h.b16 %v177
    %v665 = vunpack.c.l.b16 %v178
    %v666 = vunpack.c.h.b16 %v178
    %v667 = vunpack.c.l.b16 %v179
    %v668 = vunpack.c.h.b16 %v179
    %v669 = vunpack.c.l.b16 %v180
    %v670 = vunpack.c.h.b16 %v180
    %v671 = vunpack.c.l.b16 %v181
    %v672 = vunpack.c.h.b16 %v181
    %v673 = vunpack.c.l.b16 %v182
    %v674 = vunpack.c.h.b16 %v182
    %v675 = vpack.c.b16 %v551, %v547
    %v676 = vpack.c.b16 %v552, %v548
    %v677 = vpack.c.b16 %v553, %v549
    %v678 = vpack.c.b16 %v554, %v550
    %v679 = vpack.c.b16 %v559, %v555
    %v680 = vpack.c.b16 %v560, %v556
    %v681 = vpack.c.b16 %v561, %v557
    %v682 = vpack.c.b16 %v562, %v558
    %v683 = vpack.c.b16 %v567, %v563
    %v684 = vpack.c.b16 %v568, %v564
    %v685 = vpack.c.b16 %v569, %v565
    %v686 = vpack.c.b16 %v570, %v566
    %v687 = vpack.c.b16 %v575, %v571
    %v688 = vpack.c.b16 %v576, %v572
    %v689 = vpack.c.b16 %v577, %v573
    %v690 = vpack.c.b16 %v578, %v574
    %v691 = vpack.c.b16 %v583, %v579
    %v692 = vpack.c.b16 %v584, %v580
    %v693 = vpack.c.b16 %v585, %v581
    %v694 = vpack.c.b16 %v586, %v582
    %v695 = vpack.c.b16 %v591, %v587
    %v696 = vpack.c.b16 %v592, %v588
    %v697 = vpack.c.b16 %v593, %v589
    %v698 = vpack.c.b16 %v594, %v590
    %v699 = vpack.c.b16 %v599, %v595
    %v700 = vpack.c.b16 %v600, %v596
    %v701 = vpack.c.b16 %v601, %v597
    %v702 = vpack.c.b16 %v602, %v598
    %v703 = vpack.c.b16 %v607, %v603
    %v704 = vpack.c.b16 %v608, %v604
    %v705 = vpack.c.b16 %v609, %v605
    %v706 = vpack.c.b16 %v610, %v606
    %v707 = vpack.c.b16 %v615, %v611
    %v708 = vpack.c.b16 %v616, %v612
    %v709 = vpack.c.b16 %v617, %v613
    %v710 = vpack.c.b16 %v618, %v614
    %v711 = vpack.c.b16 %v623, %v619
    %v712 = vpack.c.b16 %v624, %v620
    %v713 = vpack.c.b16 %v625, %v621
    %v714 = vpack.c.b16 %v626, %v622
    %v715 = vpack.c.b16 %v631, %v627
    %v716 = vpack.c.b16 %v632, %v628
    %v717 = vpack.c.b16 %v633, %v629
    %v718 = vpack.c.b16 %v634, %v630
    %v719 = vpack.c.b16 %v639, %v635
    %v720 = vpack.c.b16 %v640, %v636
    %v721 = vpack.c.b16 %v641, %v637
    %v722 = vpack.c.b16 %v642, %v638
    %v723 = vpack.c.b16 %v647, %v643
    %v724 = vpack.c.b16 %v648, %v644
    %v725 = vpack.c.b16 %v649, %v645
    %v726 = vpack.c.b16 %v650, %v646
    %v727 = vpack.c.b16 %v655, %v651
    %v728 = vpack.c.b16 %v656, %v652
    %v729 = vpack.c.b16 %v657, %v653
    %v730 = vpack.c.b16 %v658, %v654
    %v731 = vpack.c.b16 %v663, %v659
    %v732 = vpack.c.b16 %v664, %v660
    %v733 = vpack.c.b16 %v665, %v661
    %v734 = vpack.c.b16 %v666, %v662
    %v735 = vpack.c.b16 %v671, %v667
    %v736 = vpack.c.b16 %v672, %v668
    %v737 = vpack.c.b16 %v673, %v669
    %v738 = vpack.c.b16 %v674, %v670
    %803 = vmatpush.bf16.msra.mxu0 %v703
    %804 = vmatpush.bf16.msra.mxu0 %v699
    %805 = vmatpush.bf16.msra.mxu0 %v695
    %806 = vmatpush.bf16.msra.mxu0 %v691
    %807 = vmatpush.bf16.msra.mxu0 %v687
    %808 = vmatpush.bf16.msra.mxu0 %v683
    %809 = vmatpush.bf16.msra.mxu0 %v679
    %810 = vmatpush.bf16.msra.mxu0 %v675
    %811 = vmatmul.bf16.gmra.mxu0 %v481
    %v812 = vpop.f32.mrf.mxu0
    %v813 = vadd.f32 %v185, %v812
    %v814 = vpop.f32.mrf.mxu0
    %815 = vdwg.mxu0
    %816 = vmatpush.bf16.msra.mxu0 %v735
    %817 = vmatpush.bf16.msra.mxu0 %v731
    %818 = vmatpush.bf16.msra.mxu0 %v727
    %819 = vmatpush.bf16.msra.mxu0 %v723
    %820 = vmatpush.bf16.msra.mxu0 %v719
    %821 = vmatpush.bf16.msra.mxu0 %v715
    %822 = vmatpush.bf16.msra.mxu0 %v711
    %823 = vmatpush.bf16.msra.mxu0 %v707
    %824 = vmatmul.bf16.gmra.mxu0 %v482
    %v825 = vpop.f32.mrf.mxu0
    %v826 = vadd.f32 %v813, %v825
    %v827 = vpop.f32.mrf.mxu0
    %828 = vdwg.mxu0
    %829 = vmatpush.bf16.msra.mxu0 %v704
    %830 = vmatpush.bf16.msra.mxu0 %v700
    %831 = vmatpush.bf16.msra.mxu0 %v696
    %832 = vmatpush.bf16.msra.mxu0 %v692
    %833 = vmatpush.bf16.msra.mxu0 %v688
    %834 = vmatpush.bf16.msra.mxu0 %v684
    %835 = vmatpush.bf16.msra.mxu0 %v680
    %836 = vmatpush.bf16.msra.mxu0 %v676
    %837 = vmatmul.bf16.gmra.mxu0 %v481
    %v838 = vpop.f32.mrf.mxu0
    %v839 = vadd.f32 %v186, %v838
    %v840 = vpop.f32.mrf.mxu0
    %841 = vdwg.mxu0
    %842 = vmatpush.bf16.msra.mxu0 %v736
    %843 = vmatpush.bf16.msra.mxu0 %v732
    %844 = vmatpush.bf16.msra.mxu0 %v728
    %845 = vmatpush.bf16.msra.mxu0 %v724
    %846 = vmatpush.bf16.msra.mxu0 %v720
    %847 = vmatpush.bf16.msra.mxu0 %v716
    %848 = vmatpush.bf16.msra.mxu0 %v712
    %849 = vmatpush.bf16.msra.mxu0 %v708
    %850 = vmatmul.bf16.gmra.mxu0 %v482
    %v851 = vpop.f32.mrf.mxu0
    %v852 = vadd.f32 %v839, %v851
    %v853 = vpop.f32.mrf.mxu0
    %854 = vdwg.mxu0
    %855 = vmatpush.bf16.msra.mxu0 %v705
    %856 = vmatpush.bf16.msra.mxu0 %v701
    %857 = vmatpush.bf16.msra.mxu0 %v697
    %858 = vmatpush.bf16.msra.mxu0 %v693
    %859 = vmatpush.bf16.msra.mxu0 %v689
    %860 = vmatpush.bf16.msra.mxu0 %v685
    %861 = vmatpush.bf16.msra.mxu0 %v681
    %862 = vmatpush.bf16.msra.mxu0 %v677
    %863 = vmatmul.bf16.gmra.mxu0 %v481
    %v864 = vpop.f32.mrf.mxu0
    %v865 = vadd.f32 %v187, %v864
    %v866 = vpop.f32.mrf.mxu0
    %867 = vdwg.mxu0
    %868 = vmatpush.bf16.msra.mxu0 %v737
    %869 = vmatpush.bf16.msra.mxu0 %v733
    %870 = vmatpush.bf16.msra.mxu0 %v729
    %871 = vmatpush.bf16.msra.mxu0 %v725
    %872 = vmatpush.bf16.msra.mxu0 %v721
    %873 = vmatpush.bf16.msra.mxu0 %v717
    %874 = vmatpush.bf16.msra.mxu0 %v713
    %875 = vmatpush.bf16.msra.mxu0 %v709
    %876 = vmatmul.bf16.gmra.mxu0 %v482
    %v877 = vpop.f32.mrf.mxu0
    %v878 = vadd.f32 %v865, %v877
    %v879 = vpop.f32.mrf.mxu0
    %880 = vdwg.mxu0
    %881 = vmatpush.bf16.msra.mxu0 %v706
    %882 = vmatpush.bf16.msra.mxu0 %v702
    %883 = vmatpush.bf16.msra.mxu0 %v698
    %884 = vmatpush.bf16.msra.mxu0 %v694
    %885 = vmatpush.bf16.msra.mxu0 %v690
    %886 = vmatpush.bf16.msra.mxu0 %v686
    %887 = vmatpush.bf16.msra.mxu0 %v682
    %888 = vmatpush.bf16.msra.mxu0 %v678
    %889 = vmatmul.bf16.gmra.mxu0 %v481
    %v890 = vpop.f32.mrf.mxu0
    %v891 = vadd.f32 %v188, %v890
    %v892 = vpop.f32.mrf.mxu0
    %893 = vdwg.mxu0
    %894 = vmatpush.bf16.msra.mxu0 %v738
    %895 = vmatpush.bf16.msra.mxu0 %v734
    %896 = vmatpush.bf16.msra.mxu0 %v730
    %897 = vmatpush.bf16.msra.mxu0 %v726
    %898 = vmatpush.bf16.msra.mxu0 %v722
    %899 = vmatpush.bf16.msra.mxu0 %v718
    %900 = vmatpush.bf16.msra.mxu0 %v714
    %901 = vmatpush.bf16.msra.mxu0 %v710
    %902 = vmatmul.bf16.gmra.mxu0 %v482
    %v903 = vpop.f32.mrf.mxu0
    %v904 = vadd.f32 %v891, %v903
    %v905 = vpop.f32.mrf.mxu0
    %906 = vdwg.mxu0
    %v907 = vxor.u32 %v826, 2147483648
    %v908 = vmul.f32 %v907, 1.442695
    %v909 = vpow.pop %v908
    %v910 = vadd.f32 %v909, 1.0
    %v911 = vrcp.pop %v910
    %v912 = vmul.f32 %v910, %v911
    %v913 = vsub.f32 1.0, %v912
    %v914 = vmul.f32 %v911, %v913
    %v915 = vadd.f32 %v911, %v914
    %vm916 = vweird.f32 %v910
    %vm917 = vweird.f32 %v911
    %vm918 = vmor %vm916, %vm917
    %v919 = vsel %vm918, %v911, %v915
    %v920 = vand.u32 2147483647, %v910
    %vm921 = vcmp.eq.f32.partialorder %v920, 8.507059e+37
    %v922 = vand.u32 %v910, 2147483648
    %v923 = vor.u32 1.1754944e-38, %v922
    %v924 = vsel %vm921, %v923, %v919
    %v925 = vmul.f32 1.0, %v924
    %v926 = vxor.u32 %v852, 2147483648
    %v927 = vmul.f32 %v926, 1.442695
    %v928 = vpow.pop %v927
    %v929 = vadd.f32 %v928, 1.0
    %v930 = vrcp.pop %v929
    %v931 = vmul.f32 %v929, %v930
    %v932 = vsub.f32 1.0, %v931
    %v933 = vmul.f32 %v930, %v932
    %v934 = vadd.f32 %v930, %v933
    %vm935 = vweird.f32 %v929
    %vm936 = vweird.f32 %v930
    %vm937 = vmor %vm935, %vm936
    %v938 = vsel %vm937, %v930, %v934
    %v939 = vand.u32 2147483647, %v929
    %vm940 = vcmp.eq.f32.partialorder %v939, 8.507059e+37
    %v941 = vand.u32 %v929, 2147483648
    %v942 = vor.u32 1.1754944e-38, %v941
    %v943 = vsel %vm940, %v942, %v938
    %v944 = vmul.f32 1.0, %v943
    %v945 = vtanh.pop %v878
    %v946 = vxor.u32 %v904, 2147483648
    %v947 = vmul.f32 %v946, 1.442695
    %v948 = vpow.pop %v947
    %v949 = vadd.f32 %v948, 1.0
    %v950 = vrcp.pop %v949
    %v951 = vmul.f32 %v949, %v950
    %v952 = vsub.f32 1.0, %v951
    %v953 = vmul.f32 %v950, %v952
    %v954 = vadd.f32 %v950, %v953
    %vm955 = vweird.f32 %v949
    %vm956 = vweird.f32 %v950
    %vm957 = vmor %vm955, %vm956
    %v958 = vsel %vm957, %v950, %v954
    %v959 = vand.u32 2147483647, %v949
    %vm960 = vcmp.eq.f32.partialorder %v959, 8.507059e+37
    %v961 = vand.u32 %v949, 2147483648
    %v962 = vor.u32 1.1754944e-38, %v961
    %v963 = vsel %vm960, %v962, %v958
    %v964 = vmul.f32 1.0, %v963
    %v965 = vmul.f32 %v944, %v196
    %v966 = vmul.f32 %v925, %v945
    %v967 = vadd.f32 %v965, %v966
    %v968 = vtanh.pop %v967
    %v969 = vmul.f32 %v964, %v968
    %s970 = scalar_lea.vmem [#allocation6], 32
    %v971 = vld [vmem:[%s970] sm:$0xff]
    %v972 = vld [vmem:[%s970 + $0x8] sm:$0xff]
    %v973 = vld [vmem:[%s970 + $0x10] sm:$0xff]
    %v974 = vld [vmem:[%s970 + $0x18] sm:$0xff]
    %975 = vmatpush.bf16.msra.mxu0 %v326
    %976 = vmatpush.bf16.msra.mxu0 %v322
    %977 = vmatpush.bf16.msra.mxu0 %v318
    %978 = vmatpush.bf16.msra.mxu0 %v314
    %979 = vmatpush.bf16.msra.mxu0 %v310
    %980 = vmatpush.bf16.msra.mxu0 %v306
    %981 = vmatpush.bf16.msra.mxu0 %v302
    %982 = vmatpush.bf16.msra.mxu0 %v298
    %983 = vmatmul.bf16.gmra.mxu0 %v481
    %v984 = vpop.f32.mrf.mxu0
    %v985 = vadd.f32 0.0, %v984
    %v986 = vpop.f32.mrf.mxu0
    %987 = vdwg.mxu0
    %988 = vmatpush.bf16.msra.mxu0 %v327
    %989 = vmatpush.bf16.msra.mxu0 %v323
    %990 = vmatpush.bf16.msra.mxu0 %v319
    %991 = vmatpush.bf16.msra.mxu0 %v315
    %992 = vmatpush.bf16.msra.mxu0 %v311
    %993 = vmatpush.bf16.msra.mxu0 %v307
    %994 = vmatpush.bf16.msra.mxu0 %v303
    %995 = vmatpush.bf16.msra.mxu0 %v299
    %996 = vmatmul.bf16.gmra.mxu0 %v481
    %v997 = vpop.f32.mrf.mxu0
    %v998 = vadd.f32 0.0, %v997
    %v999 = vpop.f32.mrf.mxu0
    %1000 = vdwg.mxu0
    %1001 = vmatpush.bf16.msra.mxu0 %v328
    %1002 = vmatpush.bf16.msra.mxu0 %v324
    %1003 = vmatpush.bf16.msra.mxu0 %v320
    %1004 = vmatpush.bf16.msra.mxu0 %v316
    %1005 = vmatpush.bf16.msra.mxu0 %v312
    %1006 = vmatpush.bf16.msra.mxu0 %v308
    %1007 = vmatpush.bf16.msra.mxu0 %v304
    %1008 = vmatpush.bf16.msra.mxu0 %v300
    %1009 = vmatmul.bf16.gmra.mxu0 %v481
    %v1010 = vpop.f32.mrf.mxu0
    %v1011 = vadd.f32 0.0, %v1010
    %v1012 = vpop.f32.mrf.mxu0
    %1013 = vdwg.mxu0
    %1014 = vmatpush.bf16.msra.mxu0 %v329
    %1015 = vmatpush.bf16.msra.mxu0 %v325
    %1016 = vmatpush.bf16.msra.mxu0 %v321
    %1017 = vmatpush.bf16.msra.mxu0 %v317
    %1018 = vmatpush.bf16.msra.mxu0 %v313
    %1019 = vmatpush.bf16.msra.mxu0 %v309
    %1020 = vmatpush.bf16.msra.mxu0 %v305
    %1021 = vmatpush.bf16.msra.mxu0 %v301
    %1022 = vmatmul.bf16.gmra.mxu0 %v481
    %v1023 = vpop.f32.mrf.mxu0
    %v1024 = vadd.f32 0.0, %v1023
    %v1025 = vpop.f32.mrf.mxu0
    %1026 = vdwg.mxu0
    %v1027 = vadd.f32 %v971, %v985
    %v1028 = vadd.f32 %v972, %v998
    %v1029 = vadd.f32 %v973, %v1011
    %v1030 = vadd.f32 %v974, %v1024
    %v1031 = vxor.u32 %v1027, 2147483648
    %v1032 = vmul.f32 %v1031, 1.442695
    %v1033 = vpow.pop %v1032
    %v1034 = vadd.f32 %v1033, 1.0
    %v1035 = vrcp.pop %v1034
    %v1036 = vmul.f32 %v1034, %v1035
    %v1037 = vsub.f32 1.0, %v1036
    %v1038 = vmul.f32 %v1035, %v1037
    %v1039 = vadd.f32 %v1035, %v1038
    %vm1040 = vweird.f32 %v1034
    %vm1041 = vweird.f32 %v1035
    %vm1042 = vmor %vm1040, %vm1041
    %v1043 = vsel %vm1042, %v1035, %v1039
    %v1044 = vand.u32 2147483647, %v1034
    %vm1045 = vcmp.eq.f32.partialorder %v1044, 8.507059e+37
    %v1046 = vand.u32 %v1034, 2147483648
    %v1047 = vor.u32 1.1754944e-38, %v1046
    %v1048 = vsel %vm1045, %v1047, %v1043
    %v1049 = vmul.f32 1.0, %v1048
    %v1050 = vxor.u32 %v1028, 2147483648
    %v1051 = vmul.f32 %v1050, 1.442695
    %v1052 = vpow.pop %v1051
    %v1053 = vadd.f32 %v1052, 1.0
    %v1054 = vrcp.pop %v1053
    %v1055 = vmul.f32 %v1053, %v1054
    %v1056 = vsub.f32 1.0, %v1055
    %v1057 = vmul.f32 %v1054, %v1056
    %v1058 = vadd.f32 %v1054, %v1057
    %vm1059 = vweird.f32 %v1053
    %vm1060 = vweird.f32 %v1054
    %vm1061 = vmor %vm1059, %vm1060
    %v1062 = vsel %vm1061, %v1054, %v1058
    %v1063 = vand.u32 2147483647, %v1053
    %vm1064 = vcmp.eq.f32.partialorder %v1063, 8.507059e+37
    %v1065 = vand.u32 %v1053, 2147483648
    %v1066 = vor.u32 1.1754944e-38, %v1065
    %v1067 = vsel %vm1064, %v1066, %v1062
    %v1068 = vmul.f32 1.0, %v1067
    %v1069 = vtanh.pop %v1029
    %v1070 = vxor.u32 %v1030, 2147483648
    %v1071 = vmul.f32 %v1070, 1.442695
    %v1072 = vpow.pop %v1071
    %v1073 = vadd.f32 %v1072, 1.0
    %v1074 = vrcp.pop %v1073
    %v1075 = vmul.f32 %v1073, %v1074
    %v1076 = vsub.f32 1.0, %v1075
    %v1077 = vmul.f32 %v1074, %v1076
    %v1078 = vadd.f32 %v1074, %v1077
    %vm1079 = vweird.f32 %v1073
    %vm1080 = vweird.f32 %v1074
    %vm1081 = vmor %vm1079, %vm1080
    %v1082 = vsel %vm1081, %v1074, %v1078
    %v1083 = vand.u32 2147483647, %v1073
    %vm1084 = vcmp.eq.f32.partialorder %v1083, 8.507059e+37
    %v1085 = vand.u32 %v1073, 2147483648
    %v1086 = vor.u32 1.1754944e-38, %v1085
    %v1087 = vsel %vm1084, %v1086, %v1082
    %v1088 = vmul.f32 1.0, %v1087
    %v1089 = vmul.f32 %v1068, %v478
    %v1090 = vmul.f32 %v1049, %v1069
    %v1091 = vadd.f32 %v1089, %v1090
    %v1092 = vtanh.pop %v1091
    %v1093 = vmul.f32 %v1088, %v1092
    %v1094 = vpack.c.bf16 %v1093, %v1093
    %v1095 = vpack.c.bf16 %v969, %v969
    %1096 = vmatpush.bf16.msra.mxu0 %v703
    %1097 = vmatpush.bf16.msra.mxu0 %v699
    %1098 = vmatpush.bf16.msra.mxu0 %v695
    %1099 = vmatpush.bf16.msra.mxu0 %v691
    %1100 = vmatpush.bf16.msra.mxu0 %v687
    %1101 = vmatpush.bf16.msra.mxu0 %v683
    %1102 = vmatpush.bf16.msra.mxu0 %v679
    %1103 = vmatpush.bf16.msra.mxu0 %v675
    %1104 = vmatmul.bf16.gmra.mxu0 %v1094
    %v1105 = vpop.f32.mrf.mxu0
    %v1106 = vadd.f32 %v185, %v1105
    %v1107 = vpop.f32.mrf.mxu0
    %1108 = vdwg.mxu0
    %1109 = vmatpush.bf16.msra.mxu0 %v735
    %1110 = vmatpush.bf16.msra.mxu0 %v731
    %1111 = vmatpush.bf16.msra.mxu0 %v727
    %1112 = vmatpush.bf16.msra.mxu0 %v723
    %1113 = vmatpush.bf16.msra.mxu0 %v719
    %1114 = vmatpush.bf16.msra.mxu0 %v715
    %1115 = vmatpush.bf16.msra.mxu0 %v711
    %1116 = vmatpush.bf16.msra.mxu0 %v707
    %1117 = vmatmul.bf16.gmra.mxu0 %v1095
    %v1118 = vpop.f32.mrf.mxu0
    %v1119 = vadd.f32 %v1106, %v1118
    %v1120 = vpop.f32.mrf.mxu0
    %1121 = vdwg.mxu0
    %1122 = vmatpush.bf16.msra.mxu0 %v704
    %1123 = vmatpush.bf16.msra.mxu0 %v700
    %1124 = vmatpush.bf16.msra.mxu0 %v696
    %1125 = vmatpush.bf16.msra.mxu0 %v692
    %1126 = vmatpush.bf16.msra.mxu0 %v688
    %1127 = vmatpush.bf16.msra.mxu0 %v684
    %1128 = vmatpush.bf16.msra.mxu0 %v680
    %1129 = vmatpush.bf16.msra.mxu0 %v676
    %1130 = vmatmul.bf16.gmra.mxu0 %v1094
    %v1131 = vpop.f32.mrf.mxu0
    %v1132 = vadd.f32 %v186, %v1131
    %v1133 = vpop.f32.mrf.mxu0
    %1134 = vdwg.mxu0
    %1135 = vmatpush.bf16.msra.mxu0 %v736
    %1136 = vmatpush.bf16.msra.mxu0 %v732
    %1137 = vmatpush.bf16.msra.mxu0 %v728
    %1138 = vmatpush.bf16.msra.mxu0 %v724
    %1139 = vmatpush.bf16.msra.mxu0 %v720
    %1140 = vmatpush.bf16.msra.mxu0 %v716
    %1141 = vmatpush.bf16.msra.mxu0 %v712
    %1142 = vmatpush.bf16.msra.mxu0 %v708
    %1143 = vmatmul.bf16.gmra.mxu0 %v1095
    %v1144 = vpop.f32.mrf.mxu0
    %v1145 = vadd.f32 %v1132, %v1144
    %v1146 = vpop.f32.mrf.mxu0
    %1147 = vdwg.mxu0
    %1148 = vmatpush.bf16.msra.mxu0 %v705
    %1149 = vmatpush.bf16.msra.mxu0 %v701
    %1150 = vmatpush.bf16.msra.mxu0 %v697
    %1151 = vmatpush.bf16.msra.mxu0 %v693
    %1152 = vmatpush.bf16.msra.mxu0 %v689
    %1153 = vmatpush.bf16.msra.mxu0 %v685
    %1154 = vmatpush.bf16.msra.mxu0 %v681
    %1155 = vmatpush.bf16.msra.mxu0 %v677
    %1156 = vmatmul.bf16.gmra.mxu0 %v1094
    %v1157 = vpop.f32.mrf.mxu0
    %v1158 = vadd.f32 %v187, %v1157
    %v1159 = vpop.f32.mrf.mxu0
    %1160 = vdwg.mxu0
    %1161 = vmatpush.bf16.msra.mxu0 %v737
    %1162 = vmatpush.bf16.msra.mxu0 %v733
    %1163 = vmatpush.bf16.msra.mxu0 %v729
    %1164 = vmatpush.bf16.msra.mxu0 %v725
    %1165 = vmatpush.bf16.msra.mxu0 %v721
    %1166 = vmatpush.bf16.msra.mxu0 %v717
    %1167 = vmatpush.bf16.msra.mxu0 %v713
    %1168 = vmatpush.bf16.msra.mxu0 %v709
    %1169 = vmatmul.bf16.gmra.mxu0 %v1095
    %v1170 = vpop.f32.mrf.mxu0
    %v1171 = vadd.f32 %v1158, %v1170
    %v1172 = vpop.f32.mrf.mxu0
    %1173 = vdwg.mxu0
    %1174 = vmatpush.bf16.msra.mxu0 %v706
    %1175 = vmatpush.bf16.msra.mxu0 %v702
    %1176 = vmatpush.bf16.msra.mxu0 %v698
    %1177 = vmatpush.bf16.msra.mxu0 %v694
    %1178 = vmatpush.bf16.msra.mxu0 %v690
    %1179 = vmatpush.bf16.msra.mxu0 %v686
    %1180 = vmatpush.bf16.msra.mxu0 %v682
    %1181 = vmatpush.bf16.msra.mxu0 %v678
    %1182 = vmatmul.bf16.gmra.mxu0 %v1094
    %v1183 = vpop.f32.mrf.mxu0
    %v1184 = vadd.f32 %v188, %v1183
    %v1185 = vpop.f32.mrf.mxu0
    %1186 = vdwg.mxu0
    %1187 = vmatpush.bf16.msra.mxu0 %v738
    %1188 = vmatpush.bf16.msra.mxu0 %v734
    %1189 = vmatpush.bf16.msra.mxu0 %v730
    %1190 = vmatpush.bf16.msra.mxu0 %v726
    %1191 = vmatpush.bf16.msra.mxu0 %v722
    %1192 = vmatpush.bf16.msra.mxu0 %v718
    %1193 = vmatpush.bf16.msra.mxu0 %v714
    %1194 = vmatpush.bf16.msra.mxu0 %v710
    %1195 = vmatmul.bf16.gmra.mxu0 %v1095
    %v1196 = vpop.f32.mrf.mxu0
    %v1197 = vadd.f32 %v1184, %v1196
    %v1198 = vpop.f32.mrf.mxu0
    %1199 = vdwg.mxu0
    %v1200 = vxor.u32 %v1119, 2147483648
    %v1201 = vmul.f32 %v1200, 1.442695
    %v1202 = vpow.pop %v1201
    %v1203 = vadd.f32 %v1202, 1.0
    %v1204 = vrcp.pop %v1203
    %v1205 = vmul.f32 %v1203, %v1204
    %v1206 = vsub.f32 1.0, %v1205
    %v1207 = vmul.f32 %v1204, %v1206
    %v1208 = vadd.f32 %v1204, %v1207
    %vm1209 = vweird.f32 %v1203
    %vm1210 = vweird.f32 %v1204
    %vm1211 = vmor %vm1209, %vm1210
    %v1212 = vsel %vm1211, %v1204, %v1208
    %v1213 = vand.u32 2147483647, %v1203
    %vm1214 = vcmp.eq.f32.partialorder %v1213, 8.507059e+37
    %v1215 = vand.u32 %v1203, 2147483648
    %v1216 = vor.u32 1.1754944e-38, %v1215
    %v1217 = vsel %vm1214, %v1216, %v1212
    %v1218 = vmul.f32 1.0, %v1217
    %v1219 = vxor.u32 %v1145, 2147483648
    %v1220 = vmul.f32 %v1219, 1.442695
    %v1221 = vpow.pop %v1220
    %v1222 = vadd.f32 %v1221, 1.0
    %v1223 = vrcp.pop %v1222
    %v1224 = vmul.f32 %v1222, %v1223
    %v1225 = vsub.f32 1.0, %v1224
    %v1226 = vmul.f32 %v1223, %v1225
    %v1227 = vadd.f32 %v1223, %v1226
    %vm1228 = vweird.f32 %v1222
    %vm1229 = vweird.f32 %v1223
    %vm1230 = vmor %vm1228, %vm1229
    %v1231 = vsel %vm1230, %v1223, %v1227
    %v1232 = vand.u32 2147483647, %v1222
    %vm1233 = vcmp.eq.f32.partialorder %v1232, 8.507059e+37
    %v1234 = vand.u32 %v1222, 2147483648
    %v1235 = vor.u32 1.1754944e-38, %v1234
    %v1236 = vsel %vm1233, %v1235, %v1231
    %v1237 = vmul.f32 1.0, %v1236
    %v1238 = vtanh.pop %v1171
    %v1239 = vxor.u32 %v1197, 2147483648
    %v1240 = vmul.f32 %v1239, 1.442695
    %v1241 = vpow.pop %v1240
    %v1242 = vadd.f32 %v1241, 1.0
    %v1243 = vrcp.pop %v1242
    %v1244 = vmul.f32 %v1242, %v1243
    %v1245 = vsub.f32 1.0, %v1244
    %v1246 = vmul.f32 %v1243, %v1245
    %v1247 = vadd.f32 %v1243, %v1246
    %vm1248 = vweird.f32 %v1242
    %vm1249 = vweird.f32 %v1243
    %vm1250 = vmor %vm1248, %vm1249
    %v1251 = vsel %vm1250, %v1243, %v1247
    %v1252 = vand.u32 2147483647, %v1242
    %vm1253 = vcmp.eq.f32.partialorder %v1252, 8.507059e+37
    %v1254 = vand.u32 %v1242, 2147483648
    %v1255 = vor.u32 1.1754944e-38, %v1254
    %v1256 = vsel %vm1253, %v1255, %v1251
    %v1257 = vmul.f32 1.0, %v1256
    %v1258 = vmul.f32 %v1237, %v967
    %v1259 = vmul.f32 %v1218, %v1238
    %v1260 = vadd.f32 %v1258, %v1259
    %v1261 = vtanh.pop %v1260
    %v1262 = vmul.f32 %v1257, %v1261
    %s1263 = scalar_lea.vmem [#allocation6], 64
    %v1264 = vld [vmem:[%s1263] sm:$0xff]
    %v1265 = vld [vmem:[%s1263 + $0x8] sm:$0xff]
    %v1266 = vld [vmem:[%s1263 + $0x10] sm:$0xff]
    %v1267 = vld [vmem:[%s1263 + $0x18] sm:$0xff]
    %1268 = vmatpush.bf16.msra.mxu0 %v326
    %1269 = vmatpush.bf16.msra.mxu0 %v322
    %1270 = vmatpush.bf16.msra.mxu0 %v318
    %1271 = vmatpush.bf16.msra.mxu0 %v314
    %1272 = vmatpush.bf16.msra.mxu0 %v310
    %1273 = vmatpush.bf16.msra.mxu0 %v306
    %1274 = vmatpush.bf16.msra.mxu0 %v302
    %1275 = vmatpush.bf16.msra.mxu0 %v298
    %1276 = vmatmul.bf16.gmra.mxu0 %v1094
    %v1277 = vpop.f32.mrf.mxu0
    %v1278 = vadd.f32 0.0, %v1277
    %v1279 = vpop.f32.mrf.mxu0
    %1280 = vdwg.mxu0
    %1281 = vmatpush.bf16.msra.mxu0 %v327
    %1282 = vmatpush.bf16.msra.mxu0 %v323
    %1283 = vmatpush.bf16.msra.mxu0 %v319
    %1284 = vmatpush.bf16.msra.mxu0 %v315
    %1285 = vmatpush.bf16.msra.mxu0 %v311
    %1286 = vmatpush.bf16.msra.mxu0 %v307
    %1287 = vmatpush.bf16.msra.mxu0 %v303
    %1288 = vmatpush.bf16.msra.mxu0 %v299
    %1289 = vmatmul.bf16.gmra.mxu0 %v1094
    %v1290 = vpop.f32.mrf.mxu0
    %v1291 = vadd.f32 0.0, %v1290
    %v1292 = vpop.f32.mrf.mxu0
    %1293 = vdwg.mxu0
    %1294 = vmatpush.bf16.msra.mxu0 %v328
    %1295 = vmatpush.bf16.msra.mxu0 %v324
    %1296 = vmatpush.bf16.msra.mxu0 %v320
    %1297 = vmatpush.bf16.msra.mxu0 %v316
    %1298 = vmatpush.bf16.msra.mxu0 %v312
    %1299 = vmatpush.bf16.msra.mxu0 %v308
    %1300 = vmatpush.bf16.msra.mxu0 %v304
    %1301 = vmatpush.bf16.msra.mxu0 %v300
    %1302 = vmatmul.bf16.gmra.mxu0 %v1094
    %v1303 = vpop.f32.mrf.mxu0
    %v1304 = vadd.f32 0.0, %v1303
    %v1305 = vpop.f32.mrf.mxu0
    %1306 = vdwg.mxu0
    %1307 = vmatpush.bf16.msra.mxu0 %v329
    %1308 = vmatpush.bf16.msra.mxu0 %v325
    %1309 = vmatpush.bf16.msra.mxu0 %v321
    %1310 = vmatpush.bf16.msra.mxu0 %v317
    %1311 = vmatpush.bf16.msra.mxu0 %v313
    %1312 = vmatpush.bf16.msra.mxu0 %v309
    %1313 = vmatpush.bf16.msra.mxu0 %v305
    %1314 = vmatpush.bf16.msra.mxu0 %v301
    %1315 = vmatmul.bf16.gmra.mxu0 %v1094
    %v1316 = vpop.f32.mrf.mxu0
    %v1317 = vadd.f32 0.0, %v1316
    %v1318 = vpop.f32.mrf.mxu0
    %1319 = vdwg.mxu0
    %v1320 = vadd.f32 %v1264, %v1278
    %v1321 = vadd.f32 %v1265, %v1291
    %v1322 = vadd.f32 %v1266, %v1304
    %v1323 = vadd.f32 %v1267, %v1317
    %v1324 = vxor.u32 %v1320, 2147483648
    %v1325 = vmul.f32 %v1324, 1.442695
    %v1326 = vpow.pop %v1325
    %v1327 = vadd.f32 %v1326, 1.0
    %v1328 = vrcp.pop %v1327
    %v1329 = vmul.f32 %v1327, %v1328
    %v1330 = vsub.f32 1.0, %v1329
    %v1331 = vmul.f32 %v1328, %v1330
    %v1332 = vadd.f32 %v1328, %v1331
    %vm1333 = vweird.f32 %v1327
    %vm1334 = vweird.f32 %v1328
    %vm1335 = vmor %vm1333, %vm1334
    %v1336 = vsel %vm1335, %v1328, %v1332
    %v1337 = vand.u32 2147483647, %v1327
    %vm1338 = vcmp.eq.f32.partialorder %v1337, 8.507059e+37
    %v1339 = vand.u32 %v1327, 2147483648
    %v1340 = vor.u32 1.1754944e-38, %v1339
    %v1341 = vsel %vm1338, %v1340, %v1336
    %v1342 = vmul.f32 1.0, %v1341
    %v1343 = vxor.u32 %v1321, 2147483648
    %v1344 = vmul.f32 %v1343, 1.442695
    %v1345 = vpow.pop %v1344
    %v1346 = vadd.f32 %v1345, 1.0
    %v1347 = vrcp.pop %v1346
    %v1348 = vmul.f32 %v1346, %v1347
    %v1349 = vsub.f32 1.0, %v1348
    %v1350 = vmul.f32 %v1347, %v1349
    %v1351 = vadd.f32 %v1347, %v1350
    %vm1352 = vweird.f32 %v1346
    %vm1353 = vweird.f32 %v1347
    %vm1354 = vmor %vm1352, %vm1353
    %v1355 = vsel %vm1354, %v1347, %v1351
    %v1356 = vand.u32 2147483647, %v1346
    %vm1357 = vcmp.eq.f32.partialorder %v1356, 8.507059e+37
    %v1358 = vand.u32 %v1346, 2147483648
    %v1359 = vor.u32 1.1754944e-38, %v1358
    %v1360 = vsel %vm1357, %v1359, %v1355
    %v1361 = vmul.f32 1.0, %v1360
    %v1362 = vtanh.pop %v1322
    %v1363 = vxor.u32 %v1323, 2147483648
    %v1364 = vmul.f32 %v1363, 1.442695
    %v1365 = vpow.pop %v1364
    %v1366 = vadd.f32 %v1365, 1.0
    %v1367 = vrcp.pop %v1366
    %v1368 = vmul.f32 %v1366, %v1367
    %v1369 = vsub.f32 1.0, %v1368
    %v1370 = vmul.f32 %v1367, %v1369
    %v1371 = vadd.f32 %v1367, %v1370
    %vm1372 = vweird.f32 %v1366
    %vm1373 = vweird.f32 %v1367
    %vm1374 = vmor %vm1372, %vm1373
    %v1375 = vsel %vm1374, %v1367, %v1371
    %v1376 = vand.u32 2147483647, %v1366
    %vm1377 = vcmp.eq.f32.partialorder %v1376, 8.507059e+37
    %v1378 = vand.u32 %v1366, 2147483648
    %v1379 = vor.u32 1.1754944e-38, %v1378
    %v1380 = vsel %vm1377, %v1379, %v1375
    %v1381 = vmul.f32 1.0, %v1380
    %v1382 = vmul.f32 %v1361, %v1091
    %v1383 = vmul.f32 %v1342, %v1362
    %v1384 = vadd.f32 %v1382, %v1383
    %v1385 = vtanh.pop %v1384
    %v1386 = vmul.f32 %v1381, %v1385
    %v1387 = vpack.c.bf16 %v1386, %v1386
    %v1388 = vpack.c.bf16 %v1262, %v1262
    %1389 = vmatpush.bf16.msra.mxu0 %v703
    %1390 = vmatpush.bf16.msra.mxu0 %v699
    %1391 = vmatpush.bf16.msra.mxu0 %v695
    %1392 = vmatpush.bf16.msra.mxu0 %v691
    %1393 = vmatpush.bf16.msra.mxu0 %v687
    %1394 = vmatpush.bf16.msra.mxu0 %v683
    %1395 = vmatpush.bf16.msra.mxu0 %v679
    %1396 = vmatpush.bf16.msra.mxu0 %v675
    %1397 = vmatmul.bf16.gmra.mxu0 %v1387
    %v1398 = vpop.f32.mrf.mxu0
    %v1399 = vadd.f32 %v185, %v1398
    %v1400 = vpop.f32.mrf.mxu0
    %1401 = vdwg.mxu0
    %1402 = vmatpush.bf16.msra.mxu0 %v735
    %1403 = vmatpush.bf16.msra.mxu0 %v731
    %1404 = vmatpush.bf16.msra.mxu0 %v727
    %1405 = vmatpush.bf16.msra.mxu0 %v723
    %1406 = vmatpush.bf16.msra.mxu0 %v719
    %1407 = vmatpush.bf16.msra.mxu0 %v715
    %1408 = vmatpush.bf16.msra.mxu0 %v711
    %1409 = vmatpush.bf16.msra.mxu0 %v707
    %1410 = vmatmul.bf16.gmra.mxu0 %v1388
    %v1411 = vpop.f32.mrf.mxu0
    %v1412 = vadd.f32 %v1399, %v1411
    %v1413 = vpop.f32.mrf.mxu0
    %1414 = vdwg.mxu0
    %1415 = vmatpush.bf16.msra.mxu0 %v704
    %1416 = vmatpush.bf16.msra.mxu0 %v700
    %1417 = vmatpush.bf16.msra.mxu0 %v696
    %1418 = vmatpush.bf16.msra.mxu0 %v692
    %1419 = vmatpush.bf16.msra.mxu0 %v688
    %1420 = vmatpush.bf16.msra.mxu0 %v684
    %1421 = vmatpush.bf16.msra.mxu0 %v680
    %1422 = vmatpush.bf16.msra.mxu0 %v676
    %1423 = vmatmul.bf16.gmra.mxu0 %v1387
    %v1424 = vpop.f32.mrf.mxu0
    %v1425 = vadd.f32 %v186, %v1424
    %v1426 = vpop.f32.mrf.mxu0
    %1427 = vdwg.mxu0
    %1428 = vmatpush.bf16.msra.mxu0 %v736
    %1429 = vmatpush.bf16.msra.mxu0 %v732
    %1430 = vmatpush.bf16.msra.mxu0 %v728
    %1431 = vmatpush.bf16.msra.mxu0 %v724
    %1432 = vmatpush.bf16.msra.mxu0 %v720
    %1433 = vmatpush.bf16.msra.mxu0 %v716
    %1434 = vmatpush.bf16.msra.mxu0 %v712
    %1435 = vmatpush.bf16.msra.mxu0 %v708
    %1436 = vmatmul.bf16.gmra.mxu0 %v1388
    %v1437 = vpop.f32.mrf.mxu0
    %v1438 = vadd.f32 %v1425, %v1437
    %v1439 = vpop.f32.mrf.mxu0
    %1440 = vdwg.mxu0
    %1441 = vmatpush.bf16.msra.mxu0 %v705
    %1442 = vmatpush.bf16.msra.mxu0 %v701
    %1443 = vmatpush.bf16.msra.mxu0 %v697
    %1444 = vmatpush.bf16.msra.mxu0 %v693
    %1445 = vmatpush.bf16.msra.mxu0 %v689
    %1446 = vmatpush.bf16.msra.mxu0 %v685
    %1447 = vmatpush.bf16.msra.mxu0 %v681
    %1448 = vmatpush.bf16.msra.mxu0 %v677
    %1449 = vmatmul.bf16.gmra.mxu0 %v1387
    %v1450 = vpop.f32.mrf.mxu0
    %v1451 = vadd.f32 %v187, %v1450
    %v1452 = vpop.f32.mrf.mxu0
    %1453 = vdwg.mxu0
    %1454 = vmatpush.bf16.msra.mxu0 %v737
    %1455 = vmatpush.bf16.msra.mxu0 %v733
    %1456 = vmatpush.bf16.msra.mxu0 %v729
    %1457 = vmatpush.bf16.msra.mxu0 %v725
    %1458 = vmatpush.bf16.msra.mxu0 %v721
    %1459 = vmatpush.bf16.msra.mxu0 %v717
    %1460 = vmatpush.bf16.msra.mxu0 %v713
    %1461 = vmatpush.bf16.msra.mxu0 %v709
    %1462 = vmatmul.bf16.gmra.mxu0 %v1388
    %v1463 = vpop.f32.mrf.mxu0
    %v1464 = vadd.f32 %v1451, %v1463
    %v1465 = vpop.f32.mrf.mxu0
    %1466 = vdwg.mxu0
    %1467 = vmatpush.bf16.msra.mxu0 %v706
    %1468 = vmatpush.bf16.msra.mxu0 %v702
    %1469 = vmatpush.bf16.msra.mxu0 %v698
    %1470 = vmatpush.bf16.msra.mxu0 %v694
    %1471 = vmatpush.bf16.msra.mxu0 %v690
    %1472 = vmatpush.bf16.msra.mxu0 %v686
    %1473 = vmatpush.bf16.msra.mxu0 %v682
    %1474 = vmatpush.bf16.msra.mxu0 %v678
    %1475 = vmatmul.bf16.gmra.mxu0 %v1387
    %v1476 = vpop.f32.mrf.mxu0
    %v1477 = vadd.f32 %v188, %v1476
    %v1478 = vpop.f32.mrf.mxu0
    %1479 = vdwg.mxu0
    %1480 = vmatpush.bf16.msra.mxu0 %v738
    %1481 = vmatpush.bf16.msra.mxu0 %v734
    %1482 = vmatpush.bf16.msra.mxu0 %v730
    %1483 = vmatpush.bf16.msra.mxu0 %v726
    %1484 = vmatpush.bf16.msra.mxu0 %v722
    %1485 = vmatpush.bf16.msra.mxu0 %v718
    %1486 = vmatpush.bf16.msra.mxu0 %v714
    %1487 = vmatpush.bf16.msra.mxu0 %v710
    %1488 = vmatmul.bf16.gmra.mxu0 %v1388
    %v1489 = vpop.f32.mrf.mxu0
    %v1490 = vadd.f32 %v1477, %v1489
    %v1491 = vpop.f32.mrf.mxu0
    %1492 = vdwg.mxu0
    %v1493 = vxor.u32 %v1412, 2147483648
    %v1494 = vmul.f32 %v1493, 1.442695
    %v1495 = vpow.pop %v1494
    %v1496 = vadd.f32 %v1495, 1.0
    %v1497 = vrcp.pop %v1496
    %v1498 = vmul.f32 %v1496, %v1497
    %v1499 = vsub.f32 1.0, %v1498
    %v1500 = vmul.f32 %v1497, %v1499
    %v1501 = vadd.f32 %v1497, %v1500
    %vm1502 = vweird.f32 %v1496
    %vm1503 = vweird.f32 %v1497
    %vm1504 = vmor %vm1502, %vm1503
    %v1505 = vsel %vm1504, %v1497, %v1501
    %v1506 = vand.u32 2147483647, %v1496
    %vm1507 = vcmp.eq.f32.partialorder %v1506, 8.507059e+37
    %v1508 = vand.u32 %v1496, 2147483648
    %v1509 = vor.u32 1.1754944e-38, %v1508
    %v1510 = vsel %vm1507, %v1509, %v1505
    %v1511 = vmul.f32 1.0, %v1510
    %v1512 = vxor.u32 %v1438, 2147483648
    %v1513 = vmul.f32 %v1512, 1.442695
    %v1514 = vpow.pop %v1513
    %v1515 = vadd.f32 %v1514, 1.0
    %v1516 = vrcp.pop %v1515
    %v1517 = vmul.f32 %v1515, %v1516
    %v1518 = vsub.f32 1.0, %v1517
    %v1519 = vmul.f32 %v1516, %v1518
    %v1520 = vadd.f32 %v1516, %v1519
    %vm1521 = vweird.f32 %v1515
    %vm1522 = vweird.f32 %v1516
    %vm1523 = vmor %vm1521, %vm1522
    %v1524 = vsel %vm1523, %v1516, %v1520
    %v1525 = vand.u32 2147483647, %v1515
    %vm1526 = vcmp.eq.f32.partialorder %v1525, 8.507059e+37
    %v1527 = vand.u32 %v1515, 2147483648
    %v1528 = vor.u32 1.1754944e-38, %v1527
    %v1529 = vsel %vm1526, %v1528, %v1524
    %v1530 = vmul.f32 1.0, %v1529
    %v1531 = vtanh.pop %v1464
    %v1532 = vxor.u32 %v1490, 2147483648
    %v1533 = vmul.f32 %v1532, 1.442695
    %v1534 = vpow.pop %v1533
    %v1535 = vadd.f32 %v1534, 1.0
    %v1536 = vrcp.pop %v1535
    %v1537 = vmul.f32 %v1535, %v1536
    %v1538 = vsub.f32 1.0, %v1537
    %v1539 = vmul.f32 %v1536, %v1538
    %v1540 = vadd.f32 %v1536, %v1539
    %vm1541 = vweird.f32 %v1535
    %vm1542 = vweird.f32 %v1536
    %vm1543 = vmor %vm1541, %vm1542
    %v1544 = vsel %vm1543, %v1536, %v1540
    %v1545 = vand.u32 2147483647, %v1535
    %vm1546 = vcmp.eq.f32.partialorder %v1545, 8.507059e+37
    %v1547 = vand.u32 %v1535, 2147483648
    %v1548 = vor.u32 1.1754944e-38, %v1547
    %v1549 = vsel %vm1546, %v1548, %v1544
    %v1550 = vmul.f32 1.0, %v1549
    %v1551 = vmul.f32 %v1530, %v1260
    %v1552 = vmul.f32 %v1511, %v1531
    %v1553 = vadd.f32 %v1551, %v1552
    %v1554 = vtanh.pop %v1553
    %v1555 = vmul.f32 %v1550, %v1554
    %s1556 = scalar_lea.vmem [#allocation6], 96
    %v1557 = vld [vmem:[%s1556] sm:$0xff]
    %v1558 = vld [vmem:[%s1556 + $0x8] sm:$0xff]
    %v1559 = vld [vmem:[%s1556 + $0x10] sm:$0xff]
    %v1560 = vld [vmem:[%s1556 + $0x18] sm:$0xff]
    %1561 = vmatpush.bf16.msra.mxu0 %v326
    %1562 = vmatpush.bf16.msra.mxu0 %v322
    %1563 = vmatpush.bf16.msra.mxu0 %v318
    %1564 = vmatpush.bf16.msra.mxu0 %v314
    %1565 = vmatpush.bf16.msra.mxu0 %v310
    %1566 = vmatpush.bf16.msra.mxu0 %v306
    %1567 = vmatpush.bf16.msra.mxu0 %v302
    %1568 = vmatpush.bf16.msra.mxu0 %v298
    %1569 = vmatmul.bf16.gmra.mxu0 %v1387
    %v1570 = vpop.f32.mrf.mxu0
    %v1571 = vadd.f32 0.0, %v1570
    %v1572 = vpop.f32.mrf.mxu0
    %1573 = vdwg.mxu0
    %1574 = vmatpush.bf16.msra.mxu0 %v327
    %1575 = vmatpush.bf16.msra.mxu0 %v323
    %1576 = vmatpush.bf16.msra.mxu0 %v319
    %1577 = vmatpush.bf16.msra.mxu0 %v315
    %1578 = vmatpush.bf16.msra.mxu0 %v311
    %1579 = vmatpush.bf16.msra.mxu0 %v307
    %1580 = vmatpush.bf16.msra.mxu0 %v303
    %1581 = vmatpush.bf16.msra.mxu0 %v299
    %1582 = vmatmul.bf16.gmra.mxu0 %v1387
    %v1583 = vpop.f32.mrf.mxu0
    %v1584 = vadd.f32 0.0, %v1583
    %v1585 = vpop.f32.mrf.mxu0
    %1586 = vdwg.mxu0
    %1587 = vmatpush.bf16.msra.mxu0 %v328
    %1588 = vmatpush.bf16.msra.mxu0 %v324
    %1589 = vmatpush.bf16.msra.mxu0 %v320
    %1590 = vmatpush.bf16.msra.mxu0 %v316
    %1591 = vmatpush.bf16.msra.mxu0 %v312
    %1592 = vmatpush.bf16.msra.mxu0 %v308
    %1593 = vmatpush.bf16.msra.mxu0 %v304
    %1594 = vmatpush.bf16.msra.mxu0 %v300
    %1595 = vmatmul.bf16.gmra.mxu0 %v1387
    %v1596 = vpop.f32.mrf.mxu0
    %v1597 = vadd.f32 0.0, %v1596
    %v1598 = vpop.f32.mrf.mxu0
    %1599 = vdwg.mxu0
    %1600 = vmatpush.bf16.msra.mxu0 %v329
    %1601 = vmatpush.bf16.msra.mxu0 %v325
    %1602 = vmatpush.bf16.msra.mxu0 %v321
    %1603 = vmatpush.bf16.msra.mxu0 %v317
    %1604 = vmatpush.bf16.msra.mxu0 %v313
    %1605 = vmatpush.bf16.msra.mxu0 %v309
    %1606 = vmatpush.bf16.msra.mxu0 %v305
    %1607 = vmatpush.bf16.msra.mxu0 %v301
    %1608 = vmatmul.bf16.gmra.mxu0 %v1387
    %v1609 = vpop.f32.mrf.mxu0
    %v1610 = vadd.f32 0.0, %v1609
    %v1611 = vpop.f32.mrf.mxu0
    %1612 = vdwg.mxu0
    %v1613 = vadd.f32 %v1557, %v1571
    %v1614 = vadd.f32 %v1558, %v1584
    %v1615 = vadd.f32 %v1559, %v1597
    %v1616 = vadd.f32 %v1560, %v1610
    %v1617 = vxor.u32 %v1613, 2147483648
    %v1618 = vmul.f32 %v1617, 1.442695
    %v1619 = vpow.pop %v1618
    %v1620 = vadd.f32 %v1619, 1.0
    %v1621 = vrcp.pop %v1620
    %v1622 = vmul.f32 %v1620, %v1621
    %v1623 = vsub.f32 1.0, %v1622
    %v1624 = vmul.f32 %v1621, %v1623
    %v1625 = vadd.f32 %v1621, %v1624
    %vm1626 = vweird.f32 %v1620
    %vm1627 = vweird.f32 %v1621
    %vm1628 = vmor %vm1626, %vm1627
    %v1629 = vsel %vm1628, %v1621, %v1625
    %v1630 = vand.u32 2147483647, %v1620
    %vm1631 = vcmp.eq.f32.partialorder %v1630, 8.507059e+37
    %v1632 = vand.u32 %v1620, 2147483648
    %v1633 = vor.u32 1.1754944e-38, %v1632
    %v1634 = vsel %vm1631, %v1633, %v1629
    %v1635 = vmul.f32 1.0, %v1634
    %v1636 = vxor.u32 %v1614, 2147483648
    %v1637 = vmul.f32 %v1636, 1.442695
    %v1638 = vpow.pop %v1637
    %v1639 = vadd.f32 %v1638, 1.0
    %v1640 = vrcp.pop %v1639
    %v1641 = vmul.f32 %v1639, %v1640
    %v1642 = vsub.f32 1.0, %v1641
    %v1643 = vmul.f32 %v1640, %v1642
    %v1644 = vadd.f32 %v1640, %v1643
    %vm1645 = vweird.f32 %v1639
    %vm1646 = vweird.f32 %v1640
    %vm1647 = vmor %vm1645, %vm1646
    %v1648 = vsel %vm1647, %v1640, %v1644
    %v1649 = vand.u32 2147483647, %v1639
    %vm1650 = vcmp.eq.f32.partialorder %v1649, 8.507059e+37
    %v1651 = vand.u32 %v1639, 2147483648
    %v1652 = vor.u32 1.1754944e-38, %v1651
    %v1653 = vsel %vm1650, %v1652, %v1648
    %v1654 = vmul.f32 1.0, %v1653
    %v1655 = vtanh.pop %v1615
    %v1656 = vxor.u32 %v1616, 2147483648
    %v1657 = vmul.f32 %v1656, 1.442695
    %v1658 = vpow.pop %v1657
    %v1659 = vadd.f32 %v1658, 1.0
    %v1660 = vrcp.pop %v1659
    %v1661 = vmul.f32 %v1659, %v1660
    %v1662 = vsub.f32 1.0, %v1661
    %v1663 = vmul.f32 %v1660, %v1662
    %v1664 = vadd.f32 %v1660, %v1663
    %vm1665 = vweird.f32 %v1659
    %vm1666 = vweird.f32 %v1660
    %vm1667 = vmor %vm1665, %vm1666
    %v1668 = vsel %vm1667, %v1660, %v1664
    %v1669 = vand.u32 2147483647, %v1659
    %vm1670 = vcmp.eq.f32.partialorder %v1669, 8.507059e+37
    %v1671 = vand.u32 %v1659, 2147483648
    %v1672 = vor.u32 1.1754944e-38, %v1671
    %v1673 = vsel %vm1670, %v1672, %v1668
    %v1674 = vmul.f32 1.0, %v1673
    %v1675 = vmul.f32 %v1654, %v1384
    %v1676 = vmul.f32 %v1635, %v1655
    %v1677 = vadd.f32 %v1675, %v1676
    %v1678 = vtanh.pop %v1677
    %v1679 = vmul.f32 %v1674, %v1678
    %v1680 = vpack.c.bf16 %v1679, %v1679
    %v1681 = vpack.c.bf16 %v1555, %v1555
    %1682 = vmatpush.bf16.msra.mxu0 %v703
    %1683 = vmatpush.bf16.msra.mxu0 %v699
    %1684 = vmatpush.bf16.msra.mxu0 %v695
    %1685 = vmatpush.bf16.msra.mxu0 %v691
    %1686 = vmatpush.bf16.msra.mxu0 %v687
    %1687 = vmatpush.bf16.msra.mxu0 %v683
    %1688 = vmatpush.bf16.msra.mxu0 %v679
    %1689 = vmatpush.bf16.msra.mxu0 %v675
    %1690 = vmatmul.bf16.gmra.mxu0 %v1680
    %v1691 = vpop.f32.mrf.mxu0
    %v1692 = vadd.f32 %v185, %v1691
    %v1693 = vpop.f32.mrf.mxu0
    %1694 = vdwg.mxu0
    %1695 = vmatpush.bf16.msra.mxu0 %v735
    %1696 = vmatpush.bf16.msra.mxu0 %v731
    %1697 = vmatpush.bf16.msra.mxu0 %v727
    %1698 = vmatpush.bf16.msra.mxu0 %v723
    %1699 = vmatpush.bf16.msra.mxu0 %v719
    %1700 = vmatpush.bf16.msra.mxu0 %v715
    %1701 = vmatpush.bf16.msra.mxu0 %v711
    %1702 = vmatpush.bf16.msra.mxu0 %v707
    %1703 = vmatmul.bf16.gmra.mxu0 %v1681
    %v1704 = vpop.f32.mrf.mxu0
    %v1705 = vadd.f32 %v1692, %v1704
    %v1706 = vpop.f32.mrf.mxu0
    %1707 = vdwg.mxu0
    %1708 = vmatpush.bf16.msra.mxu0 %v704
    %1709 = vmatpush.bf16.msra.mxu0 %v700
    %1710 = vmatpush.bf16.msra.mxu0 %v696
    %1711 = vmatpush.bf16.msra.mxu0 %v692
    %1712 = vmatpush.bf16.msra.mxu0 %v688
    %1713 = vmatpush.bf16.msra.mxu0 %v684
    %1714 = vmatpush.bf16.msra.mxu0 %v680
    %1715 = vmatpush.bf16.msra.mxu0 %v676
    %1716 = vmatmul.bf16.gmra.mxu0 %v1680
    %v1717 = vpop.f32.mrf.mxu0
    %v1718 = vadd.f32 %v186, %v1717
    %v1719 = vpop.f32.mrf.mxu0
    %1720 = vdwg.mxu0
    %1721 = vmatpush.bf16.msra.mxu0 %v736
    %1722 = vmatpush.bf16.msra.mxu0 %v732
    %1723 = vmatpush.bf16.msra.mxu0 %v728
    %1724 = vmatpush.bf16.msra.mxu0 %v724
    %1725 = vmatpush.bf16.msra.mxu0 %v720
    %1726 = vmatpush.bf16.msra.mxu0 %v716
    %1727 = vmatpush.bf16.msra.mxu0 %v712
    %1728 = vmatpush.bf16.msra.mxu0 %v708
    %1729 = vmatmul.bf16.gmra.mxu0 %v1681
    %v1730 = vpop.f32.mrf.mxu0
    %v1731 = vadd.f32 %v1718, %v1730
    %v1732 = vpop.f32.mrf.mxu0
    %1733 = vdwg.mxu0
    %1734 = vmatpush.bf16.msra.mxu0 %v705
    %1735 = vmatpush.bf16.msra.mxu0 %v701
    %1736 = vmatpush.bf16.msra.mxu0 %v697
    %1737 = vmatpush.bf16.msra.mxu0 %v693
    %1738 = vmatpush.bf16.msra.mxu0 %v689
    %1739 = vmatpush.bf16.msra.mxu0 %v685
    %1740 = vmatpush.bf16.msra.mxu0 %v681
    %1741 = vmatpush.bf16.msra.mxu0 %v677
    %1742 = vmatmul.bf16.gmra.mxu0 %v1680
    %v1743 = vpop.f32.mrf.mxu0
    %v1744 = vadd.f32 %v187, %v1743
    %v1745 = vpop.f32.mrf.mxu0
    %1746 = vdwg.mxu0
    %1747 = vmatpush.bf16.msra.mxu0 %v737
    %1748 = vmatpush.bf16.msra.mxu0 %v733
    %1749 = vmatpush.bf16.msra.mxu0 %v729
    %1750 = vmatpush.bf16.msra.mxu0 %v725
    %1751 = vmatpush.bf16.msra.mxu0 %v721
    %1752 = vmatpush.bf16.msra.mxu0 %v717
    %1753 = vmatpush.bf16.msra.mxu0 %v713
    %1754 = vmatpush.bf16.msra.mxu0 %v709
    %1755 = vmatmul.bf16.gmra.mxu0 %v1681
    %v1756 = vpop.f32.mrf.mxu0
    %v1757 = vadd.f32 %v1744, %v1756
    %v1758 = vpop.f32.mrf.mxu0
    %1759 = vdwg.mxu0
    %1760 = vmatpush.bf16.msra.mxu0 %v706
    %1761 = vmatpush.bf16.msra.mxu0 %v702
    %1762 = vmatpush.bf16.msra.mxu0 %v698
    %1763 = vmatpush.bf16.msra.mxu0 %v694
    %1764 = vmatpush.bf16.msra.mxu0 %v690
    %1765 = vmatpush.bf16.msra.mxu0 %v686
    %1766 = vmatpush.bf16.msra.mxu0 %v682
    %1767 = vmatpush.bf16.msra.mxu0 %v678
    %1768 = vmatmul.bf16.gmra.mxu0 %v1680
    %v1769 = vpop.f32.mrf.mxu0
    %v1770 = vadd.f32 %v188, %v1769
    %v1771 = vpop.f32.mrf.mxu0
    %1772 = vdwg.mxu0
    %1773 = vmatpush.bf16.msra.mxu0 %v738
    %1774 = vmatpush.bf16.msra.mxu0 %v734
    %1775 = vmatpush.bf16.msra.mxu0 %v730
    %1776 = vmatpush.bf16.msra.mxu0 %v726
    %1777 = vmatpush.bf16.msra.mxu0 %v722
    %1778 = vmatpush.bf16.msra.mxu0 %v718
    %1779 = vmatpush.bf16.msra.mxu0 %v714
    %1780 = vmatpush.bf16.msra.mxu0 %v710
    %1781 = vmatmul.bf16.gmra.mxu0 %v1681
    %v1782 = vpop.f32.mrf.mxu0
    %v1783 = vadd.f32 %v1770, %v1782
    %v1784 = vpop.f32.mrf.mxu0
    %1785 = vdwg.mxu0
    %v1786 = vxor.u32 %v1705, 2147483648
    %v1787 = vmul.f32 %v1786, 1.442695
    %v1788 = vpow.pop %v1787
    %v1789 = vadd.f32 %v1788, 1.0
    %v1790 = vrcp.pop %v1789
    %v1791 = vmul.f32 %v1789, %v1790
    %v1792 = vsub.f32 1.0, %v1791
    %v1793 = vmul.f32 %v1790, %v1792
    %v1794 = vadd.f32 %v1790, %v1793
    %vm1795 = vweird.f32 %v1789
    %vm1796 = vweird.f32 %v1790
    %vm1797 = vmor %vm1795, %vm1796
    %v1798 = vsel %vm1797, %v1790, %v1794
    %v1799 = vand.u32 2147483647, %v1789
    %vm1800 = vcmp.eq.f32.partialorder %v1799, 8.507059e+37
    %v1801 = vand.u32 %v1789, 2147483648
    %v1802 = vor.u32 1.1754944e-38, %v1801
    %v1803 = vsel %vm1800, %v1802, %v1798
    %v1804 = vmul.f32 1.0, %v1803
    %v1805 = vxor.u32 %v1731, 2147483648
    %v1806 = vmul.f32 %v1805, 1.442695
    %v1807 = vpow.pop %v1806
    %v1808 = vadd.f32 %v1807, 1.0
    %v1809 = vrcp.pop %v1808
    %v1810 = vmul.f32 %v1808, %v1809
    %v1811 = vsub.f32 1.0, %v1810
    %v1812 = vmul.f32 %v1809, %v1811
    %v1813 = vadd.f32 %v1809, %v1812
    %vm1814 = vweird.f32 %v1808
    %vm1815 = vweird.f32 %v1809
    %vm1816 = vmor %vm1814, %vm1815
    %v1817 = vsel %vm1816, %v1809, %v1813
    %v1818 = vand.u32 2147483647, %v1808
    %vm1819 = vcmp.eq.f32.partialorder %v1818, 8.507059e+37
    %v1820 = vand.u32 %v1808, 2147483648
    %v1821 = vor.u32 1.1754944e-38, %v1820
    %v1822 = vsel %vm1819, %v1821, %v1817
    %v1823 = vmul.f32 1.0, %v1822
    %v1824 = vtanh.pop %v1757
    %v1825 = vxor.u32 %v1783, 2147483648
    %v1826 = vmul.f32 %v1825, 1.442695
    %v1827 = vpow.pop %v1826
    %v1828 = vadd.f32 %v1827, 1.0
    %v1829 = vrcp.pop %v1828
    %v1830 = vmul.f32 %v1828, %v1829
    %v1831 = vsub.f32 1.0, %v1830
    %v1832 = vmul.f32 %v1829, %v1831
    %v1833 = vadd.f32 %v1829, %v1832
    %vm1834 = vweird.f32 %v1828
    %vm1835 = vweird.f32 %v1829
    %vm1836 = vmor %vm1834, %vm1835
    %v1837 = vsel %vm1836, %v1829, %v1833
    %v1838 = vand.u32 2147483647, %v1828
    %vm1839 = vcmp.eq.f32.partialorder %v1838, 8.507059e+37
    %v1840 = vand.u32 %v1828, 2147483648
    %v1841 = vor.u32 1.1754944e-38, %v1840
    %v1842 = vsel %vm1839, %v1841, %v1837
    %v1843 = vmul.f32 1.0, %v1842
    %v1844 = vmul.f32 %v1823, %v1553
    %v1845 = vmul.f32 %v1804, %v1824
    %v1846 = vadd.f32 %v1844, %v1845
    %v1847 = vtanh.pop %v1846
    %v1848 = vmul.f32 %v1843, %v1847
    %s1849 = scalar_lea.vmem [#allocation6], 128
    %v1850 = vld [vmem:[%s1849] sm:$0xff]
    %v1851 = vld [vmem:[%s1849 + $0x8] sm:$0xff]
    %v1852 = vld [vmem:[%s1849 + $0x10] sm:$0xff]
    %v1853 = vld [vmem:[%s1849 + $0x18] sm:$0xff]
    %1854 = vmatpush.bf16.msra.mxu0 %v326
    %1855 = vmatpush.bf16.msra.mxu0 %v322
    %1856 = vmatpush.bf16.msra.mxu0 %v318
    %1857 = vmatpush.bf16.msra.mxu0 %v314
    %1858 = vmatpush.bf16.msra.mxu0 %v310
    %1859 = vmatpush.bf16.msra.mxu0 %v306
    %1860 = vmatpush.bf16.msra.mxu0 %v302
    %1861 = vmatpush.bf16.msra.mxu0 %v298
    %1862 = vmatmul.bf16.gmra.mxu0 %v1680
    %v1863 = vpop.f32.mrf.mxu0
    %v1864 = vadd.f32 0.0, %v1863
    %v1865 = vpop.f32.mrf.mxu0
    %1866 = vdwg.mxu0
    %1867 = vmatpush.bf16.msra.mxu0 %v327
    %1868 = vmatpush.bf16.msra.mxu0 %v323
    %1869 = vmatpush.bf16.msra.mxu0 %v319
    %1870 = vmatpush.bf16.msra.mxu0 %v315
    %1871 = vmatpush.bf16.msra.mxu0 %v311
    %1872 = vmatpush.bf16.msra.mxu0 %v307
    %1873 = vmatpush.bf16.msra.mxu0 %v303
    %1874 = vmatpush.bf16.msra.mxu0 %v299
    %1875 = vmatmul.bf16.gmra.mxu0 %v1680
    %v1876 = vpop.f32.mrf.mxu0
    %v1877 = vadd.f32 0.0, %v1876
    %v1878 = vpop.f32.mrf.mxu0
    %1879 = vdwg.mxu0
    %1880 = vmatpush.bf16.msra.mxu0 %v328
    %1881 = vmatpush.bf16.msra.mxu0 %v324
    %1882 = vmatpush.bf16.msra.mxu0 %v320
    %1883 = vmatpush.bf16.msra.mxu0 %v316
    %1884 = vmatpush.bf16.msra.mxu0 %v312
    %1885 = vmatpush.bf16.msra.mxu0 %v308
    %1886 = vmatpush.bf16.msra.mxu0 %v304
    %1887 = vmatpush.bf16.msra.mxu0 %v300
    %1888 = vmatmul.bf16.gmra.mxu0 %v1680
    %v1889 = vpop.f32.mrf.mxu0
    %v1890 = vadd.f32 0.0, %v1889
    %v1891 = vpop.f32.mrf.mxu0
    %1892 = vdwg.mxu0
    %1893 = vmatpush.bf16.msra.mxu0 %v329
    %1894 = vmatpush.bf16.msra.mxu0 %v325
    %1895 = vmatpush.bf16.msra.mxu0 %v321
    %1896 = vmatpush.bf16.msra.mxu0 %v317
    %1897 = vmatpush.bf16.msra.mxu0 %v313
    %1898 = vmatpush.bf16.msra.mxu0 %v309
    %1899 = vmatpush.bf16.msra.mxu0 %v305
    %1900 = vmatpush.bf16.msra.mxu0 %v301
    %1901 = vmatmul.bf16.gmra.mxu0 %v1680
    %v1902 = vpop.f32.mrf.mxu0
    %v1903 = vadd.f32 0.0, %v1902
    %v1904 = vpop.f32.mrf.mxu0
    %1905 = vdwg.mxu0
    %v1906 = vadd.f32 %v1850, %v1864
    %v1907 = vadd.f32 %v1851, %v1877
    %v1908 = vadd.f32 %v1852, %v1890
    %v1909 = vadd.f32 %v1853, %v1903
    %v1910 = vxor.u32 %v1906, 2147483648
    %v1911 = vmul.f32 %v1910, 1.442695
    %v1912 = vpow.pop %v1911
    %v1913 = vadd.f32 %v1912, 1.0
    %v1914 = vrcp.pop %v1913
    %v1915 = vmul.f32 %v1913, %v1914
    %v1916 = vsub.f32 1.0, %v1915
    %v1917 = vmul.f32 %v1914, %v1916
    %v1918 = vadd.f32 %v1914, %v1917
    %vm1919 = vweird.f32 %v1913
    %vm1920 = vweird.f32 %v1914
    %vm1921 = vmor %vm1919, %vm1920
    %v1922 = vsel %vm1921, %v1914, %v1918
    %v1923 = vand.u32 2147483647, %v1913
    %vm1924 = vcmp.eq.f32.partialorder %v1923, 8.507059e+37
    %v1925 = vand.u32 %v1913, 2147483648
    %v1926 = vor.u32 1.1754944e-38, %v1925
    %v1927 = vsel %vm1924, %v1926, %v1922
    %v1928 = vmul.f32 1.0, %v1927
    %v1929 = vxor.u32 %v1907, 2147483648
    %v1930 = vmul.f32 %v1929, 1.442695
    %v1931 = vpow.pop %v1930
    %v1932 = vadd.f32 %v1931, 1.0
    %v1933 = vrcp.pop %v1932
    %v1934 = vmul.f32 %v1932, %v1933
    %v1935 = vsub.f32 1.0, %v1934
    %v1936 = vmul.f32 %v1933, %v1935
    %v1937 = vadd.f32 %v1933, %v1936
    %vm1938 = vweird.f32 %v1932
    %vm1939 = vweird.f32 %v1933
    %vm1940 = vmor %vm1938, %vm1939
    %v1941 = vsel %vm1940, %v1933, %v1937
    %v1942 = vand.u32 2147483647, %v1932
    %vm1943 = vcmp.eq.f32.partialorder %v1942, 8.507059e+37
    %v1944 = vand.u32 %v1932, 2147483648
    %v1945 = vor.u32 1.1754944e-38, %v1944
    %v1946 = vsel %vm1943, %v1945, %v1941
    %v1947 = vmul.f32 1.0, %v1946
    %v1948 = vtanh.pop %v1908
    %v1949 = vxor.u32 %v1909, 2147483648
    %v1950 = vmul.f32 %v1949, 1.442695
    %v1951 = vpow.pop %v1950
    %v1952 = vadd.f32 %v1951, 1.0
    %v1953 = vrcp.pop %v1952
    %v1954 = vmul.f32 %v1952, %v1953
    %v1955 = vsub.f32 1.0, %v1954
    %v1956 = vmul.f32 %v1953, %v1955
    %v1957 = vadd.f32 %v1953, %v1956
    %vm1958 = vweird.f32 %v1952
    %vm1959 = vweird.f32 %v1953
    %vm1960 = vmor %vm1958, %vm1959
    %v1961 = vsel %vm1960, %v1953, %v1957
    %v1962 = vand.u32 2147483647, %v1952
    %vm1963 = vcmp.eq.f32.partialorder %v1962, 8.507059e+37
    %v1964 = vand.u32 %v1952, 2147483648
    %v1965 = vor.u32 1.1754944e-38, %v1964
    %v1966 = vsel %vm1963, %v1965, %v1961
    %v1967 = vmul.f32 1.0, %v1966
    %v1968 = vmul.f32 %v1947, %v1677
    %v1969 = vmul.f32 %v1928, %v1948
    %v1970 = vadd.f32 %v1968, %v1969
    %v1971 = vtanh.pop %v1970
    %v1972 = vmul.f32 %v1967, %v1971
    %v1973 = vpack.c.bf16 %v1972, %v1972
    %v1974 = vpack.c.bf16 %v1848, %v1848
    %1975 = vmatpush.bf16.msra.mxu0 %v703
    %1976 = vmatpush.bf16.msra.mxu0 %v699
    %1977 = vmatpush.bf16.msra.mxu0 %v695
    %1978 = vmatpush.bf16.msra.mxu0 %v691
    %1979 = vmatpush.bf16.msra.mxu0 %v687
    %1980 = vmatpush.bf16.msra.mxu0 %v683
    %1981 = vmatpush.bf16.msra.mxu0 %v679
    %1982 = vmatpush.bf16.msra.mxu0 %v675
    %1983 = vmatmul.bf16.gmra.mxu0 %v1973
    %v1984 = vpop.f32.mrf.mxu0
    %v1985 = vadd.f32 %v185, %v1984
    %v1986 = vpop.f32.mrf.mxu0
    %1987 = vdwg.mxu0
    %1988 = vmatpush.bf16.msra.mxu0 %v735
    %1989 = vmatpush.bf16.msra.mxu0 %v731
    %1990 = vmatpush.bf16.msra.mxu0 %v727
    %1991 = vmatpush.bf16.msra.mxu0 %v723
    %1992 = vmatpush.bf16.msra.mxu0 %v719
    %1993 = vmatpush.bf16.msra.mxu0 %v715
    %1994 = vmatpush.bf16.msra.mxu0 %v711
    %1995 = vmatpush.bf16.msra.mxu0 %v707
    %1996 = vmatmul.bf16.gmra.mxu0 %v1974
    %v1997 = vpop.f32.mrf.mxu0
    %v1998 = vadd.f32 %v1985, %v1997
    %v1999 = vpop.f32.mrf.mxu0
    %2000 = vdwg.mxu0
    %2001 = vmatpush.bf16.msra.mxu0 %v704
    %2002 = vmatpush.bf16.msra.mxu0 %v700
    %2003 = vmatpush.bf16.msra.mxu0 %v696
    %2004 = vmatpush.bf16.msra.mxu0 %v692
    %2005 = vmatpush.bf16.msra.mxu0 %v688
    %2006 = vmatpush.bf16.msra.mxu0 %v684
    %2007 = vmatpush.bf16.msra.mxu0 %v680
    %2008 = vmatpush.bf16.msra.mxu0 %v676
    %2009 = vmatmul.bf16.gmra.mxu0 %v1973
    %v2010 = vpop.f32.mrf.mxu0
    %v2011 = vadd.f32 %v186, %v2010
    %v2012 = vpop.f32.mrf.mxu0
    %2013 = vdwg.mxu0
    %2014 = vmatpush.bf16.msra.mxu0 %v736
    %2015 = vmatpush.bf16.msra.mxu0 %v732
    %2016 = vmatpush.bf16.msra.mxu0 %v728
    %2017 = vmatpush.bf16.msra.mxu0 %v724
    %2018 = vmatpush.bf16.msra.mxu0 %v720
    %2019 = vmatpush.bf16.msra.mxu0 %v716
    %2020 = vmatpush.bf16.msra.mxu0 %v712
    %2021 = vmatpush.bf16.msra.mxu0 %v708
    %2022 = vmatmul.bf16.gmra.mxu0 %v1974
    %v2023 = vpop.f32.mrf.mxu0
    %v2024 = vadd.f32 %v2011, %v2023
    %v2025 = vpop.f32.mrf.mxu0
    %2026 = vdwg.mxu0
    %2027 = vmatpush.bf16.msra.mxu0 %v705
    %2028 = vmatpush.bf16.msra.mxu0 %v701
    %2029 = vmatpush.bf16.msra.mxu0 %v697
    %2030 = vmatpush.bf16.msra.mxu0 %v693
    %2031 = vmatpush.bf16.msra.mxu0 %v689
    %2032 = vmatpush.bf16.msra.mxu0 %v685
    %2033 = vmatpush.bf16.msra.mxu0 %v681
    %2034 = vmatpush.bf16.msra.mxu0 %v677
    %2035 = vmatmul.bf16.gmra.mxu0 %v1973
    %v2036 = vpop.f32.mrf.mxu0
    %v2037 = vadd.f32 %v187, %v2036
    %v2038 = vpop.f32.mrf.mxu0
    %2039 = vdwg.mxu0
    %2040 = vmatpush.bf16.msra.mxu0 %v737
    %2041 = vmatpush.bf16.msra.mxu0 %v733
    %2042 = vmatpush.bf16.msra.mxu0 %v729
    %2043 = vmatpush.bf16.msra.mxu0 %v725
    %2044 = vmatpush.bf16.msra.mxu0 %v721
    %2045 = vmatpush.bf16.msra.mxu0 %v717
    %2046 = vmatpush.bf16.msra.mxu0 %v713
    %2047 = vmatpush.bf16.msra.mxu0 %v709
    %2048 = vmatmul.bf16.gmra.mxu0 %v1974
    %v2049 = vpop.f32.mrf.mxu0
    %v2050 = vadd.f32 %v2037, %v2049
    %v2051 = vpop.f32.mrf.mxu0
    %2052 = vdwg.mxu0
    %2053 = vmatpush.bf16.msra.mxu0 %v706
    %2054 = vmatpush.bf16.msra.mxu0 %v702
    %2055 = vmatpush.bf16.msra.mxu0 %v698
    %2056 = vmatpush.bf16.msra.mxu0 %v694
    %2057 = vmatpush.bf16.msra.mxu0 %v690
    %2058 = vmatpush.bf16.msra.mxu0 %v686
    %2059 = vmatpush.bf16.msra.mxu0 %v682
    %2060 = vmatpush.bf16.msra.mxu0 %v678
    %2061 = vmatmul.bf16.gmra.mxu0 %v1973
    %v2062 = vpop.f32.mrf.mxu0
    %v2063 = vadd.f32 %v188, %v2062
    %v2064 = vpop.f32.mrf.mxu0
    %2065 = vdwg.mxu0
    %2066 = vmatpush.bf16.msra.mxu0 %v738
    %2067 = vmatpush.bf16.msra.mxu0 %v734
    %2068 = vmatpush.bf16.msra.mxu0 %v730
    %2069 = vmatpush.bf16.msra.mxu0 %v726
    %2070 = vmatpush.bf16.msra.mxu0 %v722
    %2071 = vmatpush.bf16.msra.mxu0 %v718
    %2072 = vmatpush.bf16.msra.mxu0 %v714
    %2073 = vmatpush.bf16.msra.mxu0 %v710
    %2074 = vmatmul.bf16.gmra.mxu0 %v1974
    %v2075 = vpop.f32.mrf.mxu0
    %v2076 = vadd.f32 %v2063, %v2075
    %v2077 = vpop.f32.mrf.mxu0
    %2078 = vdwg.mxu0
    %v2079 = vxor.u32 %v1998, 2147483648
    %v2080 = vmul.f32 %v2079, 1.442695
    %v2081 = vpow.pop %v2080
    %v2082 = vadd.f32 %v2081, 1.0
    %v2083 = vrcp.pop %v2082
    %v2084 = vmul.f32 %v2082, %v2083
    %v2085 = vsub.f32 1.0, %v2084
    %v2086 = vmul.f32 %v2083, %v2085
    %v2087 = vadd.f32 %v2083, %v2086
    %vm2088 = vweird.f32 %v2082
    %vm2089 = vweird.f32 %v2083
    %vm2090 = vmor %vm2088, %vm2089
    %v2091 = vsel %vm2090, %v2083, %v2087
    %v2092 = vand.u32 2147483647, %v2082
    %vm2093 = vcmp.eq.f32.partialorder %v2092, 8.507059e+37
    %v2094 = vand.u32 %v2082, 2147483648
    %v2095 = vor.u32 1.1754944e-38, %v2094
    %v2096 = vsel %vm2093, %v2095, %v2091
    %v2097 = vmul.f32 1.0, %v2096
    %v2098 = vxor.u32 %v2024, 2147483648
    %v2099 = vmul.f32 %v2098, 1.442695
    %v2100 = vpow.pop %v2099
    %v2101 = vadd.f32 %v2100, 1.0
    %v2102 = vrcp.pop %v2101
    %v2103 = vmul.f32 %v2101, %v2102
    %v2104 = vsub.f32 1.0, %v2103
    %v2105 = vmul.f32 %v2102, %v2104
    %v2106 = vadd.f32 %v2102, %v2105
    %vm2107 = vweird.f32 %v2101
    %vm2108 = vweird.f32 %v2102
    %vm2109 = vmor %vm2107, %vm2108
    %v2110 = vsel %vm2109, %v2102, %v2106
    %v2111 = vand.u32 2147483647, %v2101
    %vm2112 = vcmp.eq.f32.partialorder %v2111, 8.507059e+37
    %v2113 = vand.u32 %v2101, 2147483648
    %v2114 = vor.u32 1.1754944e-38, %v2113
    %v2115 = vsel %vm2112, %v2114, %v2110
    %v2116 = vmul.f32 1.0, %v2115
    %v2117 = vtanh.pop %v2050
    %v2118 = vxor.u32 %v2076, 2147483648
    %v2119 = vmul.f32 %v2118, 1.442695
    %v2120 = vpow.pop %v2119
    %v2121 = vadd.f32 %v2120, 1.0
    %v2122 = vrcp.pop %v2121
    %v2123 = vmul.f32 %v2121, %v2122
    %v2124 = vsub.f32 1.0, %v2123
    %v2125 = vmul.f32 %v2122, %v2124
    %v2126 = vadd.f32 %v2122, %v2125
    %vm2127 = vweird.f32 %v2121
    %vm2128 = vweird.f32 %v2122
    %vm2129 = vmor %vm2127, %vm2128
    %v2130 = vsel %vm2129, %v2122, %v2126
    %v2131 = vand.u32 2147483647, %v2121
    %vm2132 = vcmp.eq.f32.partialorder %v2131, 8.507059e+37
    %v2133 = vand.u32 %v2121, 2147483648
    %v2134 = vor.u32 1.1754944e-38, %v2133
    %v2135 = vsel %vm2132, %v2134, %v2130
    %v2136 = vmul.f32 1.0, %v2135
    %v2137 = vmul.f32 %v2116, %v1846
    %v2138 = vmul.f32 %v2097, %v2117
    %v2139 = vadd.f32 %v2137, %v2138
    %v2140 = vtanh.pop %v2139
    %v2141 = vmul.f32 %v2136, %v2140
    %s2142 = scalar_lea.vmem [#allocation6], 160
    %v2143 = vld [vmem:[%s2142] sm:$0xff]
    %v2144 = vld [vmem:[%s2142 + $0x8] sm:$0xff]
    %v2145 = vld [vmem:[%s2142 + $0x10] sm:$0xff]
    %v2146 = vld [vmem:[%s2142 + $0x18] sm:$0xff]
    %2147 = vmatpush.bf16.msra.mxu0 %v326
    %2148 = vmatpush.bf16.msra.mxu0 %v322
    %2149 = vmatpush.bf16.msra.mxu0 %v318
    %2150 = vmatpush.bf16.msra.mxu0 %v314
    %2151 = vmatpush.bf16.msra.mxu0 %v310
    %2152 = vmatpush.bf16.msra.mxu0 %v306
    %2153 = vmatpush.bf16.msra.mxu0 %v302
    %2154 = vmatpush.bf16.msra.mxu0 %v298
    %2155 = vmatmul.bf16.gmra.mxu0 %v1973
    %v2156 = vpop.f32.mrf.mxu0
    %v2157 = vadd.f32 0.0, %v2156
    %v2158 = vpop.f32.mrf.mxu0
    %2159 = vdwg.mxu0
    %2160 = vmatpush.bf16.msra.mxu0 %v327
    %2161 = vmatpush.bf16.msra.mxu0 %v323
    %2162 = vmatpush.bf16.msra.mxu0 %v319
    %2163 = vmatpush.bf16.msra.mxu0 %v315
    %2164 = vmatpush.bf16.msra.mxu0 %v311
    %2165 = vmatpush.bf16.msra.mxu0 %v307
    %2166 = vmatpush.bf16.msra.mxu0 %v303
    %2167 = vmatpush.bf16.msra.mxu0 %v299
    %2168 = vmatmul.bf16.gmra.mxu0 %v1973
    %v2169 = vpop.f32.mrf.mxu0
    %v2170 = vadd.f32 0.0, %v2169
    %v2171 = vpop.f32.mrf.mxu0
    %2172 = vdwg.mxu0
    %2173 = vmatpush.bf16.msra.mxu0 %v328
    %2174 = vmatpush.bf16.msra.mxu0 %v324
    %2175 = vmatpush.bf16.msra.mxu0 %v320
    %2176 = vmatpush.bf16.msra.mxu0 %v316
    %2177 = vmatpush.bf16.msra.mxu0 %v312
    %2178 = vmatpush.bf16.msra.mxu0 %v308
    %2179 = vmatpush.bf16.msra.mxu0 %v304
    %2180 = vmatpush.bf16.msra.mxu0 %v300
    %2181 = vmatmul.bf16.gmra.mxu0 %v1973
    %v2182 = vpop.f32.mrf.mxu0
    %v2183 = vadd.f32 0.0, %v2182
    %v2184 = vpop.f32.mrf.mxu0
    %2185 = vdwg.mxu0
    %2186 = vmatpush.bf16.msra.mxu0 %v329
    %2187 = vmatpush.bf16.msra.mxu0 %v325
    %2188 = vmatpush.bf16.msra.mxu0 %v321
    %2189 = vmatpush.bf16.msra.mxu0 %v317
    %2190 = vmatpush.bf16.msra.mxu0 %v313
    %2191 = vmatpush.bf16.msra.mxu0 %v309
    %2192 = vmatpush.bf16.msra.mxu0 %v305
    %2193 = vmatpush.bf16.msra.mxu0 %v301
    %2194 = vmatmul.bf16.gmra.mxu0 %v1973
    %v2195 = vpop.f32.mrf.mxu0
    %v2196 = vadd.f32 0.0, %v2195
    %v2197 = vpop.f32.mrf.mxu0
    %2198 = vdwg.mxu0
    %v2199 = vadd.f32 %v2143, %v2157
    %v2200 = vadd.f32 %v2144, %v2170
    %v2201 = vadd.f32 %v2145, %v2183
    %v2202 = vadd.f32 %v2146, %v2196
    %v2203 = vxor.u32 %v2199, 2147483648
    %v2204 = vmul.f32 %v2203, 1.442695
    %v2205 = vpow.pop %v2204
    %v2206 = vadd.f32 %v2205, 1.0
    %v2207 = vrcp.pop %v2206
    %v2208 = vmul.f32 %v2206, %v2207
    %v2209 = vsub.f32 1.0, %v2208
    %v2210 = vmul.f32 %v2207, %v2209
    %v2211 = vadd.f32 %v2207, %v2210
    %vm2212 = vweird.f32 %v2206
    %vm2213 = vweird.f32 %v2207
    %vm2214 = vmor %vm2212, %vm2213
    %v2215 = vsel %vm2214, %v2207, %v2211
    %v2216 = vand.u32 2147483647, %v2206
    %vm2217 = vcmp.eq.f32.partialorder %v2216, 8.507059e+37
    %v2218 = vand.u32 %v2206, 2147483648
    %v2219 = vor.u32 1.1754944e-38, %v2218
    %v2220 = vsel %vm2217, %v2219, %v2215
    %v2221 = vmul.f32 1.0, %v2220
    %v2222 = vxor.u32 %v2200, 2147483648
    %v2223 = vmul.f32 %v2222, 1.442695
    %v2224 = vpow.pop %v2223
    %v2225 = vadd.f32 %v2224, 1.0
    %v2226 = vrcp.pop %v2225
    %v2227 = vmul.f32 %v2225, %v2226
    %v2228 = vsub.f32 1.0, %v2227
    %v2229 = vmul.f32 %v2226, %v2228
    %v2230 = vadd.f32 %v2226, %v2229
    %vm2231 = vweird.f32 %v2225
    %vm2232 = vweird.f32 %v2226
    %vm2233 = vmor %vm2231, %vm2232
    %v2234 = vsel %vm2233, %v2226, %v2230
    %v2235 = vand.u32 2147483647, %v2225
    %vm2236 = vcmp.eq.f32.partialorder %v2235, 8.507059e+37
    %v2237 = vand.u32 %v2225, 2147483648
    %v2238 = vor.u32 1.1754944e-38, %v2237
    %v2239 = vsel %vm2236, %v2238, %v2234
    %v2240 = vmul.f32 1.0, %v2239
    %v2241 = vtanh.pop %v2201
    %v2242 = vxor.u32 %v2202, 2147483648
    %v2243 = vmul.f32 %v2242, 1.442695
    %v2244 = vpow.pop %v2243
    %v2245 = vadd.f32 %v2244, 1.0
    %v2246 = vrcp.pop %v2245
    %v2247 = vmul.f32 %v2245, %v2246
    %v2248 = vsub.f32 1.0, %v2247
    %v2249 = vmul.f32 %v2246, %v2248
    %v2250 = vadd.f32 %v2246, %v2249
    %vm2251 = vweird.f32 %v2245
    %vm2252 = vweird.f32 %v2246
    %vm2253 = vmor %vm2251, %vm2252
    %v2254 = vsel %vm2253, %v2246, %v2250
    %v2255 = vand.u32 2147483647, %v2245
    %vm2256 = vcmp.eq.f32.partialorder %v2255, 8.507059e+37
    %v2257 = vand.u32 %v2245, 2147483648
    %v2258 = vor.u32 1.1754944e-38, %v2257
    %v2259 = vsel %vm2256, %v2258, %v2254
    %v2260 = vmul.f32 1.0, %v2259
    %v2261 = vmul.f32 %v2240, %v1970
    %v2262 = vmul.f32 %v2221, %v2241
    %v2263 = vadd.f32 %v2261, %v2262
    %v2264 = vtanh.pop %v2263
    %v2265 = vmul.f32 %v2260, %v2264
    %v2266 = vpack.c.bf16 %v2265, %v2265
    %v2267 = vpack.c.bf16 %v2141, %v2141
    %2268 = vmatpush.bf16.msra.mxu0 %v703
    %2269 = vmatpush.bf16.msra.mxu0 %v699
    %2270 = vmatpush.bf16.msra.mxu0 %v695
    %2271 = vmatpush.bf16.msra.mxu0 %v691
    %2272 = vmatpush.bf16.msra.mxu0 %v687
    %2273 = vmatpush.bf16.msra.mxu0 %v683
    %2274 = vmatpush.bf16.msra.mxu0 %v679
    %2275 = vmatpush.bf16.msra.mxu0 %v675
    %2276 = vmatmul.bf16.gmra.mxu0 %v2266
    %v2277 = vpop.f32.mrf.mxu0
    %v2278 = vadd.f32 %v185, %v2277
    %v2279 = vpop.f32.mrf.mxu0
    %2280 = vdwg.mxu0
    %2281 = vmatpush.bf16.msra.mxu0 %v735
    %2282 = vmatpush.bf16.msra.mxu0 %v731
    %2283 = vmatpush.bf16.msra.mxu0 %v727
    %2284 = vmatpush.bf16.msra.mxu0 %v723
    %2285 = vmatpush.bf16.msra.mxu0 %v719
    %2286 = vmatpush.bf16.msra.mxu0 %v715
    %2287 = vmatpush.bf16.msra.mxu0 %v711
    %2288 = vmatpush.bf16.msra.mxu0 %v707
    %2289 = vmatmul.bf16.gmra.mxu0 %v2267
    %v2290 = vpop.f32.mrf.mxu0
    %v2291 = vadd.f32 %v2278, %v2290
    %v2292 = vpop.f32.mrf.mxu0
    %2293 = vdwg.mxu0
    %2294 = vmatpush.bf16.msra.mxu0 %v704
    %2295 = vmatpush.bf16.msra.mxu0 %v700
    %2296 = vmatpush.bf16.msra.mxu0 %v696
    %2297 = vmatpush.bf16.msra.mxu0 %v692
    %2298 = vmatpush.bf16.msra.mxu0 %v688
    %2299 = vmatpush.bf16.msra.mxu0 %v684
    %2300 = vmatpush.bf16.msra.mxu0 %v680
    %2301 = vmatpush.bf16.msra.mxu0 %v676
    %2302 = vmatmul.bf16.gmra.mxu0 %v2266
    %v2303 = vpop.f32.mrf.mxu0
    %v2304 = vadd.f32 %v186, %v2303
    %v2305 = vpop.f32.mrf.mxu0
    %2306 = vdwg.mxu0
    %2307 = vmatpush.bf16.msra.mxu0 %v736
    %2308 = vmatpush.bf16.msra.mxu0 %v732
    %2309 = vmatpush.bf16.msra.mxu0 %v728
    %2310 = vmatpush.bf16.msra.mxu0 %v724
    %2311 = vmatpush.bf16.msra.mxu0 %v720
    %2312 = vmatpush.bf16.msra.mxu0 %v716
    %2313 = vmatpush.bf16.msra.mxu0 %v712
    %2314 = vmatpush.bf16.msra.mxu0 %v708
    %2315 = vmatmul.bf16.gmra.mxu0 %v2267
    %v2316 = vpop.f32.mrf.mxu0
    %v2317 = vadd.f32 %v2304, %v2316
    %v2318 = vpop.f32.mrf.mxu0
    %2319 = vdwg.mxu0
    %2320 = vmatpush.bf16.msra.mxu0 %v705
    %2321 = vmatpush.bf16.msra.mxu0 %v701
    %2322 = vmatpush.bf16.msra.mxu0 %v697
    %2323 = vmatpush.bf16.msra.mxu0 %v693
    %2324 = vmatpush.bf16.msra.mxu0 %v689
    %2325 = vmatpush.bf16.msra.mxu0 %v685
    %2326 = vmatpush.bf16.msra.mxu0 %v681
    %2327 = vmatpush.bf16.msra.mxu0 %v677
    %2328 = vmatmul.bf16.gmra.mxu0 %v2266
    %v2329 = vpop.f32.mrf.mxu0
    %v2330 = vadd.f32 %v187, %v2329
    %v2331 = vpop.f32.mrf.mxu0
    %2332 = vdwg.mxu0
    %2333 = vmatpush.bf16.msra.mxu0 %v737
    %2334 = vmatpush.bf16.msra.mxu0 %v733
    %2335 = vmatpush.bf16.msra.mxu0 %v729
    %2336 = vmatpush.bf16.msra.mxu0 %v725
    %2337 = vmatpush.bf16.msra.mxu0 %v721
    %2338 = vmatpush.bf16.msra.mxu0 %v717
    %2339 = vmatpush.bf16.msra.mxu0 %v713
    %2340 = vmatpush.bf16.msra.mxu0 %v709
    %2341 = vmatmul.bf16.gmra.mxu0 %v2267
    %v2342 = vpop.f32.mrf.mxu0
    %v2343 = vadd.f32 %v2330, %v2342
    %v2344 = vpop.f32.mrf.mxu0
    %2345 = vdwg.mxu0
    %2346 = vmatpush.bf16.msra.mxu0 %v706
    %2347 = vmatpush.bf16.msra.mxu0 %v702
    %2348 = vmatpush.bf16.msra.mxu0 %v698
    %2349 = vmatpush.bf16.msra.mxu0 %v694
    %2350 = vmatpush.bf16.msra.mxu0 %v690
    %2351 = vmatpush.bf16.msra.mxu0 %v686
    %2352 = vmatpush.bf16.msra.mxu0 %v682
    %2353 = vmatpush.bf16.msra.mxu0 %v678
    %2354 = vmatmul.bf16.gmra.mxu0 %v2266
    %v2355 = vpop.f32.mrf.mxu0
    %v2356 = vadd.f32 %v188, %v2355
    %v2357 = vpop.f32.mrf.mxu0
    %2358 = vdwg.mxu0
    %2359 = vmatpush.bf16.msra.mxu0 %v738
    %2360 = vmatpush.bf16.msra.mxu0 %v734
    %2361 = vmatpush.bf16.msra.mxu0 %v730
    %2362 = vmatpush.bf16.msra.mxu0 %v726
    %2363 = vmatpush.bf16.msra.mxu0 %v722
    %2364 = vmatpush.bf16.msra.mxu0 %v718
    %2365 = vmatpush.bf16.msra.mxu0 %v714
    %2366 = vmatpush.bf16.msra.mxu0 %v710
    %2367 = vmatmul.bf16.gmra.mxu0 %v2267
    %v2368 = vpop.f32.mrf.mxu0
    %v2369 = vadd.f32 %v2356, %v2368
    %v2370 = vpop.f32.mrf.mxu0
    %2371 = vdwg.mxu0
    %v2372 = vxor.u32 %v2291, 2147483648
    %v2373 = vmul.f32 %v2372, 1.442695
    %v2374 = vpow.pop %v2373
    %v2375 = vadd.f32 %v2374, 1.0
    %v2376 = vrcp.pop %v2375
    %v2377 = vmul.f32 %v2375, %v2376
    %v2378 = vsub.f32 1.0, %v2377
    %v2379 = vmul.f32 %v2376, %v2378
    %v2380 = vadd.f32 %v2376, %v2379
    %vm2381 = vweird.f32 %v2375
    %vm2382 = vweird.f32 %v2376
    %vm2383 = vmor %vm2381, %vm2382
    %v2384 = vsel %vm2383, %v2376, %v2380
    %v2385 = vand.u32 2147483647, %v2375
    %vm2386 = vcmp.eq.f32.partialorder %v2385, 8.507059e+37
    %v2387 = vand.u32 %v2375, 2147483648
    %v2388 = vor.u32 1.1754944e-38, %v2387
    %v2389 = vsel %vm2386, %v2388, %v2384
    %v2390 = vmul.f32 1.0, %v2389
    %v2391 = vxor.u32 %v2317, 2147483648
    %v2392 = vmul.f32 %v2391, 1.442695
    %v2393 = vpow.pop %v2392
    %v2394 = vadd.f32 %v2393, 1.0
    %v2395 = vrcp.pop %v2394
    %v2396 = vmul.f32 %v2394, %v2395
    %v2397 = vsub.f32 1.0, %v2396
    %v2398 = vmul.f32 %v2395, %v2397
    %v2399 = vadd.f32 %v2395, %v2398
    %vm2400 = vweird.f32 %v2394
    %vm2401 = vweird.f32 %v2395
    %vm2402 = vmor %vm2400, %vm2401
    %v2403 = vsel %vm2402, %v2395, %v2399
    %v2404 = vand.u32 2147483647, %v2394
    %vm2405 = vcmp.eq.f32.partialorder %v2404, 8.507059e+37
    %v2406 = vand.u32 %v2394, 2147483648
    %v2407 = vor.u32 1.1754944e-38, %v2406
    %v2408 = vsel %vm2405, %v2407, %v2403
    %v2409 = vmul.f32 1.0, %v2408
    %v2410 = vtanh.pop %v2343
    %v2411 = vxor.u32 %v2369, 2147483648
    %v2412 = vmul.f32 %v2411, 1.442695
    %v2413 = vpow.pop %v2412
    %v2414 = vadd.f32 %v2413, 1.0
    %v2415 = vrcp.pop %v2414
    %v2416 = vmul.f32 %v2414, %v2415
    %v2417 = vsub.f32 1.0, %v2416
    %v2418 = vmul.f32 %v2415, %v2417
    %v2419 = vadd.f32 %v2415, %v2418
    %vm2420 = vweird.f32 %v2414
    %vm2421 = vweird.f32 %v2415
    %vm2422 = vmor %vm2420, %vm2421
    %v2423 = vsel %vm2422, %v2415, %v2419
    %v2424 = vand.u32 2147483647, %v2414
    %vm2425 = vcmp.eq.f32.partialorder %v2424, 8.507059e+37
    %v2426 = vand.u32 %v2414, 2147483648
    %v2427 = vor.u32 1.1754944e-38, %v2426
    %v2428 = vsel %vm2425, %v2427, %v2423
    %v2429 = vmul.f32 1.0, %v2428
    %v2430 = vmul.f32 %v2409, %v2139
    %v2431 = vmul.f32 %v2390, %v2410
    %v2432 = vadd.f32 %v2430, %v2431
    %v2433 = vtanh.pop %v2432
    %v2434 = vmul.f32 %v2429, %v2433
    %s2435 = scalar_lea.vmem [#allocation6], 192
    %v2436 = vld [vmem:[%s2435] sm:$0xff]
    %v2437 = vld [vmem:[%s2435 + $0x8] sm:$0xff]
    %v2438 = vld [vmem:[%s2435 + $0x10] sm:$0xff]
    %v2439 = vld [vmem:[%s2435 + $0x18] sm:$0xff]
    %2440 = vmatpush.bf16.msra.mxu0 %v326
    %2441 = vmatpush.bf16.msra.mxu0 %v322
    %2442 = vmatpush.bf16.msra.mxu0 %v318
    %2443 = vmatpush.bf16.msra.mxu0 %v314
    %2444 = vmatpush.bf16.msra.mxu0 %v310
    %2445 = vmatpush.bf16.msra.mxu0 %v306
    %2446 = vmatpush.bf16.msra.mxu0 %v302
    %2447 = vmatpush.bf16.msra.mxu0 %v298
    %2448 = vmatmul.bf16.gmra.mxu0 %v2266
    %v2449 = vpop.f32.mrf.mxu0
    %v2450 = vadd.f32 0.0, %v2449
    %v2451 = vpop.f32.mrf.mxu0
    %2452 = vdwg.mxu0
    %2453 = vmatpush.bf16.msra.mxu0 %v327
    %2454 = vmatpush.bf16.msra.mxu0 %v323
    %2455 = vmatpush.bf16.msra.mxu0 %v319
    %2456 = vmatpush.bf16.msra.mxu0 %v315
    %2457 = vmatpush.bf16.msra.mxu0 %v311
    %2458 = vmatpush.bf16.msra.mxu0 %v307
    %2459 = vmatpush.bf16.msra.mxu0 %v303
    %2460 = vmatpush.bf16.msra.mxu0 %v299
    %2461 = vmatmul.bf16.gmra.mxu0 %v2266
    %v2462 = vpop.f32.mrf.mxu0
    %v2463 = vadd.f32 0.0, %v2462
    %v2464 = vpop.f32.mrf.mxu0
    %2465 = vdwg.mxu0
    %2466 = vmatpush.bf16.msra.mxu0 %v328
    %2467 = vmatpush.bf16.msra.mxu0 %v324
    %2468 = vmatpush.bf16.msra.mxu0 %v320
    %2469 = vmatpush.bf16.msra.mxu0 %v316
    %2470 = vmatpush.bf16.msra.mxu0 %v312
    %2471 = vmatpush.bf16.msra.mxu0 %v308
    %2472 = vmatpush.bf16.msra.mxu0 %v304
    %2473 = vmatpush.bf16.msra.mxu0 %v300
    %2474 = vmatmul.bf16.gmra.mxu0 %v2266
    %v2475 = vpop.f32.mrf.mxu0
    %v2476 = vadd.f32 0.0, %v2475
    %v2477 = vpop.f32.mrf.mxu0
    %2478 = vdwg.mxu0
    %2479 = vmatpush.bf16.msra.mxu0 %v329
    %2480 = vmatpush.bf16.msra.mxu0 %v325
    %2481 = vmatpush.bf16.msra.mxu0 %v321
    %2482 = vmatpush.bf16.msra.mxu0 %v317
    %2483 = vmatpush.bf16.msra.mxu0 %v313
    %2484 = vmatpush.bf16.msra.mxu0 %v309
    %2485 = vmatpush.bf16.msra.mxu0 %v305
    %2486 = vmatpush.bf16.msra.mxu0 %v301
    %2487 = vmatmul.bf16.gmra.mxu0 %v2266
    %v2488 = vpop.f32.mrf.mxu0
    %v2489 = vadd.f32 0.0, %v2488
    %v2490 = vpop.f32.mrf.mxu0
    %2491 = vdwg.mxu0
    %v2492 = vadd.f32 %v2436, %v2450
    %v2493 = vadd.f32 %v2437, %v2463
    %v2494 = vadd.f32 %v2438, %v2476
    %v2495 = vadd.f32 %v2439, %v2489
    %v2496 = vxor.u32 %v2492, 2147483648
    %v2497 = vmul.f32 %v2496, 1.442695
    %v2498 = vpow.pop %v2497
    %v2499 = vadd.f32 %v2498, 1.0
    %v2500 = vrcp.pop %v2499
    %v2501 = vmul.f32 %v2499, %v2500
    %v2502 = vsub.f32 1.0, %v2501
    %v2503 = vmul.f32 %v2500, %v2502
    %v2504 = vadd.f32 %v2500, %v2503
    %vm2505 = vweird.f32 %v2499
    %vm2506 = vweird.f32 %v2500
    %vm2507 = vmor %vm2505, %vm2506
    %v2508 = vsel %vm2507, %v2500, %v2504
    %v2509 = vand.u32 2147483647, %v2499
    %vm2510 = vcmp.eq.f32.partialorder %v2509, 8.507059e+37
    %v2511 = vand.u32 %v2499, 2147483648
    %v2512 = vor.u32 1.1754944e-38, %v2511
    %v2513 = vsel %vm2510, %v2512, %v2508
    %v2514 = vmul.f32 1.0, %v2513
    %v2515 = vxor.u32 %v2493, 2147483648
    %v2516 = vmul.f32 %v2515, 1.442695
    %v2517 = vpow.pop %v2516
    %v2518 = vadd.f32 %v2517, 1.0
    %v2519 = vrcp.pop %v2518
    %v2520 = vmul.f32 %v2518, %v2519
    %v2521 = vsub.f32 1.0, %v2520
    %v2522 = vmul.f32 %v2519, %v2521
    %v2523 = vadd.f32 %v2519, %v2522
    %vm2524 = vweird.f32 %v2518
    %vm2525 = vweird.f32 %v2519
    %vm2526 = vmor %vm2524, %vm2525
    %v2527 = vsel %vm2526, %v2519, %v2523
    %v2528 = vand.u32 2147483647, %v2518
    %vm2529 = vcmp.eq.f32.partialorder %v2528, 8.507059e+37
    %v2530 = vand.u32 %v2518, 2147483648
    %v2531 = vor.u32 1.1754944e-38, %v2530
    %v2532 = vsel %vm2529, %v2531, %v2527
    %v2533 = vmul.f32 1.0, %v2532
    %v2534 = vtanh.pop %v2494
    %v2535 = vxor.u32 %v2495, 2147483648
    %v2536 = vmul.f32 %v2535, 1.442695
    %v2537 = vpow.pop %v2536
    %v2538 = vadd.f32 %v2537, 1.0
    %v2539 = vrcp.pop %v2538
    %v2540 = vmul.f32 %v2538, %v2539
    %v2541 = vsub.f32 1.0, %v2540
    %v2542 = vmul.f32 %v2539, %v2541
    %v2543 = vadd.f32 %v2539, %v2542
    %vm2544 = vweird.f32 %v2538
    %vm2545 = vweird.f32 %v2539
    %vm2546 = vmor %vm2544, %vm2545
    %v2547 = vsel %vm2546, %v2539, %v2543
    %v2548 = vand.u32 2147483647, %v2538
    %vm2549 = vcmp.eq.f32.partialorder %v2548, 8.507059e+37
    %v2550 = vand.u32 %v2538, 2147483648
    %v2551 = vor.u32 1.1754944e-38, %v2550
    %v2552 = vsel %vm2549, %v2551, %v2547
    %v2553 = vmul.f32 1.0, %v2552
    %v2554 = vmul.f32 %v2533, %v2263
    %v2555 = vmul.f32 %v2514, %v2534
    %v2556 = vadd.f32 %v2554, %v2555
    %v2557 = vtanh.pop %v2556
    %v2558 = vmul.f32 %v2553, %v2557
    %v2559 = vpack.c.bf16 %v2558, %v2558
    %v2560 = vpack.c.bf16 %v2434, %v2434
    %2561 = vmatpush.bf16.msra.mxu0 %v703
    %2562 = vmatpush.bf16.msra.mxu0 %v699
    %2563 = vmatpush.bf16.msra.mxu0 %v695
    %2564 = vmatpush.bf16.msra.mxu0 %v691
    %2565 = vmatpush.bf16.msra.mxu0 %v687
    %2566 = vmatpush.bf16.msra.mxu0 %v683
    %2567 = vmatpush.bf16.msra.mxu0 %v679
    %2568 = vmatpush.bf16.msra.mxu0 %v675
    %2569 = vmatmul.bf16.gmra.mxu0 %v2559
    %v2570 = vpop.f32.mrf.mxu0
    %v2571 = vadd.f32 %v185, %v2570
    %v2572 = vpop.f32.mrf.mxu0
    %2573 = vdwg.mxu0
    %2574 = vmatpush.bf16.msra.mxu0 %v735
    %2575 = vmatpush.bf16.msra.mxu0 %v731
    %2576 = vmatpush.bf16.msra.mxu0 %v727
    %2577 = vmatpush.bf16.msra.mxu0 %v723
    %2578 = vmatpush.bf16.msra.mxu0 %v719
    %2579 = vmatpush.bf16.msra.mxu0 %v715
    %2580 = vmatpush.bf16.msra.mxu0 %v711
    %2581 = vmatpush.bf16.msra.mxu0 %v707
    %2582 = vmatmul.bf16.gmra.mxu0 %v2560
    %v2583 = vpop.f32.mrf.mxu0
    %v2584 = vadd.f32 %v2571, %v2583
    %v2585 = vpop.f32.mrf.mxu0
    %2586 = vdwg.mxu0
    %2587 = vmatpush.bf16.msra.mxu0 %v704
    %2588 = vmatpush.bf16.msra.mxu0 %v700
    %2589 = vmatpush.bf16.msra.mxu0 %v696
    %2590 = vmatpush.bf16.msra.mxu0 %v692
    %2591 = vmatpush.bf16.msra.mxu0 %v688
    %2592 = vmatpush.bf16.msra.mxu0 %v684
    %2593 = vmatpush.bf16.msra.mxu0 %v680
    %2594 = vmatpush.bf16.msra.mxu0 %v676
    %2595 = vmatmul.bf16.gmra.mxu0 %v2559
    %v2596 = vpop.f32.mrf.mxu0
    %v2597 = vadd.f32 %v186, %v2596
    %v2598 = vpop.f32.mrf.mxu0
    %2599 = vdwg.mxu0
    %2600 = vmatpush.bf16.msra.mxu0 %v736
    %2601 = vmatpush.bf16.msra.mxu0 %v732
    %2602 = vmatpush.bf16.msra.mxu0 %v728
    %2603 = vmatpush.bf16.msra.mxu0 %v724
    %2604 = vmatpush.bf16.msra.mxu0 %v720
    %2605 = vmatpush.bf16.msra.mxu0 %v716
    %2606 = vmatpush.bf16.msra.mxu0 %v712
    %2607 = vmatpush.bf16.msra.mxu0 %v708
    %2608 = vmatmul.bf16.gmra.mxu0 %v2560
    %v2609 = vpop.f32.mrf.mxu0
    %v2610 = vadd.f32 %v2597, %v2609
    %v2611 = vpop.f32.mrf.mxu0
    %2612 = vdwg.mxu0
    %2613 = vmatpush.bf16.msra.mxu0 %v705
    %2614 = vmatpush.bf16.msra.mxu0 %v701
    %2615 = vmatpush.bf16.msra.mxu0 %v697
    %2616 = vmatpush.bf16.msra.mxu0 %v693
    %2617 = vmatpush.bf16.msra.mxu0 %v689
    %2618 = vmatpush.bf16.msra.mxu0 %v685
    %2619 = vmatpush.bf16.msra.mxu0 %v681
    %2620 = vmatpush.bf16.msra.mxu0 %v677
    %2621 = vmatmul.bf16.gmra.mxu0 %v2559
    %v2622 = vpop.f32.mrf.mxu0
    %v2623 = vadd.f32 %v187, %v2622
    %v2624 = vpop.f32.mrf.mxu0
    %2625 = vdwg.mxu0
    %2626 = vmatpush.bf16.msra.mxu0 %v737
    %2627 = vmatpush.bf16.msra.mxu0 %v733
    %2628 = vmatpush.bf16.msra.mxu0 %v729
    %2629 = vmatpush.bf16.msra.mxu0 %v725
    %2630 = vmatpush.bf16.msra.mxu0 %v721
    %2631 = vmatpush.bf16.msra.mxu0 %v717
    %2632 = vmatpush.bf16.msra.mxu0 %v713
    %2633 = vmatpush.bf16.msra.mxu0 %v709
    %2634 = vmatmul.bf16.gmra.mxu0 %v2560
    %v2635 = vpop.f32.mrf.mxu0
    %v2636 = vadd.f32 %v2623, %v2635
    %v2637 = vpop.f32.mrf.mxu0
    %2638 = vdwg.mxu0
    %2639 = vmatpush.bf16.msra.mxu0 %v706
    %2640 = vmatpush.bf16.msra.mxu0 %v702
    %2641 = vmatpush.bf16.msra.mxu0 %v698
    %2642 = vmatpush.bf16.msra.mxu0 %v694
    %2643 = vmatpush.bf16.msra.mxu0 %v690
    %2644 = vmatpush.bf16.msra.mxu0 %v686
    %2645 = vmatpush.bf16.msra.mxu0 %v682
    %2646 = vmatpush.bf16.msra.mxu0 %v678
    %2647 = vmatmul.bf16.gmra.mxu0 %v2559
    %v2648 = vpop.f32.mrf.mxu0
    %v2649 = vadd.f32 %v188, %v2648
    %v2650 = vpop.f32.mrf.mxu0
    %2651 = vdwg.mxu0
    %2652 = vmatpush.bf16.msra.mxu0 %v738
    %2653 = vmatpush.bf16.msra.mxu0 %v734
    %2654 = vmatpush.bf16.msra.mxu0 %v730
    %2655 = vmatpush.bf16.msra.mxu0 %v726
    %2656 = vmatpush.bf16.msra.mxu0 %v722
    %2657 = vmatpush.bf16.msra.mxu0 %v718
    %2658 = vmatpush.bf16.msra.mxu0 %v714
    %2659 = vmatpush.bf16.msra.mxu0 %v710
    %2660 = vmatmul.bf16.gmra.mxu0 %v2560
    %v2661 = vpop.f32.mrf.mxu0
    %v2662 = vadd.f32 %v2649, %v2661
    %v2663 = vpop.f32.mrf.mxu0
    %2664 = vdwg.mxu0
    %v2665 = vxor.u32 %v2584, 2147483648
    %v2666 = vmul.f32 %v2665, 1.442695
    %v2667 = vpow.pop %v2666
    %v2668 = vadd.f32 %v2667, 1.0
    %v2669 = vrcp.pop %v2668
    %v2670 = vmul.f32 %v2668, %v2669
    %v2671 = vsub.f32 1.0, %v2670
    %v2672 = vmul.f32 %v2669, %v2671
    %v2673 = vadd.f32 %v2669, %v2672
    %vm2674 = vweird.f32 %v2668
    %vm2675 = vweird.f32 %v2669
    %vm2676 = vmor %vm2674, %vm2675
    %v2677 = vsel %vm2676, %v2669, %v2673
    %v2678 = vand.u32 2147483647, %v2668
    %vm2679 = vcmp.eq.f32.partialorder %v2678, 8.507059e+37
    %v2680 = vand.u32 %v2668, 2147483648
    %v2681 = vor.u32 1.1754944e-38, %v2680
    %v2682 = vsel %vm2679, %v2681, %v2677
    %v2683 = vmul.f32 1.0, %v2682
    %v2684 = vxor.u32 %v2610, 2147483648
    %v2685 = vmul.f32 %v2684, 1.442695
    %v2686 = vpow.pop %v2685
    %v2687 = vadd.f32 %v2686, 1.0
    %v2688 = vrcp.pop %v2687
    %v2689 = vmul.f32 %v2687, %v2688
    %v2690 = vsub.f32 1.0, %v2689
    %v2691 = vmul.f32 %v2688, %v2690
    %v2692 = vadd.f32 %v2688, %v2691
    %vm2693 = vweird.f32 %v2687
    %vm2694 = vweird.f32 %v2688
    %vm2695 = vmor %vm2693, %vm2694
    %v2696 = vsel %vm2695, %v2688, %v2692
    %v2697 = vand.u32 2147483647, %v2687
    %vm2698 = vcmp.eq.f32.partialorder %v2697, 8.507059e+37
    %v2699 = vand.u32 %v2687, 2147483648
    %v2700 = vor.u32 1.1754944e-38, %v2699
    %v2701 = vsel %vm2698, %v2700, %v2696
    %v2702 = vmul.f32 1.0, %v2701
    %v2703 = vtanh.pop %v2636
    %v2704 = vxor.u32 %v2662, 2147483648
    %v2705 = vmul.f32 %v2704, 1.442695
    %v2706 = vpow.pop %v2705
    %v2707 = vadd.f32 %v2706, 1.0
    %v2708 = vrcp.pop %v2707
    %v2709 = vmul.f32 %v2707, %v2708
    %v2710 = vsub.f32 1.0, %v2709
    %v2711 = vmul.f32 %v2708, %v2710
    %v2712 = vadd.f32 %v2708, %v2711
    %vm2713 = vweird.f32 %v2707
    %vm2714 = vweird.f32 %v2708
    %vm2715 = vmor %vm2713, %vm2714
    %v2716 = vsel %vm2715, %v2708, %v2712
    %v2717 = vand.u32 2147483647, %v2707
    %vm2718 = vcmp.eq.f32.partialorder %v2717, 8.507059e+37
    %v2719 = vand.u32 %v2707, 2147483648
    %v2720 = vor.u32 1.1754944e-38, %v2719
    %v2721 = vsel %vm2718, %v2720, %v2716
    %v2722 = vmul.f32 1.0, %v2721
    %v2723 = vmul.f32 %v2702, %v2432
    %v2724 = vmul.f32 %v2683, %v2703
    %v2725 = vadd.f32 %v2723, %v2724
    %v2726 = vtanh.pop %v2725
    %v2727 = vmul.f32 %v2722, %v2726
    %s2728 = scalar_lea.vmem [#allocation6], 224
    %v2729 = vld [vmem:[%s2728] sm:$0xff]
    %v2730 = vld [vmem:[%s2728 + $0x8] sm:$0xff]
    %v2731 = vld [vmem:[%s2728 + $0x10] sm:$0xff]
    %v2732 = vld [vmem:[%s2728 + $0x18] sm:$0xff]
    %2733 = vmatpush.bf16.msra.mxu0 %v326
    %2734 = vmatpush.bf16.msra.mxu0 %v322
    %2735 = vmatpush.bf16.msra.mxu0 %v318
    %2736 = vmatpush.bf16.msra.mxu0 %v314
    %2737 = vmatpush.bf16.msra.mxu0 %v310
    %2738 = vmatpush.bf16.msra.mxu0 %v306
    %2739 = vmatpush.bf16.msra.mxu0 %v302
    %2740 = vmatpush.bf16.msra.mxu0 %v298
    %2741 = vmatmul.bf16.gmra.mxu0 %v2559
    %v2742 = vpop.f32.mrf.mxu0
    %v2743 = vadd.f32 0.0, %v2742
    %v2744 = vpop.f32.mrf.mxu0
    %2745 = vdwg.mxu0
    %2746 = vmatpush.bf16.msra.mxu0 %v327
    %2747 = vmatpush.bf16.msra.mxu0 %v323
    %2748 = vmatpush.bf16.msra.mxu0 %v319
    %2749 = vmatpush.bf16.msra.mxu0 %v315
    %2750 = vmatpush.bf16.msra.mxu0 %v311
    %2751 = vmatpush.bf16.msra.mxu0 %v307
    %2752 = vmatpush.bf16.msra.mxu0 %v303
    %2753 = vmatpush.bf16.msra.mxu0 %v299
    %2754 = vmatmul.bf16.gmra.mxu0 %v2559
    %v2755 = vpop.f32.mrf.mxu0
    %v2756 = vadd.f32 0.0, %v2755
    %v2757 = vpop.f32.mrf.mxu0
    %2758 = vdwg.mxu0
    %2759 = vmatpush.bf16.msra.mxu0 %v328
    %2760 = vmatpush.bf16.msra.mxu0 %v324
    %2761 = vmatpush.bf16.msra.mxu0 %v320
    %2762 = vmatpush.bf16.msra.mxu0 %v316
    %2763 = vmatpush.bf16.msra.mxu0 %v312
    %2764 = vmatpush.bf16.msra.mxu0 %v308
    %2765 = vmatpush.bf16.msra.mxu0 %v304
    %2766 = vmatpush.bf16.msra.mxu0 %v300
    %2767 = vmatmul.bf16.gmra.mxu0 %v2559
    %v2768 = vpop.f32.mrf.mxu0
    %v2769 = vadd.f32 0.0, %v2768
    %v2770 = vpop.f32.mrf.mxu0
    %2771 = vdwg.mxu0
    %2772 = vmatpush.bf16.msra.mxu0 %v329
    %2773 = vmatpush.bf16.msra.mxu0 %v325
    %2774 = vmatpush.bf16.msra.mxu0 %v321
    %2775 = vmatpush.bf16.msra.mxu0 %v317
    %2776 = vmatpush.bf16.msra.mxu0 %v313
    %2777 = vmatpush.bf16.msra.mxu0 %v309
    %2778 = vmatpush.bf16.msra.mxu0 %v305
    %2779 = vmatpush.bf16.msra.mxu0 %v301
    %2780 = vmatmul.bf16.gmra.mxu0 %v2559
    %v2781 = vpop.f32.mrf.mxu0
    %v2782 = vadd.f32 0.0, %v2781
    %v2783 = vpop.f32.mrf.mxu0
    %2784 = vdwg.mxu0
    %v2785 = vadd.f32 %v2729, %v2743
    %v2786 = vadd.f32 %v2730, %v2756
    %v2787 = vadd.f32 %v2731, %v2769
    %v2788 = vadd.f32 %v2732, %v2782
    %v2789 = vxor.u32 %v2785, 2147483648
    %v2790 = vmul.f32 %v2789, 1.442695
    %v2791 = vpow.pop %v2790
    %v2792 = vadd.f32 %v2791, 1.0
    %v2793 = vrcp.pop %v2792
    %v2794 = vmul.f32 %v2792, %v2793
    %v2795 = vsub.f32 1.0, %v2794
    %v2796 = vmul.f32 %v2793, %v2795
    %v2797 = vadd.f32 %v2793, %v2796
    %vm2798 = vweird.f32 %v2792
    %vm2799 = vweird.f32 %v2793
    %vm2800 = vmor %vm2798, %vm2799
    %v2801 = vsel %vm2800, %v2793, %v2797
    %v2802 = vand.u32 2147483647, %v2792
    %vm2803 = vcmp.eq.f32.partialorder %v2802, 8.507059e+37
    %v2804 = vand.u32 %v2792, 2147483648
    %v2805 = vor.u32 1.1754944e-38, %v2804
    %v2806 = vsel %vm2803, %v2805, %v2801
    %v2807 = vmul.f32 1.0, %v2806
    %v2808 = vxor.u32 %v2786, 2147483648
    %v2809 = vmul.f32 %v2808, 1.442695
    %v2810 = vpow.pop %v2809
    %v2811 = vadd.f32 %v2810, 1.0
    %v2812 = vrcp.pop %v2811
    %v2813 = vmul.f32 %v2811, %v2812
    %v2814 = vsub.f32 1.0, %v2813
    %v2815 = vmul.f32 %v2812, %v2814
    %v2816 = vadd.f32 %v2812, %v2815
    %vm2817 = vweird.f32 %v2811
    %vm2818 = vweird.f32 %v2812
    %vm2819 = vmor %vm2817, %vm2818
    %v2820 = vsel %vm2819, %v2812, %v2816
    %v2821 = vand.u32 2147483647, %v2811
    %vm2822 = vcmp.eq.f32.partialorder %v2821, 8.507059e+37
    %v2823 = vand.u32 %v2811, 2147483648
    %v2824 = vor.u32 1.1754944e-38, %v2823
    %v2825 = vsel %vm2822, %v2824, %v2820
    %v2826 = vmul.f32 1.0, %v2825
    %v2827 = vtanh.pop %v2787
    %v2828 = vxor.u32 %v2788, 2147483648
    %v2829 = vmul.f32 %v2828, 1.442695
    %v2830 = vpow.pop %v2829
    %v2831 = vadd.f32 %v2830, 1.0
    %v2832 = vrcp.pop %v2831
    %v2833 = vmul.f32 %v2831, %v2832
    %v2834 = vsub.f32 1.0, %v2833
    %v2835 = vmul.f32 %v2832, %v2834
    %v2836 = vadd.f32 %v2832, %v2835
    %vm2837 = vweird.f32 %v2831
    %vm2838 = vweird.f32 %v2832
    %vm2839 = vmor %vm2837, %vm2838
    %v2840 = vsel %vm2839, %v2832, %v2836
    %v2841 = vand.u32 2147483647, %v2831
    %vm2842 = vcmp.eq.f32.partialorder %v2841, 8.507059e+37
    %v2843 = vand.u32 %v2831, 2147483648
    %v2844 = vor.u32 1.1754944e-38, %v2843
    %v2845 = vsel %vm2842, %v2844, %v2840
    %v2846 = vmul.f32 1.0, %v2845
    %v2847 = vmul.f32 %v2826, %v2556
    %v2848 = vmul.f32 %v2807, %v2827
    %v2849 = vadd.f32 %v2847, %v2848
    %v2850 = vtanh.pop %v2849
    %v2851 = vmul.f32 %v2846, %v2850
    %v2852 = vpack.c.bf16 %v2851, %v2851
    %v2853 = vpack.c.bf16 %v2727, %v2727
    %2854 = vmatpush.bf16.msra.mxu0 %v703
    %2855 = vmatpush.bf16.msra.mxu0 %v699
    %2856 = vmatpush.bf16.msra.mxu0 %v695
    %2857 = vmatpush.bf16.msra.mxu0 %v691
    %2858 = vmatpush.bf16.msra.mxu0 %v687
    %2859 = vmatpush.bf16.msra.mxu0 %v683
    %2860 = vmatpush.bf16.msra.mxu0 %v679
    %2861 = vmatpush.bf16.msra.mxu0 %v675
    %2862 = vmatmul.bf16.gmra.mxu0 %v2852
    %v2863 = vpop.f32.mrf.mxu0
    %v2864 = vadd.f32 %v185, %v2863
    %v2865 = vpop.f32.mrf.mxu0
    %2866 = vdwg.mxu0
    %2867 = vmatpush.bf16.msra.mxu0 %v735
    %2868 = vmatpush.bf16.msra.mxu0 %v731
    %2869 = vmatpush.bf16.msra.mxu0 %v727
    %2870 = vmatpush.bf16.msra.mxu0 %v723
    %2871 = vmatpush.bf16.msra.mxu0 %v719
    %2872 = vmatpush.bf16.msra.mxu0 %v715
    %2873 = vmatpush.bf16.msra.mxu0 %v711
    %2874 = vmatpush.bf16.msra.mxu0 %v707
    %2875 = vmatmul.bf16.gmra.mxu0 %v2853
    %v2876 = vpop.f32.mrf.mxu0
    %v2877 = vadd.f32 %v2864, %v2876
    %v2878 = vpop.f32.mrf.mxu0
    %2879 = vdwg.mxu0
    %2880 = vmatpush.bf16.msra.mxu0 %v704
    %2881 = vmatpush.bf16.msra.mxu0 %v700
    %2882 = vmatpush.bf16.msra.mxu0 %v696
    %2883 = vmatpush.bf16.msra.mxu0 %v692
    %2884 = vmatpush.bf16.msra.mxu0 %v688
    %2885 = vmatpush.bf16.msra.mxu0 %v684
    %2886 = vmatpush.bf16.msra.mxu0 %v680
    %2887 = vmatpush.bf16.msra.mxu0 %v676
    %2888 = vmatmul.bf16.gmra.mxu0 %v2852
    %v2889 = vpop.f32.mrf.mxu0
    %v2890 = vadd.f32 %v186, %v2889
    %v2891 = vpop.f32.mrf.mxu0
    %2892 = vdwg.mxu0
    %2893 = vmatpush.bf16.msra.mxu0 %v736
    %2894 = vmatpush.bf16.msra.mxu0 %v732
    %2895 = vmatpush.bf16.msra.mxu0 %v728
    %2896 = vmatpush.bf16.msra.mxu0 %v724
    %2897 = vmatpush.bf16.msra.mxu0 %v720
    %2898 = vmatpush.bf16.msra.mxu0 %v716
    %2899 = vmatpush.bf16.msra.mxu0 %v712
    %2900 = vmatpush.bf16.msra.mxu0 %v708
    %2901 = vmatmul.bf16.gmra.mxu0 %v2853
    %v2902 = vpop.f32.mrf.mxu0
    %v2903 = vadd.f32 %v2890, %v2902
    %v2904 = vpop.f32.mrf.mxu0
    %2905 = vdwg.mxu0
    %2906 = vmatpush.bf16.msra.mxu0 %v705
    %2907 = vmatpush.bf16.msra.mxu0 %v701
    %2908 = vmatpush.bf16.msra.mxu0 %v697
    %2909 = vmatpush.bf16.msra.mxu0 %v693
    %2910 = vmatpush.bf16.msra.mxu0 %v689
    %2911 = vmatpush.bf16.msra.mxu0 %v685
    %2912 = vmatpush.bf16.msra.mxu0 %v681
    %2913 = vmatpush.bf16.msra.mxu0 %v677
    %2914 = vmatmul.bf16.gmra.mxu0 %v2852
    %v2915 = vpop.f32.mrf.mxu0
    %v2916 = vadd.f32 %v187, %v2915
    %v2917 = vpop.f32.mrf.mxu0
    %2918 = vdwg.mxu0
    %2919 = vmatpush.bf16.msra.mxu0 %v737
    %2920 = vmatpush.bf16.msra.mxu0 %v733
    %2921 = vmatpush.bf16.msra.mxu0 %v729
    %2922 = vmatpush.bf16.msra.mxu0 %v725
    %2923 = vmatpush.bf16.msra.mxu0 %v721
    %2924 = vmatpush.bf16.msra.mxu0 %v717
    %2925 = vmatpush.bf16.msra.mxu0 %v713
    %2926 = vmatpush.bf16.msra.mxu0 %v709
    %2927 = vmatmul.bf16.gmra.mxu0 %v2853
    %v2928 = vpop.f32.mrf.mxu0
    %v2929 = vadd.f32 %v2916, %v2928
    %v2930 = vpop.f32.mrf.mxu0
    %2931 = vdwg.mxu0
    %2932 = vmatpush.bf16.msra.mxu0 %v706
    %2933 = vmatpush.bf16.msra.mxu0 %v702
    %2934 = vmatpush.bf16.msra.mxu0 %v698
    %2935 = vmatpush.bf16.msra.mxu0 %v694
    %2936 = vmatpush.bf16.msra.mxu0 %v690
    %2937 = vmatpush.bf16.msra.mxu0 %v686
    %2938 = vmatpush.bf16.msra.mxu0 %v682
    %2939 = vmatpush.bf16.msra.mxu0 %v678
    %2940 = vmatmul.bf16.gmra.mxu0 %v2852
    %v2941 = vpop.f32.mrf.mxu0
    %v2942 = vadd.f32 %v188, %v2941
    %v2943 = vpop.f32.mrf.mxu0
    %2944 = vdwg.mxu0
    %2945 = vmatpush.bf16.msra.mxu0 %v738
    %2946 = vmatpush.bf16.msra.mxu0 %v734
    %2947 = vmatpush.bf16.msra.mxu0 %v730
    %2948 = vmatpush.bf16.msra.mxu0 %v726
    %2949 = vmatpush.bf16.msra.mxu0 %v722
    %2950 = vmatpush.bf16.msra.mxu0 %v718
    %2951 = vmatpush.bf16.msra.mxu0 %v714
    %2952 = vmatpush.bf16.msra.mxu0 %v710
    %2953 = vmatmul.bf16.gmra.mxu0 %v2853
    %v2954 = vpop.f32.mrf.mxu0
    %v2955 = vadd.f32 %v2942, %v2954
    %v2956 = vpop.f32.mrf.mxu0
    %2957 = vdwg.mxu0
    %v2958 = vxor.u32 %v2877, 2147483648
    %v2959 = vmul.f32 %v2958, 1.442695
    %v2960 = vpow.pop %v2959
    %v2961 = vadd.f32 %v2960, 1.0
    %v2962 = vrcp.pop %v2961
    %v2963 = vmul.f32 %v2961, %v2962
    %v2964 = vsub.f32 1.0, %v2963
    %v2965 = vmul.f32 %v2962, %v2964
    %v2966 = vadd.f32 %v2962, %v2965
    %vm2967 = vweird.f32 %v2961
    %vm2968 = vweird.f32 %v2962
    %vm2969 = vmor %vm2967, %vm2968
    %v2970 = vsel %vm2969, %v2962, %v2966
    %v2971 = vand.u32 2147483647, %v2961
    %vm2972 = vcmp.eq.f32.partialorder %v2971, 8.507059e+37
    %v2973 = vand.u32 %v2961, 2147483648
    %v2974 = vor.u32 1.1754944e-38, %v2973
    %v2975 = vsel %vm2972, %v2974, %v2970
    %v2976 = vmul.f32 1.0, %v2975
    %v2977 = vxor.u32 %v2903, 2147483648
    %v2978 = vmul.f32 %v2977, 1.442695
    %v2979 = vpow.pop %v2978
    %v2980 = vadd.f32 %v2979, 1.0
    %v2981 = vrcp.pop %v2980
    %v2982 = vmul.f32 %v2980, %v2981
    %v2983 = vsub.f32 1.0, %v2982
    %v2984 = vmul.f32 %v2981, %v2983
    %v2985 = vadd.f32 %v2981, %v2984
    %vm2986 = vweird.f32 %v2980
    %vm2987 = vweird.f32 %v2981
    %vm2988 = vmor %vm2986, %vm2987
    %v2989 = vsel %vm2988, %v2981, %v2985
    %v2990 = vand.u32 2147483647, %v2980
    %vm2991 = vcmp.eq.f32.partialorder %v2990, 8.507059e+37
    %v2992 = vand.u32 %v2980, 2147483648
    %v2993 = vor.u32 1.1754944e-38, %v2992
    %v2994 = vsel %vm2991, %v2993, %v2989
    %v2995 = vmul.f32 1.0, %v2994
    %v2996 = vtanh.pop %v2929
    %v2997 = vxor.u32 %v2955, 2147483648
    %v2998 = vmul.f32 %v2997, 1.442695
    %v2999 = vpow.pop %v2998
    %v3000 = vadd.f32 %v2999, 1.0
    %v3001 = vrcp.pop %v3000
    %v3002 = vmul.f32 %v3000, %v3001
    %v3003 = vsub.f32 1.0, %v3002
    %v3004 = vmul.f32 %v3001, %v3003
    %v3005 = vadd.f32 %v3001, %v3004
    %vm3006 = vweird.f32 %v3000
    %vm3007 = vweird.f32 %v3001
    %vm3008 = vmor %vm3006, %vm3007
    %v3009 = vsel %vm3008, %v3001, %v3005
    %v3010 = vand.u32 2147483647, %v3000
    %vm3011 = vcmp.eq.f32.partialorder %v3010, 8.507059e+37
    %v3012 = vand.u32 %v3000, 2147483648
    %v3013 = vor.u32 1.1754944e-38, %v3012
    %v3014 = vsel %vm3011, %v3013, %v3009
    %v3015 = vmul.f32 1.0, %v3014
    %v3016 = vmul.f32 %v2995, %v2725
    %v3017 = vmul.f32 %v2976, %v2996
    %v3018 = vadd.f32 %v3016, %v3017
    %v3019 = vtanh.pop %v3018
    %v3020 = vmul.f32 %v3015, %v3019
    %3021 = vst [vmem:[#allocation2] sm:$0xff] %v2851
    %3022 = vst [vmem:[#allocation3] sm:$0xff] %v2849
    %3023 = vst [vmem:[#allocation4] sm:$0xff] %v3020
    %3024 = vst [vmem:[#allocation5] sm:$0xff] %v3018
    %3025 = vst [vmem:[#allocation14] sm:$0xff] %v3020
    // Predicated region
    $region38: #{tpu_custom_call.1} parent=1 // pred_check
      _
    $region39: #{tpu_custom_call.1} parent=1 // pred_check_branch
      %3027 = sbr.rel (0) target = $region41
    $region40: #{tpu_custom_call.1} parent=1 // pred_region
      %3029 = vsyncadd [#allocation8], 0
      %s3031 = sshll.u32 [#allocation14], 4
      %s3032 = int_to_ptr.vmem [resolvable:$true] %s3031
      %s3033 = sshll.u32 %s4, 4
      %s3034 = int_to_ptr.hbm [resolvable:$true] %s3033
      %3036 = dma.vmem_to_hbm [thread:$0]  %s3032, 128, %s3034, [#allocation8]
    $region41: #{tpu_custom_call.1} parent=1 // pred_fallthru
      _
    // Predicated region
    $region42: #{tpu_custom_call.1} parent=1 // pred_check
      _
    $region43: #{tpu_custom_call.1} parent=1 // pred_check_branch
      %3038 = sbr.rel (0) target = $region45
    $region44: #{tpu_custom_call.1} parent=1 // pred_region
      %3040 = dma.done [#allocation8], 128
    $region45: #{tpu_custom_call.1} parent=1 // pred_fallthru
      _
    %3041 = vsyncpa [#allocation7], 1
    %3042 = vsyncpa [#allocation10], 1
    %3043 = vsyncpa [#allocation13], 1
    %3044 = vsyncpa [#allocation8], 1

</llo_original>
